<compile_context>
chip_gen: v5e
topology: v5e:2x2
jax: 0.10.0
libtpu: 0.0.40
codegen_flags: <defaults>
</compile_context>

<pallas_src>
import functools

import jax
import jax.numpy as jnp
from jax.experimental import pallas as pl
from jax.experimental.pallas import tpu as pltpu

# Logical sizes (PyTorch module) and 128-aligned padded sizes used on-chip.
D_IN, H, C = 784, 800, 10
H_P, C_P = 896, 128          # 896 = 7 * 128
NEG_BIG = -1e30              # bias for padded logit lanes -> exp() underflows to 0


def _round_up(x, m):
    return (x + m - 1) // m * m


def _mlp_kernel(x_ref, w1_ref, b1_ref, w2_ref, b2_ref, w3_ref, b3_ref, out_ref):
    """784->896->896->128 padded MLP + log_softmax on one batch tile.

    Matmuls run on the MXU (bf16 operands, f32 accumulation); bias/ReLU on the
    VPU; max/sum reductions on the XLU and exp/log on the EUP, so the softmax
    epilogue rides in otherwise-idle VLIW slots.
    """
    x = x_ref[...]  # (tm, 784) bf16

    h1 = jnp.dot(x, w1_ref[...], preferred_element_type=jnp.float32) + b1_ref[...]
    h1 = jnp.maximum(h1, 0.0).astype(jnp.bfloat16)

    h2 = jnp.dot(h1, w2_ref[...], preferred_element_type=jnp.float32) + b2_ref[...]
    h2 = jnp.maximum(h2, 0.0).astype(jnp.bfloat16)

    logits = jnp.dot(h2, w3_ref[...], preferred_element_type=jnp.float32) + b3_ref[...]

    # log_softmax over 128 lanes; padded lanes sit at ~-1e30 so they contribute
    # exactly 0 to the sum and never win the max (no extra select needed).
    m = jnp.max(logits, axis=-1, keepdims=True)
    shifted = logits - m
    lse = jnp.log(jnp.sum(jnp.exp(shifted), axis=-1, keepdims=True))
    out_ref[...] = (shifted - lse).astype(out_ref.dtype)


def prepare_params(w1, b1, w2, b2, w3, b3):
    """One-time weight padding + bf16 casting (hoisted out of mlp_forward).

    Call once after init / checkpoint load; pass the result to mlp_forward on
    every step so the forward path only launches the Pallas kernel (plus a
    cheap batch pad when B isn't a tile multiple).
    """
    w1p = jnp.zeros((D_IN, H_P), jnp.bfloat16).at[:, :H].set(w1.astype(jnp.bfloat16))
    w2p = jnp.zeros((H_P, H_P), jnp.bfloat16).at[:H, :H].set(w2.astype(jnp.bfloat16))
    w3p = jnp.zeros((H_P, C_P), jnp.bfloat16).at[:H, :C].set(w3.astype(jnp.bfloat16))
    b1p = jnp.zeros((1, H_P), jnp.float32).at[0, :H].set(b1.astype(jnp.float32))
    b2p = jnp.zeros((1, H_P), jnp.float32).at[0, :H].set(b2.astype(jnp.float32))
    # Padded logit lanes get a huge negative bias so log_softmax over 128 lanes
    # is identical (for the real 10 classes) to log_softmax over 10. Safe only
    # because accumulation, bias and output stay in f32.
    b3p = jnp.full((1, C_P), NEG_BIG, jnp.float32).at[0, :C].set(b3.astype(jnp.float32))
    return (w1p, b1p, w2p, b2p, w3p, b3p)


@functools.partial(jax.jit, static_argnames=("tm",))
def mlp_forward(x, w1p, b1p, w2p, b2p, w3p, b3p, *, tm=1024):
    """x: (B, 1, 28, 28) or (B, 784). Weights: output of prepare_params().

    Returns (B, 10) f32 log-probabilities. Accuracy note: matmul operands are
    bf16 (f32 accumulation), so results match the f32 PyTorch reference to
    ~1e-2 rather than ~1e-4.
    """
    xf = x.reshape(-1, D_IN).astype(jnp.bfloat16)
    B = xf.shape[0]

    # Effective batch tile: at most `tm`, a multiple of 8; for B > 8, cap it so
    # the grid has >= 2 steps (the "parallel" axis can then shard across both
    # v7x TensorCores; no effect on single-TC v5e/v6e).
    tm_eff = min(tm, _round_up(B, 8))
    if B > 8:
        tm_eff = min(tm_eff, _round_up((B + 1) // 2, 8))
    Bp = _round_up(B, tm_eff)
    if Bp > B:
        xf = jnp.pad(xf, ((0, Bp - B), (0, 0)))  # zero rows; sliced off below

    # Weights/biases never change across grid steps -> single-buffer them.
    resident = pl.Buffered(1)

    grid = (Bp // tm_eff,)
    out = pl.pallas_call(
        _mlp_kernel,
        out_shape=jax.ShapeDtypeStruct((Bp, C_P), jnp.float32),
        grid_spec=pltpu.PrefetchScalarGridSpec(
            num_scalar_prefetch=0,
            grid=grid,
            in_specs=[
                # activations: tiled along batch; full 784 feature dim (legal:
                # block last dim == array last dim), Mosaic handles ragged K.
                pl.BlockSpec((tm_eff, D_IN), lambda i: (i, 0)),
                # resident weights / biases (constant index_map, 1 buffer)
                pl.BlockSpec((D_IN, H_P), lambda i: (0, 0), pipeline_mode=resident),
                pl.BlockSpec((1, H_P), lambda i: (0, 0), pipeline_mode=resident),
                pl.BlockSpec((H_P, H_P), lambda i: (0, 0), pipeline_mode=resident),
                pl.BlockSpec((1, H_P), lambda i: (0, 0), pipeline_mode=resident),
                pl.BlockSpec((H_P, C_P), lambda i: (0, 0), pipeline_mode=resident),
                pl.BlockSpec((1, C_P), lambda i: (0, 0), pipeline_mode=resident),
            ],
            out_specs=pl.BlockSpec((tm_eff, C_P), lambda i: (i, 0)),
        ),
        compiler_params=pltpu.CompilerParams(
            dimension_semantics=("parallel",),   # megacore sharding on v7x
            vmem_limit_bytes=48 * 1024 * 1024,   # <= 64 MiB/TC (v7x-safe)
        ),
    )(xf, w1p, b1p, w2p, b2p, w3p, b3p)

    return out[:B, :C]


def init_params(key):
    """Deterministic init mimicking torch.nn.Linear (U[-1/sqrt(fan_in), +])."""
    ks = jax.random.split(key, 6)

    def linear(kw, kb, fan_in, fan_out):
        bound = 1.0 / jnp.sqrt(jnp.float32(fan_in))
        # stored as (in, out): transpose of torch's (out, in)
        w = jax.random.uniform(kw, (fan_in, fan_out), jnp.float32, -bound, bound)
        b = jax.random.uniform(kb, (fan_out,), jnp.float32, -bound, bound)
        return w, b

    w1, b1 = linear(ks[0], ks[1], D_IN, H)
    w2, b2 = linear(ks[2], ks[3], H, H)
    w3, b3 = linear(ks[4], ks[5], H, C)
    return w1, b1, w2, b2, w3, b3


def reference_forward(x, w1, b1, w2, b2, w3, b3):
    """Pure-JAX f32 reference for correctness checking."""
    xf = x.reshape(-1, D_IN).astype(jnp.float32)
    h1 = jnp.maximum(xf @ w1 + b1, 0.0)
    h2 = jnp.maximum(h1 @ w2 + b2, 0.0)
    logits = h2 @ w3 + b3
    return jax.nn.log_softmax(logits, axis=1)


if __name__ == "__main__":
    key = jax.random.PRNGKey(0)
    k_params, k_x, k_x2 = jax.random.split(key, 3)

    raw_params = init_params(k_params)
    padded_params = prepare_params(*raw_params)   # one-time padding/cast

    # Small MNIST-shaped batch: (B=8, C=1, H=28, W=28), NCHW as in PyTorch.
    x = jax.random.normal(k_x, (8, 1, 28, 28), jnp.float32)
    out = jax.block_until_ready(mlp_forward(x, *padded_params))
    ref = reference_forward(x, *raw_params)
    assert out.shape == (8, 10)
    assert jnp.allclose(out, ref, atol=5e-2, rtol=0.0), "mismatch vs reference"

    # Exercise batch padding + a multi-step grid (B not a multiple of the tile,
    # and B > 8 so the >=2-step / 2-TensorCore path is taken).
    x2 = jax.random.normal(k_x2, (12, 1, 28, 28), jnp.float32)
    out2 = jax.block_until_ready(mlp_forward(x2, *padded_params, tm=8))
    ref2 = reference_forward(x2, *raw_params)
    assert out2.shape == (12, 10)
    assert jnp.allclose(out2, ref2, atol=5e-2, rtol=0.0), "mismatch vs reference (padded batch)"

    print("KERNEL_OK")
</pallas_src>

<mosaic_0001>
module attributes {stable_mosaic.version = 11 : i64} {
  func.func @_mlp_kernel(%arg0: i32, %arg1: memref<8x784xbf16, #tpu.memory_space<vmem>>, %arg2: memref<784x896xbf16, #tpu.memory_space<vmem>>, %arg3: memref<1x896xf32, #tpu.memory_space<vmem>>, %arg4: memref<896x896xbf16, #tpu.memory_space<vmem>>, %arg5: memref<1x896xf32, #tpu.memory_space<vmem>>, %arg6: memref<896x128xbf16, #tpu.memory_space<vmem>>, %arg7: memref<1x128xf32, #tpu.memory_space<vmem>>, %arg8: memref<8x128xf32, #tpu.memory_space<vmem>>) attributes {dimension_semantics = [#tpu.dimension_semantics<parallel>], iteration_bounds = array<i64: 1>, scalar_prefetch = 0 : i64, scratch_operands = 0 : i64, tpu.core_type = #tpu.core_type<tc>, window_params = [{transform_indices = @transform_0, window_bounds = array<i64: 8, 784>}, {pipeline_mode = #tpu.pipeline_mode<synchronous>, transform_indices = @transform_1, window_bounds = array<i64: 784, 896>}, {pipeline_mode = #tpu.pipeline_mode<synchronous>, transform_indices = @transform_2, window_bounds = array<i64: 1, 896>}, {pipeline_mode = #tpu.pipeline_mode<synchronous>, transform_indices = @transform_3, window_bounds = array<i64: 896, 896>}, {pipeline_mode = #tpu.pipeline_mode<synchronous>, transform_indices = @transform_4, window_bounds = array<i64: 1, 896>}, {pipeline_mode = #tpu.pipeline_mode<synchronous>, transform_indices = @transform_5, window_bounds = array<i64: 896, 128>}, {pipeline_mode = #tpu.pipeline_mode<synchronous>, transform_indices = @transform_6, window_bounds = array<i64: 1, 128>}, {transform_indices = @transform_7, window_bounds = array<i64: 8, 128>}]} {
    %c0 = arith.constant 0 : index
    %c0_0 = arith.constant 0 : index
    %0 = vector.load %arg1[%c0, %c0_0] : memref<8x784xbf16, #tpu.memory_space<vmem>>, vector<8x784xbf16>
    %c0_1 = arith.constant 0 : index
    %c0_2 = arith.constant 0 : index
    %1 = vector.load %arg2[%c0_1, %c0_2] : memref<784x896xbf16, #tpu.memory_space<vmem>>, vector<784x896xbf16>
    %cst = arith.constant dense<0.000000e+00> : vector<8x896xf32>
    %2 = tpu.matmul %0, %1, %cst {dimension_numbers = #tpu.dot_dimension_numbers<[1], [0], [0], [1], [0, 0, 1, 1], [], []>} : vector<8x784xbf16>, vector<784x896xbf16>, vector<8x896xf32> -> vector<8x896xf32>
    %c0_3 = arith.constant 0 : index
    %c0_4 = arith.constant 0 : index
    %3 = vector.load %arg3[%c0_3, %c0_4] : memref<1x896xf32, #tpu.memory_space<vmem>>, vector<1x896xf32>
    %4 = vector.broadcast %3 : vector<1x896xf32> to vector<8x896xf32>
    %5 = arith.addf %2, %4 : vector<8x896xf32>
    %cst_5 = arith.constant 0.000000e+00 : f32
    %6 = vector.broadcast %cst_5 : f32 to vector<8x896xf32>
    %7 = arith.maximumf %5, %6 : vector<8x896xf32>
    %8 = arith.truncf %7 : vector<8x896xf32> to vector<8x896xbf16>
    %c0_6 = arith.constant 0 : index
    %c0_7 = arith.constant 0 : index
    %9 = vector.load %arg4[%c0_6, %c0_7] : memref<896x896xbf16, #tpu.memory_space<vmem>>, vector<896x896xbf16>
    %cst_8 = arith.constant dense<0.000000e+00> : vector<8x896xf32>
    %10 = tpu.matmul %8, %9, %cst_8 {dimension_numbers = #tpu.dot_dimension_numbers<[1], [0], [0], [1], [0, 0, 1, 1], [], []>} : vector<8x896xbf16>, vector<896x896xbf16>, vector<8x896xf32> -> vector<8x896xf32>
    %c0_9 = arith.constant 0 : index
    %c0_10 = arith.constant 0 : index
    %11 = vector.load %arg5[%c0_9, %c0_10] : memref<1x896xf32, #tpu.memory_space<vmem>>, vector<1x896xf32>
    %12 = vector.broadcast %11 : vector<1x896xf32> to vector<8x896xf32>
    %13 = arith.addf %10, %12 : vector<8x896xf32>
    %cst_11 = arith.constant 0.000000e+00 : f32
    %14 = vector.broadcast %cst_11 : f32 to vector<8x896xf32>
    %15 = arith.maximumf %13, %14 : vector<8x896xf32>
    %16 = arith.truncf %15 : vector<8x896xf32> to vector<8x896xbf16>
    %c0_12 = arith.constant 0 : index
    %c0_13 = arith.constant 0 : index
    %17 = vector.load %arg6[%c0_12, %c0_13] : memref<896x128xbf16, #tpu.memory_space<vmem>>, vector<896x128xbf16>
    %cst_14 = arith.constant dense<0.000000e+00> : vector<8x128xf32>
    %18 = tpu.matmul %16, %17, %cst_14 {dimension_numbers = #tpu.dot_dimension_numbers<[1], [0], [0], [1], [0, 0, 1, 1], [], []>} : vector<8x896xbf16>, vector<896x128xbf16>, vector<8x128xf32> -> vector<8x128xf32>
    %c0_15 = arith.constant 0 : index
    %c0_16 = arith.constant 0 : index
    %19 = vector.load %arg7[%c0_15, %c0_16] : memref<1x128xf32, #tpu.memory_space<vmem>>, vector<1x128xf32>
    %20 = vector.broadcast %19 : vector<1x128xf32> to vector<8x128xf32>
    %21 = arith.addf %18, %20 : vector<8x128xf32>
    %cst_17 = arith.constant dense<0xFF800000> : vector<8xf32>
    %22 = vector.multi_reduction <maximumf>, %21, %cst_17 [1] : vector<8x128xf32> to vector<8xf32>
    %23 = vector.shape_cast %22 : vector<8xf32> to vector<8x1xf32>
    %24 = vector.broadcast %23 : vector<8x1xf32> to vector<8x128xf32>
    %25 = arith.subf %21, %24 : vector<8x128xf32>
    %26 = math.exp %25 : vector<8x128xf32>
    %cst_18 = arith.constant dense<0.000000e+00> : vector<8xf32>
    %27 = vector.multi_reduction <add>, %26, %cst_18 [1] : vector<8x128xf32> to vector<8xf32>
    %28 = vector.shape_cast %27 : vector<8xf32> to vector<8x1xf32>
    %29 = math.log %28 : vector<8x1xf32>
    %30 = vector.broadcast %29 : vector<8x1xf32> to vector<8x128xf32>
    %31 = arith.subf %25, %30 : vector<8x128xf32>
    %c0_19 = arith.constant 0 : index
    %c0_20 = arith.constant 0 : index
    %32 = vector.load %arg8[%c0_19, %c0_20] : memref<8x128xf32, #tpu.memory_space<vmem>>, vector<8x128xf32>
    tpu.vector_store %arg8[%c0_19, %c0_20], %31 {strides = array<i32>} : memref<8x128xf32, #tpu.memory_space<vmem>>, vector<8x128xf32>,
    return
  }
  func.func @transform_0(%arg0: i32) -> (i32, i32) {
    %c0_i32 = arith.constant 0 : i32
    %c0_i32_0 = arith.constant 0 : i32
    return %arg0, %c0_i32 : i32, i32
  }
  func.func @transform_1(%arg0: i32) -> (i32, i32) {
    %c0_i32 = arith.constant 0 : i32
    %c0_i32_0 = arith.constant 0 : i32
    %c0_i32_1 = arith.constant 0 : i32
    return %c0_i32, %c0_i32_0 : i32, i32
  }
  func.func @transform_2(%arg0: i32) -> (i32, i32) {
    %c0_i32 = arith.constant 0 : i32
    %c0_i32_0 = arith.constant 0 : i32
    %c0_i32_1 = arith.constant 0 : i32
    return %c0_i32, %c0_i32_0 : i32, i32
  }
  func.func @transform_3(%arg0: i32) -> (i32, i32) {
    %c0_i32 = arith.constant 0 : i32
    %c0_i32_0 = arith.constant 0 : i32
    %c0_i32_1 = arith.constant 0 : i32
    return %c0_i32, %c0_i32_0 : i32, i32
  }
  func.func @transform_4(%arg0: i32) -> (i32, i32) {
    %c0_i32 = arith.constant 0 : i32
    %c0_i32_0 = arith.constant 0 : i32
    %c0_i32_1 = arith.constant 0 : i32
    return %c0_i32, %c0_i32_0 : i32, i32
  }
  func.func @transform_5(%arg0: i32) -> (i32, i32) {
    %c0_i32 = arith.constant 0 : i32
    %c0_i32_0 = arith.constant 0 : i32
    %c0_i32_1 = arith.constant 0 : i32
    return %c0_i32, %c0_i32_0 : i32, i32
  }
  func.func @transform_6(%arg0: i32) -> (i32, i32) {
    %c0_i32 = arith.constant 0 : i32
    %c0_i32_0 = arith.constant 0 : i32
    %c0_i32_1 = arith.constant 0 : i32
    return %c0_i32, %c0_i32_0 : i32, i32
  }
  func.func @transform_7(%arg0: i32) -> (i32, i32) {
    %c0_i32 = arith.constant 0 : i32
    %c0_i32_0 = arith.constant 0 : i32
    return %arg0, %c0_i32 : i32, i32
  }
}

</mosaic_0001>

<llo_original>
// kernel: mlp_forward.1
$region0: #{mlp_forward.1}
  #allocation0 [shape = 'u32[]', space=smem, size = 0x4, offset = 0x4, fixed_abs, tag = 'smem constant byte address 0x4 - core index']
  #allocation1 [shape = 'u32[72,128]{1,0:T(1,128)}', space=vmem, size = 0x9000, scoped, tag = 'internal scratch']
  %s0 = inlined_call_operand.vmem [shape: bf16[8,784], index: 0, kind: input, shape index: {}]
  %s1 = inlined_call_operand.hbm [shape: bf16[784,896], index: 1, kind: input, shape index: {}]
  %s2 = inlined_call_operand.hbm [shape: f32[1,896], index: 2, kind: input, shape index: {}]
  %s3 = inlined_call_operand.hbm [shape: bf16[896,896], index: 3, kind: input, shape index: {}]
  %s4 = inlined_call_operand.hbm [shape: f32[1,896], index: 4, kind: input, shape index: {}]
  %s5 = inlined_call_operand.hbm [shape: bf16[896,128], index: 5, kind: input, shape index: {}]
  %s6 = inlined_call_operand.hbm [shape: f32[1,128], index: 6, kind: input, shape index: {}]
  %s7 = inlined_call_operand.hbm [shape: f32[8,128], index: 7, kind: output, shape index: {}]
  %s8 = sld [smem:[#allocation0]]
  $region62: #{mlp_forward.1} parent=0
    _
  %s10 = ssub.s32 1, %s8
  %s11 = scalar_select 0, %s10, %s8
  $region1: #{mlp_forward.1} parent=0
    #allocation2 [shape = 'u8[1404928]{0}', space=vmem, size = 0x157000, scoped, tag = 'input window, operand 1, single buffered']
    #allocation3 [shape = 's32[1]{0}', space=sflag, size = 0x4, scoped, tag = 'scoped memory for mlp_forward.1']
    #allocation4 [shape = 's32[1]{0}', space=sflag, size = 0x4, scoped, tag = 'scoped memory for mlp_forward.1']
    #allocation5 [shape = 'u8[3584]{0}', space=vmem, size = 0x1000, scoped, tag = 'input window, operand 2, single buffered']
    #allocation6 [shape = 's32[1]{0}', space=sflag, size = 0x4, scoped, tag = 'scoped memory for mlp_forward.1']
    #allocation7 [shape = 'u8[1605632]{0}', space=vmem, size = 0x188000, scoped, tag = 'input window, operand 3, single buffered']
    #allocation8 [shape = 'u8[3584]{0}', space=vmem, size = 0x1000, scoped, tag = 'input window, operand 4, single buffered']
    #allocation9 [shape = 's32[1]{0}', space=sflag, size = 0x4, scoped, tag = 'scoped memory for mlp_forward.1']
    #allocation10 [shape = 'u8[229376]{0}', space=vmem, size = 0x38000, scoped, tag = 'input window, operand 5, single buffered']
    #allocation11 [shape = 'u8[512]{0}', space=vmem, size = 0x400, scoped, tag = 'input window, operand 6, single buffered']
    #allocation12 [shape = 's32[1]{0}', space=sflag, size = 0x4, scoped, tag = 'scoped memory for mlp_forward.1']
    #allocation13 [shape = 'u8[4096]{0}', space=vmem, size = 0x1000, scoped, tag = 'output window, operand 0, single buffered']
    %12 = vsyncpa [#allocation3], 0
    %13 = vsyncpa [#allocation6], 0
    %14 = vsyncpa [#allocation9], 0
    %15 = vsyncpa [#allocation12], 0
    %16 = vsyncpa [#allocation4], 0
    // Predicated region
    $region2: #{mlp_forward.1} parent=1 // pred_check
      _
    $region3: #{mlp_forward.1} parent=1 // pred_check_branch
      %18 = sbr.rel (0) target = $region5
    $region4: #{mlp_forward.1} parent=1 // pred_region
      _
    $region5: #{mlp_forward.1} parent=1 // pred_fallthru
      _
    // Predicated region
    $region6: #{mlp_forward.1} parent=1 // pred_check
      _
    $region7: #{mlp_forward.1} parent=1 // pred_check_branch
      %20 = sbr.rel (0) target = $region9
    $region8: #{mlp_forward.1} parent=1 // pred_region
      %22 = vsyncadd [#allocation3], 0
      %s23 = sshll.u32 %s1, 4
      %s24 = int_to_ptr.hbm [resolvable:$true] %s23
      %s25 = sshll.u32 [#allocation2], 4
      %s26 = int_to_ptr.vmem [resolvable:$true] %s25
      %31 = dma.hbm_to_vmem [thread:$0]  %s24, 43904, %s26, [#allocation3], 448, 448, 28
    $region9: #{mlp_forward.1} parent=1 // pred_fallthru
      _
    // Predicated region
    $region10: #{mlp_forward.1} parent=1 // pred_check
      _
    $region11: #{mlp_forward.1} parent=1 // pred_check_branch
      %33 = sbr.rel (0) target = $region13
    $region12: #{mlp_forward.1} parent=1 // pred_region
      %35 = vsyncadd [#allocation6], 0
      %s37 = sshll.u32 %s2, 4
      %s38 = int_to_ptr.hbm [resolvable:$true] %s37
      %s39 = sshll.u32 [#allocation5], 4
      %s40 = int_to_ptr.vmem [resolvable:$true] %s39
      %42 = dma.hbm_to_vmem [thread:$0]  %s38, 112, %s40, [#allocation6]
    $region13: #{mlp_forward.1} parent=1 // pred_fallthru
      _
    // Predicated region
    $region14: #{mlp_forward.1} parent=1 // pred_check
      _
    $region15: #{mlp_forward.1} parent=1 // pred_check_branch
      %44 = sbr.rel (0) target = $region17
    $region16: #{mlp_forward.1} parent=1 // pred_region
      %46 = vsyncadd [#allocation6], 0
      %s47 = sshll.u32 %s3, 4
      %s48 = int_to_ptr.hbm [resolvable:$true] %s47
      %s49 = sshll.u32 [#allocation7], 4
      %s50 = int_to_ptr.vmem [resolvable:$true] %s49
      %55 = dma.hbm_to_vmem [thread:$0]  %s48, 50176, %s50, [#allocation6], 448, 448, 28
    $region17: #{mlp_forward.1} parent=1 // pred_fallthru
      _
    // Predicated region
    $region18: #{mlp_forward.1} parent=1 // pred_check
      _
    $region19: #{mlp_forward.1} parent=1 // pred_check_branch
      %57 = sbr.rel (0) target = $region21
    $region20: #{mlp_forward.1} parent=1 // pred_region
      %59 = vsyncadd [#allocation9], 0
      %s61 = sshll.u32 %s4, 4
      %s62 = int_to_ptr.hbm [resolvable:$true] %s61
      %s63 = sshll.u32 [#allocation8], 4
      %s64 = int_to_ptr.vmem [resolvable:$true] %s63
      %66 = dma.hbm_to_vmem [thread:$0]  %s62, 112, %s64, [#allocation9]
    $region21: #{mlp_forward.1} parent=1 // pred_fallthru
      _
    // Predicated region
    $region22: #{mlp_forward.1} parent=1 // pred_check
      _
    $region23: #{mlp_forward.1} parent=1 // pred_check_branch
      %68 = sbr.rel (0) target = $region25
    $region24: #{mlp_forward.1} parent=1 // pred_region
      %70 = vsyncadd [#allocation9], 0
      %s71 = sshll.u32 %s5, 4
      %s72 = int_to_ptr.hbm [resolvable:$true] %s71
      %s73 = sshll.u32 [#allocation10], 4
      %s74 = int_to_ptr.vmem [resolvable:$true] %s73
      %79 = dma.hbm_to_vmem [thread:$0]  %s72, 7168, %s74, [#allocation9], 64, 64, 4
    $region25: #{mlp_forward.1} parent=1 // pred_fallthru
      _
    // Predicated region
    $region26: #{mlp_forward.1} parent=1 // pred_check
      _
    $region27: #{mlp_forward.1} parent=1 // pred_check_branch
      %81 = sbr.rel (0) target = $region29
    $region28: #{mlp_forward.1} parent=1 // pred_region
      %83 = vsyncadd [#allocation12], 0
      %s85 = sshll.u32 %s6, 4
      %s86 = int_to_ptr.hbm [resolvable:$true] %s85
      %s87 = sshll.u32 [#allocation11], 4
      %s88 = int_to_ptr.vmem [resolvable:$true] %s87
      %90 = dma.hbm_to_vmem [thread:$0]  %s86, 16, %s88, [#allocation12]
    $region29: #{mlp_forward.1} parent=1 // pred_fallthru
      _
    // Predicated region
    $region30: #{mlp_forward.1} parent=1 // pred_check
      _
    $region31: #{mlp_forward.1} parent=1 // pred_check_branch
      %92 = sbr.rel (0) target = $region33
    $region32: #{mlp_forward.1} parent=1 // pred_region
      %94 = dma.done [#allocation3], 43904
    $region33: #{mlp_forward.1} parent=1 // pred_fallthru
      _
    // Predicated region
    $region34: #{mlp_forward.1} parent=1 // pred_check
      _
    $region35: #{mlp_forward.1} parent=1 // pred_check_branch
      %96 = sbr.rel (0) target = $region37
    $region36: #{mlp_forward.1} parent=1 // pred_region
      %98 = dma.done [#allocation6], 112
    $region37: #{mlp_forward.1} parent=1 // pred_fallthru
      _
    // Predicated region
    $region38: #{mlp_forward.1} parent=1 // pred_check
      _
    $region39: #{mlp_forward.1} parent=1 // pred_check_branch
      %100 = sbr.rel (0) target = $region41
    $region40: #{mlp_forward.1} parent=1 // pred_region
      %102 = dma.done [#allocation6], 50176
    $region41: #{mlp_forward.1} parent=1 // pred_fallthru
      _
    // Predicated region
    $region42: #{mlp_forward.1} parent=1 // pred_check
      _
    $region43: #{mlp_forward.1} parent=1 // pred_check_branch
      %104 = sbr.rel (0) target = $region45
    $region44: #{mlp_forward.1} parent=1 // pred_region
      %106 = dma.done [#allocation9], 112
    $region45: #{mlp_forward.1} parent=1 // pred_fallthru
      _
    // Predicated region
    $region46: #{mlp_forward.1} parent=1 // pred_check
      _
    $region47: #{mlp_forward.1} parent=1 // pred_check_branch
      %108 = sbr.rel (0) target = $region49
    $region48: #{mlp_forward.1} parent=1 // pred_region
      %110 = dma.done [#allocation9], 7168
    $region49: #{mlp_forward.1} parent=1 // pred_fallthru
      _
    // Predicated region
    $region50: #{mlp_forward.1} parent=1 // pred_check
      _
    $region51: #{mlp_forward.1} parent=1 // pred_check_branch
      %112 = sbr.rel (0) target = $region53
    $region52: #{mlp_forward.1} parent=1 // pred_region
      %114 = dma.done [#allocation12], 16
    $region53: #{mlp_forward.1} parent=1 // pred_fallthru
      _
    %v116 = vld [vmem:[%s0] sm:$0xff]
    %v117 = vld [vmem:[%s0 + $0x8] sm:$0xff]
    %v118 = vld [vmem:[%s0 + $0x10] sm:$0xff]
    %v119 = vld [vmem:[%s0 + $0x18] sm:$0xf]
    %v120 = vld [vmem:[#allocation2] sm:$0xff]
    %v121 = vld [vmem:[#allocation2 + $0x8] sm:$0xff]
    %v122 = vld [vmem:[#allocation2 + $0x10] sm:$0xff]
    %v123 = vld [vmem:[#allocation2 + $0x18] sm:$0xf]
    %v124 = vld [vmem:[#allocation2 + $0x1c] sm:$0xff]
    %v125 = vld [vmem:[#allocation2 + $0x24] sm:$0xff]
    %v126 = vld [vmem:[#allocation2 + $0x2c] sm:$0xff]
    %v127 = vld [vmem:[#allocation2 + $0x34] sm:$0xf]
    %v128 = vld [vmem:[#allocation2 + $0x38] sm:$0xff]
    %v129 = vld [vmem:[#allocation2 + $0x40] sm:$0xff]
    %v130 = vld [vmem:[#allocation2 + $0x48] sm:$0xff]
    %v131 = vld [vmem:[#allocation2 + $0x50] sm:$0xf]
    %v132 = vld [vmem:[#allocation2 + $0x54] sm:$0xff]
    %v133 = vld [vmem:[#allocation2 + $0x5c] sm:$0xff]
    %v134 = vld [vmem:[#allocation2 + $0x64] sm:$0xff]
    %v135 = vld [vmem:[#allocation2 + $0x6c] sm:$0xf]
    %v136 = vld [vmem:[#allocation2 + $0x70] sm:$0xff]
    %v137 = vld [vmem:[#allocation2 + $0x78] sm:$0xff]
    %v138 = vld [vmem:[#allocation2 + $0x80] sm:$0xff]
    %v139 = vld [vmem:[#allocation2 + $0x88] sm:$0xf]
    %v140 = vld [vmem:[#allocation2 + $0x8c] sm:$0xff]
    %v141 = vld [vmem:[#allocation2 + $0x94] sm:$0xff]
    %v142 = vld [vmem:[#allocation2 + $0x9c] sm:$0xff]
    %v143 = vld [vmem:[#allocation2 + $0xa4] sm:$0xf]
    %v144 = vld [vmem:[#allocation2 + $0xa8] sm:$0xff]
    %v145 = vld [vmem:[#allocation2 + $0xb0] sm:$0xff]
    %v146 = vld [vmem:[#allocation2 + $0xb8] sm:$0xff]
    %v147 = vld [vmem:[#allocation2 + $0xc0] sm:$0xf]
    %v148 = vld [vmem:[#allocation2 + $0xc4] sm:$0xff]
    %v149 = vld [vmem:[#allocation2 + $0xcc] sm:$0xff]
    %v150 = vld [vmem:[#allocation2 + $0xd4] sm:$0xff]
    %v151 = vld [vmem:[#allocation2 + $0xdc] sm:$0xf]
    %v152 = vld [vmem:[#allocation2 + $0xe0] sm:$0xff]
    %v153 = vld [vmem:[#allocation2 + $0xe8] sm:$0xff]
    %v154 = vld [vmem:[#allocation2 + $0xf0] sm:$0xff]
    %v155 = vld [vmem:[#allocation2 + $0xf8] sm:$0xf]
    %v156 = vld [vmem:[#allocation2 + $0xfc] sm:$0xff]
    %v157 = vld [vmem:[#allocation2 + $0x104] sm:$0xff]
    %v158 = vld [vmem:[#allocation2 + $0x10c] sm:$0xff]
    %v159 = vld [vmem:[#allocation2 + $0x114] sm:$0xf]
    %v160 = vld [vmem:[#allocation2 + $0x118] sm:$0xff]
    %v161 = vld [vmem:[#allocation2 + $0x120] sm:$0xff]
    %v162 = vld [vmem:[#allocation2 + $0x128] sm:$0xff]
    %v163 = vld [vmem:[#allocation2 + $0x130] sm:$0xf]
    %v164 = vld [vmem:[#allocation2 + $0x134] sm:$0xff]
    %v165 = vld [vmem:[#allocation2 + $0x13c] sm:$0xff]
    %v166 = vld [vmem:[#allocation2 + $0x144] sm:$0xff]
    %v167 = vld [vmem:[#allocation2 + $0x14c] sm:$0xf]
    %v168 = vld [vmem:[#allocation2 + $0x150] sm:$0xff]
    %v169 = vld [vmem:[#allocation2 + $0x158] sm:$0xff]
    %v170 = vld [vmem:[#allocation2 + $0x160] sm:$0xff]
    %v171 = vld [vmem:[#allocation2 + $0x168] sm:$0xf]
    %v172 = vld [vmem:[#allocation2 + $0x16c] sm:$0xff]
    %v173 = vld [vmem:[#allocation2 + $0x174] sm:$0xff]
    %v174 = vld [vmem:[#allocation2 + $0x17c] sm:$0xff]
    %v175 = vld [vmem:[#allocation2 + $0x184] sm:$0xf]
    %v176 = vld [vmem:[#allocation2 + $0x188] sm:$0xff]
    %v177 = vld [vmem:[#allocation2 + $0x190] sm:$0xff]
    %v178 = vld [vmem:[#allocation2 + $0x198] sm:$0xff]
    %v179 = vld [vmem:[#allocation2 + $0x1a0] sm:$0xf]
    %v180 = vld [vmem:[#allocation2 + $0x1a4] sm:$0xff]
    %v181 = vld [vmem:[#allocation2 + $0x1ac] sm:$0xff]
    %v182 = vld [vmem:[#allocation2 + $0x1b4] sm:$0xff]
    %v183 = vld [vmem:[#allocation2 + $0x1bc] sm:$0xf]
    %v184 = vld [vmem:[#allocation2 + $0x1c0] sm:$0xff]
    %v185 = vld [vmem:[#allocation2 + $0x1c8] sm:$0xff]
    %v186 = vld [vmem:[#allocation2 + $0x1d0] sm:$0xff]
    %v187 = vld [vmem:[#allocation2 + $0x1d8] sm:$0xf]
    %v188 = vld [vmem:[#allocation2 + $0x1dc] sm:$0xff]
    %v189 = vld [vmem:[#allocation2 + $0x1e4] sm:$0xff]
    %v190 = vld [vmem:[#allocation2 + $0x1ec] sm:$0xff]
    %v191 = vld [vmem:[#allocation2 + $0x1f4] sm:$0xf]
    %v192 = vld [vmem:[#allocation2 + $0x1f8] sm:$0xff]
    %v193 = vld [vmem:[#allocation2 + $0x200] sm:$0xff]
    %v194 = vld [vmem:[#allocation2 + $0x208] sm:$0xff]
    %v195 = vld [vmem:[#allocation2 + $0x210] sm:$0xf]
    %v196 = vld [vmem:[#allocation2 + $0x214] sm:$0xff]
    %v197 = vld [vmem:[#allocation2 + $0x21c] sm:$0xff]
    %v198 = vld [vmem:[#allocation2 + $0x224] sm:$0xff]
    %v199 = vld [vmem:[#allocation2 + $0x22c] sm:$0xf]
    %v200 = vld [vmem:[#allocation2 + $0x230] sm:$0xff]
    %v201 = vld [vmem:[#allocation2 + $0x238] sm:$0xff]
    %v202 = vld [vmem:[#allocation2 + $0x240] sm:$0xff]
    %v203 = vld [vmem:[#allocation2 + $0x248] sm:$0xf]
    %v204 = vld [vmem:[#allocation2 + $0x24c] sm:$0xff]
    %v205 = vld [vmem:[#allocation2 + $0x254] sm:$0xff]
    %v206 = vld [vmem:[#allocation2 + $0x25c] sm:$0xff]
    %v207 = vld [vmem:[#allocation2 + $0x264] sm:$0xf]
    %v208 = vld [vmem:[#allocation2 + $0x268] sm:$0xff]
    %v209 = vld [vmem:[#allocation2 + $0x270] sm:$0xff]
    %v210 = vld [vmem:[#allocation2 + $0x278] sm:$0xff]
    %v211 = vld [vmem:[#allocation2 + $0x280] sm:$0xf]
    %v212 = vld [vmem:[#allocation2 + $0x284] sm:$0xff]
    %v213 = vld [vmem:[#allocation2 + $0x28c] sm:$0xff]
    %v214 = vld [vmem:[#allocation2 + $0x294] sm:$0xff]
    %v215 = vld [vmem:[#allocation2 + $0x29c] sm:$0xf]
    %v216 = vld [vmem:[#allocation2 + $0x2a0] sm:$0xff]
    %v217 = vld [vmem:[#allocation2 + $0x2a8] sm:$0xff]
    %v218 = vld [vmem:[#allocation2 + $0x2b0] sm:$0xff]
    %v219 = vld [vmem:[#allocation2 + $0x2b8] sm:$0xf]
    %v220 = vld [vmem:[#allocation2 + $0x2bc] sm:$0xff]
    %v221 = vld [vmem:[#allocation2 + $0x2c4] sm:$0xff]
    %v222 = vld [vmem:[#allocation2 + $0x2cc] sm:$0xff]
    %v223 = vld [vmem:[#allocation2 + $0x2d4] sm:$0xf]
    %v224 = vld [vmem:[#allocation2 + $0x2d8] sm:$0xff]
    %v225 = vld [vmem:[#allocation2 + $0x2e0] sm:$0xff]
    %v226 = vld [vmem:[#allocation2 + $0x2e8] sm:$0xff]
    %v227 = vld [vmem:[#allocation2 + $0x2f0] sm:$0xf]
    %v228 = vld [vmem:[#allocation2 + $0x2f4] sm:$0xff]
    %v229 = vld [vmem:[#allocation2 + $0x2fc] sm:$0xff]
    %v230 = vld [vmem:[#allocation2 + $0x304] sm:$0xff]
    %v231 = vld [vmem:[#allocation2 + $0x30c] sm:$0xf]
    %v232 = vld [vmem:[#allocation2 + $0x310] sm:$0xff]
    %v233 = vld [vmem:[#allocation2 + $0x318] sm:$0xff]
    %v234 = vld [vmem:[#allocation2 + $0x320] sm:$0xff]
    %v235 = vld [vmem:[#allocation2 + $0x328] sm:$0xf]
    %v236 = vld [vmem:[#allocation2 + $0x32c] sm:$0xff]
    %v237 = vld [vmem:[#allocation2 + $0x334] sm:$0xff]
    %v238 = vld [vmem:[#allocation2 + $0x33c] sm:$0xff]
    %v239 = vld [vmem:[#allocation2 + $0x344] sm:$0xf]
    %v240 = vld [vmem:[#allocation2 + $0x348] sm:$0xff]
    %v241 = vld [vmem:[#allocation2 + $0x350] sm:$0xff]
    %v242 = vld [vmem:[#allocation2 + $0x358] sm:$0xff]
    %v243 = vld [vmem:[#allocation2 + $0x360] sm:$0xf]
    %v244 = vld [vmem:[#allocation2 + $0x364] sm:$0xff]
    %v245 = vld [vmem:[#allocation2 + $0x36c] sm:$0xff]
    %v246 = vld [vmem:[#allocation2 + $0x374] sm:$0xff]
    %v247 = vld [vmem:[#allocation2 + $0x37c] sm:$0xf]
    %v248 = vld [vmem:[#allocation2 + $0x380] sm:$0xff]
    %v249 = vld [vmem:[#allocation2 + $0x388] sm:$0xff]
    %v250 = vld [vmem:[#allocation2 + $0x390] sm:$0xff]
    %v251 = vld [vmem:[#allocation2 + $0x398] sm:$0xf]
    %v252 = vld [vmem:[#allocation2 + $0x39c] sm:$0xff]
    %v253 = vld [vmem:[#allocation2 + $0x3a4] sm:$0xff]
    %v254 = vld [vmem:[#allocation2 + $0x3ac] sm:$0xff]
    %v255 = vld [vmem:[#allocation2 + $0x3b4] sm:$0xf]
    %v256 = vld [vmem:[#allocation2 + $0x3b8] sm:$0xff]
    %v257 = vld [vmem:[#allocation2 + $0x3c0] sm:$0xff]
    %v258 = vld [vmem:[#allocation2 + $0x3c8] sm:$0xff]
    %v259 = vld [vmem:[#allocation2 + $0x3d0] sm:$0xf]
    %v260 = vld [vmem:[#allocation2 + $0x3d4] sm:$0xff]
    %v261 = vld [vmem:[#allocation2 + $0x3dc] sm:$0xff]
    %v262 = vld [vmem:[#allocation2 + $0x3e4] sm:$0xff]
    %v263 = vld [vmem:[#allocation2 + $0x3ec] sm:$0xf]
    %v264 = vld [vmem:[#allocation2 + $0x3f0] sm:$0xff]
    %v265 = vld [vmem:[#allocation2 + $0x3f8] sm:$0xff]
    %v266 = vld [vmem:[#allocation2 + $0x400] sm:$0xff]
    %v267 = vld [vmem:[#allocation2 + $0x408] sm:$0xf]
    %v268 = vld [vmem:[#allocation2 + $0x40c] sm:$0xff]
    %v269 = vld [vmem:[#allocation2 + $0x414] sm:$0xff]
    %v270 = vld [vmem:[#allocation2 + $0x41c] sm:$0xff]
    %v271 = vld [vmem:[#allocation2 + $0x424] sm:$0xf]
    %v272 = vld [vmem:[#allocation2 + $0x428] sm:$0xff]
    %v273 = vld [vmem:[#allocation2 + $0x430] sm:$0xff]
    %v274 = vld [vmem:[#allocation2 + $0x438] sm:$0xff]
    %v275 = vld [vmem:[#allocation2 + $0x440] sm:$0xf]
    %v276 = vld [vmem:[#allocation2 + $0x444] sm:$0xff]
    %v277 = vld [vmem:[#allocation2 + $0x44c] sm:$0xff]
    %v278 = vld [vmem:[#allocation2 + $0x454] sm:$0xff]
    %v279 = vld [vmem:[#allocation2 + $0x45c] sm:$0xf]
    %v280 = vld [vmem:[#allocation2 + $0x460] sm:$0xff]
    %v281 = vld [vmem:[#allocation2 + $0x468] sm:$0xff]
    %v282 = vld [vmem:[#allocation2 + $0x470] sm:$0xff]
    %v283 = vld [vmem:[#allocation2 + $0x478] sm:$0xf]
    %v284 = vld [vmem:[#allocation2 + $0x47c] sm:$0xff]
    %v285 = vld [vmem:[#allocation2 + $0x484] sm:$0xff]
    %v286 = vld [vmem:[#allocation2 + $0x48c] sm:$0xff]
    %v287 = vld [vmem:[#allocation2 + $0x494] sm:$0xf]
    %v288 = vld [vmem:[#allocation2 + $0x498] sm:$0xff]
    %v289 = vld [vmem:[#allocation2 + $0x4a0] sm:$0xff]
    %v290 = vld [vmem:[#allocation2 + $0x4a8] sm:$0xff]
    %v291 = vld [vmem:[#allocation2 + $0x4b0] sm:$0xf]
    %v292 = vld [vmem:[#allocation2 + $0x4b4] sm:$0xff]
    %v293 = vld [vmem:[#allocation2 + $0x4bc] sm:$0xff]
    %v294 = vld [vmem:[#allocation2 + $0x4c4] sm:$0xff]
    %v295 = vld [vmem:[#allocation2 + $0x4cc] sm:$0xf]
    %v296 = vld [vmem:[#allocation2 + $0x4d0] sm:$0xff]
    %v297 = vld [vmem:[#allocation2 + $0x4d8] sm:$0xff]
    %v298 = vld [vmem:[#allocation2 + $0x4e0] sm:$0xff]
    %v299 = vld [vmem:[#allocation2 + $0x4e8] sm:$0xf]
    %v300 = vld [vmem:[#allocation2 + $0x4ec] sm:$0xff]
    %v301 = vld [vmem:[#allocation2 + $0x4f4] sm:$0xff]
    %v302 = vld [vmem:[#allocation2 + $0x4fc] sm:$0xff]
    %v303 = vld [vmem:[#allocation2 + $0x504] sm:$0xf]
    %v304 = vld [vmem:[#allocation2 + $0x508] sm:$0xff]
    %v305 = vld [vmem:[#allocation2 + $0x510] sm:$0xff]
    %v306 = vld [vmem:[#allocation2 + $0x518] sm:$0xff]
    %v307 = vld [vmem:[#allocation2 + $0x520] sm:$0xf]
    %v308 = vld [vmem:[#allocation2 + $0x524] sm:$0xff]
    %v309 = vld [vmem:[#allocation2 + $0x52c] sm:$0xff]
    %v310 = vld [vmem:[#allocation2 + $0x534] sm:$0xff]
    %v311 = vld [vmem:[#allocation2 + $0x53c] sm:$0xf]
    %v312 = vld [vmem:[#allocation2 + $0x540] sm:$0xff]
    %v313 = vld [vmem:[#allocation2 + $0x548] sm:$0xff]
    %v314 = vld [vmem:[#allocation2 + $0x550] sm:$0xff]
    %v315 = vld [vmem:[#allocation2 + $0x558] sm:$0xf]
    %v316 = vld [vmem:[#allocation2 + $0x55c] sm:$0xff]
    %v317 = vld [vmem:[#allocation2 + $0x564] sm:$0xff]
    %v318 = vld [vmem:[#allocation2 + $0x56c] sm:$0xff]
    %v319 = vld [vmem:[#allocation2 + $0x574] sm:$0xf]
    %v320 = vld [vmem:[#allocation2 + $0x578] sm:$0xff]
    %v321 = vld [vmem:[#allocation2 + $0x580] sm:$0xff]
    %v322 = vld [vmem:[#allocation2 + $0x588] sm:$0xff]
    %v323 = vld [vmem:[#allocation2 + $0x590] sm:$0xf]
    %v324 = vld [vmem:[#allocation2 + $0x594] sm:$0xff]
    %v325 = vld [vmem:[#allocation2 + $0x59c] sm:$0xff]
    %v326 = vld [vmem:[#allocation2 + $0x5a4] sm:$0xff]
    %v327 = vld [vmem:[#allocation2 + $0x5ac] sm:$0xf]
    %v328 = vld [vmem:[#allocation2 + $0x5b0] sm:$0xff]
    %v329 = vld [vmem:[#allocation2 + $0x5b8] sm:$0xff]
    %v330 = vld [vmem:[#allocation2 + $0x5c0] sm:$0xff]
    %v331 = vld [vmem:[#allocation2 + $0x5c8] sm:$0xf]
    %v332 = vld [vmem:[#allocation2 + $0x5cc] sm:$0xff]
    %v333 = vld [vmem:[#allocation2 + $0x5d4] sm:$0xff]
    %v334 = vld [vmem:[#allocation2 + $0x5dc] sm:$0xff]
    %v335 = vld [vmem:[#allocation2 + $0x5e4] sm:$0xf]
    %v336 = vld [vmem:[#allocation2 + $0x5e8] sm:$0xff]
    %v337 = vld [vmem:[#allocation2 + $0x5f0] sm:$0xff]
    %v338 = vld [vmem:[#allocation2 + $0x5f8] sm:$0xff]
    %v339 = vld [vmem:[#allocation2 + $0x600] sm:$0xf]
    %v340 = vld [vmem:[#allocation2 + $0x604] sm:$0xff]
    %v341 = vld [vmem:[#allocation2 + $0x60c] sm:$0xff]
    %v342 = vld [vmem:[#allocation2 + $0x614] sm:$0xff]
    %v343 = vld [vmem:[#allocation2 + $0x61c] sm:$0xf]
    %v344 = vld [vmem:[#allocation2 + $0x620] sm:$0xff]
    %v345 = vld [vmem:[#allocation2 + $0x628] sm:$0xff]
    %v346 = vld [vmem:[#allocation2 + $0x630] sm:$0xff]
    %v347 = vld [vmem:[#allocation2 + $0x638] sm:$0xf]
    %v348 = vld [vmem:[#allocation2 + $0x63c] sm:$0xff]
    %v349 = vld [vmem:[#allocation2 + $0x644] sm:$0xff]
    %v350 = vld [vmem:[#allocation2 + $0x64c] sm:$0xff]
    %v351 = vld [vmem:[#allocation2 + $0x654] sm:$0xf]
    %v352 = vld [vmem:[#allocation2 + $0x658] sm:$0xff]
    %v353 = vld [vmem:[#allocation2 + $0x660] sm:$0xff]
    %v354 = vld [vmem:[#allocation2 + $0x668] sm:$0xff]
    %v355 = vld [vmem:[#allocation2 + $0x670] sm:$0xf]
    %v356 = vld [vmem:[#allocation2 + $0x674] sm:$0xff]
    %v357 = vld [vmem:[#allocation2 + $0x67c] sm:$0xff]
    %v358 = vld [vmem:[#allocation2 + $0x684] sm:$0xff]
    %v359 = vld [vmem:[#allocation2 + $0x68c] sm:$0xf]
    %v360 = vld [vmem:[#allocation2 + $0x690] sm:$0xff]
    %v361 = vld [vmem:[#allocation2 + $0x698] sm:$0xff]
    %v362 = vld [vmem:[#allocation2 + $0x6a0] sm:$0xff]
    %v363 = vld [vmem:[#allocation2 + $0x6a8] sm:$0xf]
    %v364 = vld [vmem:[#allocation2 + $0x6ac] sm:$0xff]
    %v365 = vld [vmem:[#allocation2 + $0x6b4] sm:$0xff]
    %v366 = vld [vmem:[#allocation2 + $0x6bc] sm:$0xff]
    %v367 = vld [vmem:[#allocation2 + $0x6c4] sm:$0xf]
    %v368 = vld [vmem:[#allocation2 + $0x6c8] sm:$0xff]
    %v369 = vld [vmem:[#allocation2 + $0x6d0] sm:$0xff]
    %v370 = vld [vmem:[#allocation2 + $0x6d8] sm:$0xff]
    %v371 = vld [vmem:[#allocation2 + $0x6e0] sm:$0xf]
    %v372 = vld [vmem:[#allocation2 + $0x6e4] sm:$0xff]
    %v373 = vld [vmem:[#allocation2 + $0x6ec] sm:$0xff]
    %v374 = vld [vmem:[#allocation2 + $0x6f4] sm:$0xff]
    %v375 = vld [vmem:[#allocation2 + $0x6fc] sm:$0xf]
    %v376 = vld [vmem:[#allocation2 + $0x700] sm:$0xff]
    %v377 = vld [vmem:[#allocation2 + $0x708] sm:$0xff]
    %v378 = vld [vmem:[#allocation2 + $0x710] sm:$0xff]
    %v379 = vld [vmem:[#allocation2 + $0x718] sm:$0xf]
    %v380 = vld [vmem:[#allocation2 + $0x71c] sm:$0xff]
    %v381 = vld [vmem:[#allocation2 + $0x724] sm:$0xff]
    %v382 = vld [vmem:[#allocation2 + $0x72c] sm:$0xff]
    %v383 = vld [vmem:[#allocation2 + $0x734] sm:$0xf]
    %v384 = vld [vmem:[#allocation2 + $0x738] sm:$0xff]
    %v385 = vld [vmem:[#allocation2 + $0x740] sm:$0xff]
    %v386 = vld [vmem:[#allocation2 + $0x748] sm:$0xff]
    %v387 = vld [vmem:[#allocation2 + $0x750] sm:$0xf]
    %v388 = vld [vmem:[#allocation2 + $0x754] sm:$0xff]
    %v389 = vld [vmem:[#allocation2 + $0x75c] sm:$0xff]
    %v390 = vld [vmem:[#allocation2 + $0x764] sm:$0xff]
    %v391 = vld [vmem:[#allocation2 + $0x76c] sm:$0xf]
    %v392 = vld [vmem:[#allocation2 + $0x770] sm:$0xff]
    %v393 = vld [vmem:[#allocation2 + $0x778] sm:$0xff]
    %v394 = vld [vmem:[#allocation2 + $0x780] sm:$0xff]
    %v395 = vld [vmem:[#allocation2 + $0x788] sm:$0xf]
    %v396 = vld [vmem:[#allocation2 + $0x78c] sm:$0xff]
    %v397 = vld [vmem:[#allocation2 + $0x794] sm:$0xff]
    %v398 = vld [vmem:[#allocation2 + $0x79c] sm:$0xff]
    %v399 = vld [vmem:[#allocation2 + $0x7a4] sm:$0xf]
    %v400 = vld [vmem:[#allocation2 + $0x7a8] sm:$0xff]
    %v401 = vld [vmem:[#allocation2 + $0x7b0] sm:$0xff]
    %v402 = vld [vmem:[#allocation2 + $0x7b8] sm:$0xff]
    %v403 = vld [vmem:[#allocation2 + $0x7c0] sm:$0xf]
    %v404 = vld [vmem:[#allocation2 + $0x7c4] sm:$0xff]
    %v405 = vld [vmem:[#allocation2 + $0x7cc] sm:$0xff]
    %v406 = vld [vmem:[#allocation2 + $0x7d4] sm:$0xff]
    %v407 = vld [vmem:[#allocation2 + $0x7dc] sm:$0xf]
    %v408 = vld [vmem:[#allocation2 + $0x7e0] sm:$0xff]
    %v409 = vld [vmem:[#allocation2 + $0x7e8] sm:$0xff]
    %v410 = vld [vmem:[#allocation2 + $0x7f0] sm:$0xff]
    %v411 = vld [vmem:[#allocation2 + $0x7f8] sm:$0xf]
    %v412 = vld [vmem:[#allocation2 + $0x7fc] sm:$0xff]
    %v413 = vld [vmem:[#allocation2 + $0x804] sm:$0xff]
    %v414 = vld [vmem:[#allocation2 + $0x80c] sm:$0xff]
    %v415 = vld [vmem:[#allocation2 + $0x814] sm:$0xf]
    %v416 = vld [vmem:[#allocation2 + $0x818] sm:$0xff]
    %v417 = vld [vmem:[#allocation2 + $0x820] sm:$0xff]
    %v418 = vld [vmem:[#allocation2 + $0x828] sm:$0xff]
    %v419 = vld [vmem:[#allocation2 + $0x830] sm:$0xf]
    %v420 = vld [vmem:[#allocation2 + $0x834] sm:$0xff]
    %v421 = vld [vmem:[#allocation2 + $0x83c] sm:$0xff]
    %v422 = vld [vmem:[#allocation2 + $0x844] sm:$0xff]
    %v423 = vld [vmem:[#allocation2 + $0x84c] sm:$0xf]
    %v424 = vld [vmem:[#allocation2 + $0x850] sm:$0xff]
    %v425 = vld [vmem:[#allocation2 + $0x858] sm:$0xff]
    %v426 = vld [vmem:[#allocation2 + $0x860] sm:$0xff]
    %v427 = vld [vmem:[#allocation2 + $0x868] sm:$0xf]
    %v428 = vld [vmem:[#allocation2 + $0x86c] sm:$0xff]
    %v429 = vld [vmem:[#allocation2 + $0x874] sm:$0xff]
    %v430 = vld [vmem:[#allocation2 + $0x87c] sm:$0xff]
    %v431 = vld [vmem:[#allocation2 + $0x884] sm:$0xf]
    %v432 = vld [vmem:[#allocation2 + $0x888] sm:$0xff]
    %v433 = vld [vmem:[#allocation2 + $0x890] sm:$0xff]
    %v434 = vld [vmem:[#allocation2 + $0x898] sm:$0xff]
    %v435 = vld [vmem:[#allocation2 + $0x8a0] sm:$0xf]
    %v436 = vld [vmem:[#allocation2 + $0x8a4] sm:$0xff]
    %v437 = vld [vmem:[#allocation2 + $0x8ac] sm:$0xff]
    %v438 = vld [vmem:[#allocation2 + $0x8b4] sm:$0xff]
    %v439 = vld [vmem:[#allocation2 + $0x8bc] sm:$0xf]
    %v440 = vld [vmem:[#allocation2 + $0x8c0] sm:$0xff]
    %v441 = vld [vmem:[#allocation2 + $0x8c8] sm:$0xff]
    %v442 = vld [vmem:[#allocation2 + $0x8d0] sm:$0xff]
    %v443 = vld [vmem:[#allocation2 + $0x8d8] sm:$0xf]
    %v444 = vld [vmem:[#allocation2 + $0x8dc] sm:$0xff]
    %v445 = vld [vmem:[#allocation2 + $0x8e4] sm:$0xff]
    %v446 = vld [vmem:[#allocation2 + $0x8ec] sm:$0xff]
    %v447 = vld [vmem:[#allocation2 + $0x8f4] sm:$0xf]
    %v448 = vld [vmem:[#allocation2 + $0x8f8] sm:$0xff]
    %v449 = vld [vmem:[#allocation2 + $0x900] sm:$0xff]
    %v450 = vld [vmem:[#allocation2 + $0x908] sm:$0xff]
    %v451 = vld [vmem:[#allocation2 + $0x910] sm:$0xf]
    %v452 = vld [vmem:[#allocation2 + $0x914] sm:$0xff]
    %v453 = vld [vmem:[#allocation2 + $0x91c] sm:$0xff]
    %v454 = vld [vmem:[#allocation2 + $0x924] sm:$0xff]
    %v455 = vld [vmem:[#allocation2 + $0x92c] sm:$0xf]
    %v456 = vld [vmem:[#allocation2 + $0x930] sm:$0xff]
    %v457 = vld [vmem:[#allocation2 + $0x938] sm:$0xff]
    %v458 = vld [vmem:[#allocation2 + $0x940] sm:$0xff]
    %v459 = vld [vmem:[#allocation2 + $0x948] sm:$0xf]
    %v460 = vld [vmem:[#allocation2 + $0x94c] sm:$0xff]
    %v461 = vld [vmem:[#allocation2 + $0x954] sm:$0xff]
    %v462 = vld [vmem:[#allocation2 + $0x95c] sm:$0xff]
    %v463 = vld [vmem:[#allocation2 + $0x964] sm:$0xf]
    %v464 = vld [vmem:[#allocation2 + $0x968] sm:$0xff]
    %v465 = vld [vmem:[#allocation2 + $0x970] sm:$0xff]
    %v466 = vld [vmem:[#allocation2 + $0x978] sm:$0xff]
    %v467 = vld [vmem:[#allocation2 + $0x980] sm:$0xf]
    %v468 = vld [vmem:[#allocation2 + $0x984] sm:$0xff]
    %v469 = vld [vmem:[#allocation2 + $0x98c] sm:$0xff]
    %v470 = vld [vmem:[#allocation2 + $0x994] sm:$0xff]
    %v471 = vld [vmem:[#allocation2 + $0x99c] sm:$0xf]
    %v472 = vld [vmem:[#allocation2 + $0x9a0] sm:$0xff]
    %v473 = vld [vmem:[#allocation2 + $0x9a8] sm:$0xff]
    %v474 = vld [vmem:[#allocation2 + $0x9b0] sm:$0xff]
    %v475 = vld [vmem:[#allocation2 + $0x9b8] sm:$0xf]
    %v476 = vld [vmem:[#allocation2 + $0x9bc] sm:$0xff]
    %v477 = vld [vmem:[#allocation2 + $0x9c4] sm:$0xff]
    %v478 = vld [vmem:[#allocation2 + $0x9cc] sm:$0xff]
    %v479 = vld [vmem:[#allocation2 + $0x9d4] sm:$0xf]
    %v480 = vld [vmem:[#allocation2 + $0x9d8] sm:$0xff]
    %v481 = vld [vmem:[#allocation2 + $0x9e0] sm:$0xff]
    %v482 = vld [vmem:[#allocation2 + $0x9e8] sm:$0xff]
    %v483 = vld [vmem:[#allocation2 + $0x9f0] sm:$0xf]
    %v484 = vld [vmem:[#allocation2 + $0x9f4] sm:$0xff]
    %v485 = vld [vmem:[#allocation2 + $0x9fc] sm:$0xff]
    %v486 = vld [vmem:[#allocation2 + $0xa04] sm:$0xff]
    %v487 = vld [vmem:[#allocation2 + $0xa0c] sm:$0xf]
    %v488 = vld [vmem:[#allocation2 + $0xa10] sm:$0xff]
    %v489 = vld [vmem:[#allocation2 + $0xa18] sm:$0xff]
    %v490 = vld [vmem:[#allocation2 + $0xa20] sm:$0xff]
    %v491 = vld [vmem:[#allocation2 + $0xa28] sm:$0xf]
    %v492 = vld [vmem:[#allocation2 + $0xa2c] sm:$0xff]
    %v493 = vld [vmem:[#allocation2 + $0xa34] sm:$0xff]
    %v494 = vld [vmem:[#allocation2 + $0xa3c] sm:$0xff]
    %v495 = vld [vmem:[#allocation2 + $0xa44] sm:$0xf]
    %v496 = vld [vmem:[#allocation2 + $0xa48] sm:$0xff]
    %v497 = vld [vmem:[#allocation2 + $0xa50] sm:$0xff]
    %v498 = vld [vmem:[#allocation2 + $0xa58] sm:$0xff]
    %v499 = vld [vmem:[#allocation2 + $0xa60] sm:$0xf]
    %v500 = vld [vmem:[#allocation2 + $0xa64] sm:$0xff]
    %v501 = vld [vmem:[#allocation2 + $0xa6c] sm:$0xff]
    %v502 = vld [vmem:[#allocation2 + $0xa74] sm:$0xff]
    %v503 = vld [vmem:[#allocation2 + $0xa7c] sm:$0xf]
    %v504 = vld [vmem:[#allocation2 + $0xa80] sm:$0xff]
    %v505 = vld [vmem:[#allocation2 + $0xa88] sm:$0xff]
    %v506 = vld [vmem:[#allocation2 + $0xa90] sm:$0xff]
    %v507 = vld [vmem:[#allocation2 + $0xa98] sm:$0xf]
    %v508 = vld [vmem:[#allocation2 + $0xa9c] sm:$0xff]
    %v509 = vld [vmem:[#allocation2 + $0xaa4] sm:$0xff]
    %v510 = vld [vmem:[#allocation2 + $0xaac] sm:$0xff]
    %v511 = vld [vmem:[#allocation2 + $0xab4] sm:$0xf]
    %v512 = vld [vmem:[#allocation5] sm:$0xff]
    %v514 = vperm.slane %v512, 0
    %v515 = vperm.slane %v512, 1
    %v516 = vperm.slane %v512, 2
    %v517 = vperm.slane %v512, 3
    %v518 = vperm.slane %v512, 4
    %v519 = vperm.slane %v512, 5
    %v520 = vperm.slane %v512, 6
    %v532 = vunpack.c.l.b16 %v116
    %v533 = vunpack.c.h.b16 %v116
    %v534 = vunpack.c.l.b16 %v117
    %v535 = vunpack.c.h.b16 %v117
    %v536 = vunpack.c.l.b16 %v118
    %v537 = vunpack.c.h.b16 %v118
    %v538 = vunpack.c.l.b16 %v119
    %v539 = vpack.c.b16 %v532, %v532
    %v540 = vpack.c.b16 %v533, %v533
    %v541 = vpack.c.b16 %v534, %v534
    %v542 = vpack.c.b16 %v535, %v535
    %v543 = vpack.c.b16 %v536, %v536
    %v544 = vpack.c.b16 %v537, %v537
    %v545 = vpack.c.b16 %v538, %v538
    %v944 = vunpack.c.l.b16 %v120
    %v945 = vunpack.c.h.b16 %v120
    %v946 = vunpack.c.l.b16 %v121
    %v947 = vunpack.c.h.b16 %v121
    %v948 = vunpack.c.l.b16 %v122
    %v949 = vunpack.c.h.b16 %v122
    %v950 = vunpack.c.l.b16 %v123
    %v951 = vunpack.c.l.b16 %v124
    %v952 = vunpack.c.h.b16 %v124
    %v953 = vunpack.c.l.b16 %v125
    %v954 = vunpack.c.h.b16 %v125
    %v955 = vunpack.c.l.b16 %v126
    %v956 = vunpack.c.h.b16 %v126
    %v957 = vunpack.c.l.b16 %v127
    %v958 = vunpack.c.l.b16 %v128
    %v959 = vunpack.c.h.b16 %v128
    %v960 = vunpack.c.l.b16 %v129
    %v961 = vunpack.c.h.b16 %v129
    %v962 = vunpack.c.l.b16 %v130
    %v963 = vunpack.c.h.b16 %v130
    %v964 = vunpack.c.l.b16 %v131
    %v965 = vunpack.c.l.b16 %v132
    %v966 = vunpack.c.h.b16 %v132
    %v967 = vunpack.c.l.b16 %v133
    %v968 = vunpack.c.h.b16 %v133
    %v969 = vunpack.c.l.b16 %v134
    %v970 = vunpack.c.h.b16 %v134
    %v971 = vunpack.c.l.b16 %v135
    %v972 = vunpack.c.l.b16 %v136
    %v973 = vunpack.c.h.b16 %v136
    %v974 = vunpack.c.l.b16 %v137
    %v975 = vunpack.c.h.b16 %v137
    %v976 = vunpack.c.l.b16 %v138
    %v977 = vunpack.c.h.b16 %v138
    %v978 = vunpack.c.l.b16 %v139
    %v979 = vunpack.c.l.b16 %v140
    %v980 = vunpack.c.h.b16 %v140
    %v981 = vunpack.c.l.b16 %v141
    %v982 = vunpack.c.h.b16 %v141
    %v983 = vunpack.c.l.b16 %v142
    %v984 = vunpack.c.h.b16 %v142
    %v985 = vunpack.c.l.b16 %v143
    %v986 = vunpack.c.l.b16 %v144
    %v987 = vunpack.c.h.b16 %v144
    %v988 = vunpack.c.l.b16 %v145
    %v989 = vunpack.c.h.b16 %v145
    %v990 = vunpack.c.l.b16 %v146
    %v991 = vunpack.c.h.b16 %v146
    %v992 = vunpack.c.l.b16 %v147
    %v993 = vunpack.c.l.b16 %v148
    %v994 = vunpack.c.h.b16 %v148
    %v995 = vunpack.c.l.b16 %v149
    %v996 = vunpack.c.h.b16 %v149
    %v997 = vunpack.c.l.b16 %v150
    %v998 = vunpack.c.h.b16 %v150
    %v999 = vunpack.c.l.b16 %v151
    %v1000 = vunpack.c.l.b16 %v152
    %v1001 = vunpack.c.h.b16 %v152
    %v1002 = vunpack.c.l.b16 %v153
    %v1003 = vunpack.c.h.b16 %v153
    %v1004 = vunpack.c.l.b16 %v154
    %v1005 = vunpack.c.h.b16 %v154
    %v1006 = vunpack.c.l.b16 %v155
    %v1007 = vunpack.c.l.b16 %v156
    %v1008 = vunpack.c.h.b16 %v156
    %v1009 = vunpack.c.l.b16 %v157
    %v1010 = vunpack.c.h.b16 %v157
    %v1011 = vunpack.c.l.b16 %v158
    %v1012 = vunpack.c.h.b16 %v158
    %v1013 = vunpack.c.l.b16 %v159
    %v1014 = vunpack.c.l.b16 %v160
    %v1015 = vunpack.c.h.b16 %v160
    %v1016 = vunpack.c.l.b16 %v161
    %v1017 = vunpack.c.h.b16 %v161
    %v1018 = vunpack.c.l.b16 %v162
    %v1019 = vunpack.c.h.b16 %v162
    %v1020 = vunpack.c.l.b16 %v163
    %v1021 = vunpack.c.l.b16 %v164
    %v1022 = vunpack.c.h.b16 %v164
    %v1023 = vunpack.c.l.b16 %v165
    %v1024 = vunpack.c.h.b16 %v165
    %v1025 = vunpack.c.l.b16 %v166
    %v1026 = vunpack.c.h.b16 %v166
    %v1027 = vunpack.c.l.b16 %v167
    %v1028 = vunpack.c.l.b16 %v168
    %v1029 = vunpack.c.h.b16 %v168
    %v1030 = vunpack.c.l.b16 %v169
    %v1031 = vunpack.c.h.b16 %v169
    %v1032 = vunpack.c.l.b16 %v170
    %v1033 = vunpack.c.h.b16 %v170
    %v1034 = vunpack.c.l.b16 %v171
    %v1035 = vunpack.c.l.b16 %v172
    %v1036 = vunpack.c.h.b16 %v172
    %v1037 = vunpack.c.l.b16 %v173
    %v1038 = vunpack.c.h.b16 %v173
    %v1039 = vunpack.c.l.b16 %v174
    %v1040 = vunpack.c.h.b16 %v174
    %v1041 = vunpack.c.l.b16 %v175
    %v1042 = vunpack.c.l.b16 %v176
    %v1043 = vunpack.c.h.b16 %v176
    %v1044 = vunpack.c.l.b16 %v177
    %v1045 = vunpack.c.h.b16 %v177
    %v1046 = vunpack.c.l.b16 %v178
    %v1047 = vunpack.c.h.b16 %v178
    %v1048 = vunpack.c.l.b16 %v179
    %v1049 = vunpack.c.l.b16 %v180
    %v1050 = vunpack.c.h.b16 %v180
    %v1051 = vunpack.c.l.b16 %v181
    %v1052 = vunpack.c.h.b16 %v181
    %v1053 = vunpack.c.l.b16 %v182
    %v1054 = vunpack.c.h.b16 %v182
    %v1055 = vunpack.c.l.b16 %v183
    %v1056 = vunpack.c.l.b16 %v184
    %v1057 = vunpack.c.h.b16 %v184
    %v1058 = vunpack.c.l.b16 %v185
    %v1059 = vunpack.c.h.b16 %v185
    %v1060 = vunpack.c.l.b16 %v186
    %v1061 = vunpack.c.h.b16 %v186
    %v1062 = vunpack.c.l.b16 %v187
    %v1063 = vunpack.c.l.b16 %v188
    %v1064 = vunpack.c.h.b16 %v188
    %v1065 = vunpack.c.l.b16 %v189
    %v1066 = vunpack.c.h.b16 %v189
    %v1067 = vunpack.c.l.b16 %v190
    %v1068 = vunpack.c.h.b16 %v190
    %v1069 = vunpack.c.l.b16 %v191
    %v1070 = vunpack.c.l.b16 %v192
    %v1071 = vunpack.c.h.b16 %v192
    %v1072 = vunpack.c.l.b16 %v193
    %v1073 = vunpack.c.h.b16 %v193
    %v1074 = vunpack.c.l.b16 %v194
    %v1075 = vunpack.c.h.b16 %v194
    %v1076 = vunpack.c.l.b16 %v195
    %v1077 = vunpack.c.l.b16 %v196
    %v1078 = vunpack.c.h.b16 %v196
    %v1079 = vunpack.c.l.b16 %v197
    %v1080 = vunpack.c.h.b16 %v197
    %v1081 = vunpack.c.l.b16 %v198
    %v1082 = vunpack.c.h.b16 %v198
    %v1083 = vunpack.c.l.b16 %v199
    %v1084 = vunpack.c.l.b16 %v200
    %v1085 = vunpack.c.h.b16 %v200
    %v1086 = vunpack.c.l.b16 %v201
    %v1087 = vunpack.c.h.b16 %v201
    %v1088 = vunpack.c.l.b16 %v202
    %v1089 = vunpack.c.h.b16 %v202
    %v1090 = vunpack.c.l.b16 %v203
    %v1091 = vunpack.c.l.b16 %v204
    %v1092 = vunpack.c.h.b16 %v204
    %v1093 = vunpack.c.l.b16 %v205
    %v1094 = vunpack.c.h.b16 %v205
    %v1095 = vunpack.c.l.b16 %v206
    %v1096 = vunpack.c.h.b16 %v206
    %v1097 = vunpack.c.l.b16 %v207
    %v1098 = vunpack.c.l.b16 %v208
    %v1099 = vunpack.c.h.b16 %v208
    %v1100 = vunpack.c.l.b16 %v209
    %v1101 = vunpack.c.h.b16 %v209
    %v1102 = vunpack.c.l.b16 %v210
    %v1103 = vunpack.c.h.b16 %v210
    %v1104 = vunpack.c.l.b16 %v211
    %v1105 = vunpack.c.l.b16 %v212
    %v1106 = vunpack.c.h.b16 %v212
    %v1107 = vunpack.c.l.b16 %v213
    %v1108 = vunpack.c.h.b16 %v213
    %v1109 = vunpack.c.l.b16 %v214
    %v1110 = vunpack.c.h.b16 %v214
    %v1111 = vunpack.c.l.b16 %v215
    %v1112 = vunpack.c.l.b16 %v216
    %v1113 = vunpack.c.h.b16 %v216
    %v1114 = vunpack.c.l.b16 %v217
    %v1115 = vunpack.c.h.b16 %v217
    %v1116 = vunpack.c.l.b16 %v218
    %v1117 = vunpack.c.h.b16 %v218
    %v1118 = vunpack.c.l.b16 %v219
    %v1119 = vunpack.c.l.b16 %v220
    %v1120 = vunpack.c.h.b16 %v220
    %v1121 = vunpack.c.l.b16 %v221
    %v1122 = vunpack.c.h.b16 %v221
    %v1123 = vunpack.c.l.b16 %v222
    %v1124 = vunpack.c.h.b16 %v222
    %v1125 = vunpack.c.l.b16 %v223
    %v1126 = vunpack.c.l.b16 %v224
    %v1127 = vunpack.c.h.b16 %v224
    %v1128 = vunpack.c.l.b16 %v225
    %v1129 = vunpack.c.h.b16 %v225
    %v1130 = vunpack.c.l.b16 %v226
    %v1131 = vunpack.c.h.b16 %v226
    %v1132 = vunpack.c.l.b16 %v227
    %v1133 = vunpack.c.l.b16 %v228
    %v1134 = vunpack.c.h.b16 %v228
    %v1135 = vunpack.c.l.b16 %v229
    %v1136 = vunpack.c.h.b16 %v229
    %v1137 = vunpack.c.l.b16 %v230
    %v1138 = vunpack.c.h.b16 %v230
    %v1139 = vunpack.c.l.b16 %v231
    %v1140 = vunpack.c.l.b16 %v232
    %v1141 = vunpack.c.h.b16 %v232
    %v1142 = vunpack.c.l.b16 %v233
    %v1143 = vunpack.c.h.b16 %v233
    %v1144 = vunpack.c.l.b16 %v234
    %v1145 = vunpack.c.h.b16 %v234
    %v1146 = vunpack.c.l.b16 %v235
    %v1147 = vunpack.c.l.b16 %v236
    %v1148 = vunpack.c.h.b16 %v236
    %v1149 = vunpack.c.l.b16 %v237
    %v1150 = vunpack.c.h.b16 %v237
    %v1151 = vunpack.c.l.b16 %v238
    %v1152 = vunpack.c.h.b16 %v238
    %v1153 = vunpack.c.l.b16 %v239
    %v1154 = vunpack.c.l.b16 %v240
    %v1155 = vunpack.c.h.b16 %v240
    %v1156 = vunpack.c.l.b16 %v241
    %v1157 = vunpack.c.h.b16 %v241
    %v1158 = vunpack.c.l.b16 %v242
    %v1159 = vunpack.c.h.b16 %v242
    %v1160 = vunpack.c.l.b16 %v243
    %v1161 = vunpack.c.l.b16 %v244
    %v1162 = vunpack.c.h.b16 %v244
    %v1163 = vunpack.c.l.b16 %v245
    %v1164 = vunpack.c.h.b16 %v245
    %v1165 = vunpack.c.l.b16 %v246
    %v1166 = vunpack.c.h.b16 %v246
    %v1167 = vunpack.c.l.b16 %v247
    %v1168 = vunpack.c.l.b16 %v248
    %v1169 = vunpack.c.h.b16 %v248
    %v1170 = vunpack.c.l.b16 %v249
    %v1171 = vunpack.c.h.b16 %v249
    %v1172 = vunpack.c.l.b16 %v250
    %v1173 = vunpack.c.h.b16 %v250
    %v1174 = vunpack.c.l.b16 %v251
    %v1175 = vunpack.c.l.b16 %v252
    %v1176 = vunpack.c.h.b16 %v252
    %v1177 = vunpack.c.l.b16 %v253
    %v1178 = vunpack.c.h.b16 %v253
    %v1179 = vunpack.c.l.b16 %v254
    %v1180 = vunpack.c.h.b16 %v254
    %v1181 = vunpack.c.l.b16 %v255
    %v1182 = vunpack.c.l.b16 %v256
    %v1183 = vunpack.c.h.b16 %v256
    %v1184 = vunpack.c.l.b16 %v257
    %v1185 = vunpack.c.h.b16 %v257
    %v1186 = vunpack.c.l.b16 %v258
    %v1187 = vunpack.c.h.b16 %v258
    %v1188 = vunpack.c.l.b16 %v259
    %v1189 = vunpack.c.l.b16 %v260
    %v1190 = vunpack.c.h.b16 %v260
    %v1191 = vunpack.c.l.b16 %v261
    %v1192 = vunpack.c.h.b16 %v261
    %v1193 = vunpack.c.l.b16 %v262
    %v1194 = vunpack.c.h.b16 %v262
    %v1195 = vunpack.c.l.b16 %v263
    %v1196 = vunpack.c.l.b16 %v264
    %v1197 = vunpack.c.h.b16 %v264
    %v1198 = vunpack.c.l.b16 %v265
    %v1199 = vunpack.c.h.b16 %v265
    %v1200 = vunpack.c.l.b16 %v266
    %v1201 = vunpack.c.h.b16 %v266
    %v1202 = vunpack.c.l.b16 %v267
    %v1203 = vunpack.c.l.b16 %v268
    %v1204 = vunpack.c.h.b16 %v268
    %v1205 = vunpack.c.l.b16 %v269
    %v1206 = vunpack.c.h.b16 %v269
    %v1207 = vunpack.c.l.b16 %v270
    %v1208 = vunpack.c.h.b16 %v270
    %v1209 = vunpack.c.l.b16 %v271
    %v1210 = vunpack.c.l.b16 %v272
    %v1211 = vunpack.c.h.b16 %v272
    %v1212 = vunpack.c.l.b16 %v273
    %v1213 = vunpack.c.h.b16 %v273
    %v1214 = vunpack.c.l.b16 %v274
    %v1215 = vunpack.c.h.b16 %v274
    %v1216 = vunpack.c.l.b16 %v275
    %v1217 = vunpack.c.l.b16 %v276
    %v1218 = vunpack.c.h.b16 %v276
    %v1219 = vunpack.c.l.b16 %v277
    %v1220 = vunpack.c.h.b16 %v277
    %v1221 = vunpack.c.l.b16 %v278
    %v1222 = vunpack.c.h.b16 %v278
    %v1223 = vunpack.c.l.b16 %v279
    %v1224 = vunpack.c.l.b16 %v280
    %v1225 = vunpack.c.h.b16 %v280
    %v1226 = vunpack.c.l.b16 %v281
    %v1227 = vunpack.c.h.b16 %v281
    %v1228 = vunpack.c.l.b16 %v282
    %v1229 = vunpack.c.h.b16 %v282
    %v1230 = vunpack.c.l.b16 %v283
    %v1231 = vunpack.c.l.b16 %v284
    %v1232 = vunpack.c.h.b16 %v284
    %v1233 = vunpack.c.l.b16 %v285
    %v1234 = vunpack.c.h.b16 %v285
    %v1235 = vunpack.c.l.b16 %v286
    %v1236 = vunpack.c.h.b16 %v286
    %v1237 = vunpack.c.l.b16 %v287
    %v1238 = vunpack.c.l.b16 %v288
    %v1239 = vunpack.c.h.b16 %v288
    %v1240 = vunpack.c.l.b16 %v289
    %v1241 = vunpack.c.h.b16 %v289
    %v1242 = vunpack.c.l.b16 %v290
    %v1243 = vunpack.c.h.b16 %v290
    %v1244 = vunpack.c.l.b16 %v291
    %v1245 = vunpack.c.l.b16 %v292
    %v1246 = vunpack.c.h.b16 %v292
    %v1247 = vunpack.c.l.b16 %v293
    %v1248 = vunpack.c.h.b16 %v293
    %v1249 = vunpack.c.l.b16 %v294
    %v1250 = vunpack.c.h.b16 %v294
    %v1251 = vunpack.c.l.b16 %v295
    %v1252 = vunpack.c.l.b16 %v296
    %v1253 = vunpack.c.h.b16 %v296
    %v1254 = vunpack.c.l.b16 %v297
    %v1255 = vunpack.c.h.b16 %v297
    %v1256 = vunpack.c.l.b16 %v298
    %v1257 = vunpack.c.h.b16 %v298
    %v1258 = vunpack.c.l.b16 %v299
    %v1259 = vunpack.c.l.b16 %v300
    %v1260 = vunpack.c.h.b16 %v300
    %v1261 = vunpack.c.l.b16 %v301
    %v1262 = vunpack.c.h.b16 %v301
    %v1263 = vunpack.c.l.b16 %v302
    %v1264 = vunpack.c.h.b16 %v302
    %v1265 = vunpack.c.l.b16 %v303
    %v1266 = vunpack.c.l.b16 %v304
    %v1267 = vunpack.c.h.b16 %v304
    %v1268 = vunpack.c.l.b16 %v305
    %v1269 = vunpack.c.h.b16 %v305
    %v1270 = vunpack.c.l.b16 %v306
    %v1271 = vunpack.c.h.b16 %v306
    %v1272 = vunpack.c.l.b16 %v307
    %v1273 = vunpack.c.l.b16 %v308
    %v1274 = vunpack.c.h.b16 %v308
    %v1275 = vunpack.c.l.b16 %v309
    %v1276 = vunpack.c.h.b16 %v309
    %v1277 = vunpack.c.l.b16 %v310
    %v1278 = vunpack.c.h.b16 %v310
    %v1279 = vunpack.c.l.b16 %v311
    %v1280 = vunpack.c.l.b16 %v312
    %v1281 = vunpack.c.h.b16 %v312
    %v1282 = vunpack.c.l.b16 %v313
    %v1283 = vunpack.c.h.b16 %v313
    %v1284 = vunpack.c.l.b16 %v314
    %v1285 = vunpack.c.h.b16 %v314
    %v1286 = vunpack.c.l.b16 %v315
    %v1287 = vunpack.c.l.b16 %v316
    %v1288 = vunpack.c.h.b16 %v316
    %v1289 = vunpack.c.l.b16 %v317
    %v1290 = vunpack.c.h.b16 %v317
    %v1291 = vunpack.c.l.b16 %v318
    %v1292 = vunpack.c.h.b16 %v318
    %v1293 = vunpack.c.l.b16 %v319
    %v1294 = vunpack.c.l.b16 %v320
    %v1295 = vunpack.c.h.b16 %v320
    %v1296 = vunpack.c.l.b16 %v321
    %v1297 = vunpack.c.h.b16 %v321
    %v1298 = vunpack.c.l.b16 %v322
    %v1299 = vunpack.c.h.b16 %v322
    %v1300 = vunpack.c.l.b16 %v323
    %v1301 = vunpack.c.l.b16 %v324
    %v1302 = vunpack.c.h.b16 %v324
    %v1303 = vunpack.c.l.b16 %v325
    %v1304 = vunpack.c.h.b16 %v325
    %v1305 = vunpack.c.l.b16 %v326
    %v1306 = vunpack.c.h.b16 %v326
    %v1307 = vunpack.c.l.b16 %v327
    %v1308 = vunpack.c.l.b16 %v328
    %v1309 = vunpack.c.h.b16 %v328
    %v1310 = vunpack.c.l.b16 %v329
    %v1311 = vunpack.c.h.b16 %v329
    %v1312 = vunpack.c.l.b16 %v330
    %v1313 = vunpack.c.h.b16 %v330
    %v1314 = vunpack.c.l.b16 %v331
    %v1315 = vunpack.c.l.b16 %v332
    %v1316 = vunpack.c.h.b16 %v332
    %v1317 = vunpack.c.l.b16 %v333
    %v1318 = vunpack.c.h.b16 %v333
    %v1319 = vunpack.c.l.b16 %v334
    %v1320 = vunpack.c.h.b16 %v334
    %v1321 = vunpack.c.l.b16 %v335
    %v1322 = vunpack.c.l.b16 %v336
    %v1323 = vunpack.c.h.b16 %v336
    %v1324 = vunpack.c.l.b16 %v337
    %v1325 = vunpack.c.h.b16 %v337
    %v1326 = vunpack.c.l.b16 %v338
    %v1327 = vunpack.c.h.b16 %v338
    %v1328 = vunpack.c.l.b16 %v339
    %v1329 = vunpack.c.l.b16 %v340
    %v1330 = vunpack.c.h.b16 %v340
    %v1331 = vunpack.c.l.b16 %v341
    %v1332 = vunpack.c.h.b16 %v341
    %v1333 = vunpack.c.l.b16 %v342
    %v1334 = vunpack.c.h.b16 %v342
    %v1335 = vunpack.c.l.b16 %v343
    %v1336 = vunpack.c.l.b16 %v344
    %v1337 = vunpack.c.h.b16 %v344
    %v1338 = vunpack.c.l.b16 %v345
    %v1339 = vunpack.c.h.b16 %v345
    %v1340 = vunpack.c.l.b16 %v346
    %v1341 = vunpack.c.h.b16 %v346
    %v1342 = vunpack.c.l.b16 %v347
    %v1343 = vunpack.c.l.b16 %v348
    %v1344 = vunpack.c.h.b16 %v348
    %v1345 = vunpack.c.l.b16 %v349
    %v1346 = vunpack.c.h.b16 %v349
    %v1347 = vunpack.c.l.b16 %v350
    %v1348 = vunpack.c.h.b16 %v350
    %v1349 = vunpack.c.l.b16 %v351
    %v1350 = vunpack.c.l.b16 %v352
    %v1351 = vunpack.c.h.b16 %v352
    %v1352 = vunpack.c.l.b16 %v353
    %v1353 = vunpack.c.h.b16 %v353
    %v1354 = vunpack.c.l.b16 %v354
    %v1355 = vunpack.c.h.b16 %v354
    %v1356 = vunpack.c.l.b16 %v355
    %v1357 = vunpack.c.l.b16 %v356
    %v1358 = vunpack.c.h.b16 %v356
    %v1359 = vunpack.c.l.b16 %v357
    %v1360 = vunpack.c.h.b16 %v357
    %v1361 = vunpack.c.l.b16 %v358
    %v1362 = vunpack.c.h.b16 %v358
    %v1363 = vunpack.c.l.b16 %v359
    %v1364 = vunpack.c.l.b16 %v360
    %v1365 = vunpack.c.h.b16 %v360
    %v1366 = vunpack.c.l.b16 %v361
    %v1367 = vunpack.c.h.b16 %v361
    %v1368 = vunpack.c.l.b16 %v362
    %v1369 = vunpack.c.h.b16 %v362
    %v1370 = vunpack.c.l.b16 %v363
    %v1371 = vunpack.c.l.b16 %v364
    %v1372 = vunpack.c.h.b16 %v364
    %v1373 = vunpack.c.l.b16 %v365
    %v1374 = vunpack.c.h.b16 %v365
    %v1375 = vunpack.c.l.b16 %v366
    %v1376 = vunpack.c.h.b16 %v366
    %v1377 = vunpack.c.l.b16 %v367
    %v1378 = vunpack.c.l.b16 %v368
    %v1379 = vunpack.c.h.b16 %v368
    %v1380 = vunpack.c.l.b16 %v369
    %v1381 = vunpack.c.h.b16 %v369
    %v1382 = vunpack.c.l.b16 %v370
    %v1383 = vunpack.c.h.b16 %v370
    %v1384 = vunpack.c.l.b16 %v371
    %v1385 = vunpack.c.l.b16 %v372
    %v1386 = vunpack.c.h.b16 %v372
    %v1387 = vunpack.c.l.b16 %v373
    %v1388 = vunpack.c.h.b16 %v373
    %v1389 = vunpack.c.l.b16 %v374
    %v1390 = vunpack.c.h.b16 %v374
    %v1391 = vunpack.c.l.b16 %v375
    %v1392 = vunpack.c.l.b16 %v376
    %v1393 = vunpack.c.h.b16 %v376
    %v1394 = vunpack.c.l.b16 %v377
    %v1395 = vunpack.c.h.b16 %v377
    %v1396 = vunpack.c.l.b16 %v378
    %v1397 = vunpack.c.h.b16 %v378
    %v1398 = vunpack.c.l.b16 %v379
    %v1399 = vunpack.c.l.b16 %v380
    %v1400 = vunpack.c.h.b16 %v380
    %v1401 = vunpack.c.l.b16 %v381
    %v1402 = vunpack.c.h.b16 %v381
    %v1403 = vunpack.c.l.b16 %v382
    %v1404 = vunpack.c.h.b16 %v382
    %v1405 = vunpack.c.l.b16 %v383
    %v1406 = vunpack.c.l.b16 %v384
    %v1407 = vunpack.c.h.b16 %v384
    %v1408 = vunpack.c.l.b16 %v385
    %v1409 = vunpack.c.h.b16 %v385
    %v1410 = vunpack.c.l.b16 %v386
    %v1411 = vunpack.c.h.b16 %v386
    %v1412 = vunpack.c.l.b16 %v387
    %v1413 = vunpack.c.l.b16 %v388
    %v1414 = vunpack.c.h.b16 %v388
    %v1415 = vunpack.c.l.b16 %v389
    %v1416 = vunpack.c.h.b16 %v389
    %v1417 = vunpack.c.l.b16 %v390
    %v1418 = vunpack.c.h.b16 %v390
    %v1419 = vunpack.c.l.b16 %v391
    %v1420 = vunpack.c.l.b16 %v392
    %v1421 = vunpack.c.h.b16 %v392
    %v1422 = vunpack.c.l.b16 %v393
    %v1423 = vunpack.c.h.b16 %v393
    %v1424 = vunpack.c.l.b16 %v394
    %v1425 = vunpack.c.h.b16 %v394
    %v1426 = vunpack.c.l.b16 %v395
    %v1427 = vunpack.c.l.b16 %v396
    %v1428 = vunpack.c.h.b16 %v396
    %v1429 = vunpack.c.l.b16 %v397
    %v1430 = vunpack.c.h.b16 %v397
    %v1431 = vunpack.c.l.b16 %v398
    %v1432 = vunpack.c.h.b16 %v398
    %v1433 = vunpack.c.l.b16 %v399
    %v1434 = vunpack.c.l.b16 %v400
    %v1435 = vunpack.c.h.b16 %v400
    %v1436 = vunpack.c.l.b16 %v401
    %v1437 = vunpack.c.h.b16 %v401
    %v1438 = vunpack.c.l.b16 %v402
    %v1439 = vunpack.c.h.b16 %v402
    %v1440 = vunpack.c.l.b16 %v403
    %v1441 = vunpack.c.l.b16 %v404
    %v1442 = vunpack.c.h.b16 %v404
    %v1443 = vunpack.c.l.b16 %v405
    %v1444 = vunpack.c.h.b16 %v405
    %v1445 = vunpack.c.l.b16 %v406
    %v1446 = vunpack.c.h.b16 %v406
    %v1447 = vunpack.c.l.b16 %v407
    %v1448 = vunpack.c.l.b16 %v408
    %v1449 = vunpack.c.h.b16 %v408
    %v1450 = vunpack.c.l.b16 %v409
    %v1451 = vunpack.c.h.b16 %v409
    %v1452 = vunpack.c.l.b16 %v410
    %v1453 = vunpack.c.h.b16 %v410
    %v1454 = vunpack.c.l.b16 %v411
    %v1455 = vunpack.c.l.b16 %v412
    %v1456 = vunpack.c.h.b16 %v412
    %v1457 = vunpack.c.l.b16 %v413
    %v1458 = vunpack.c.h.b16 %v413
    %v1459 = vunpack.c.l.b16 %v414
    %v1460 = vunpack.c.h.b16 %v414
    %v1461 = vunpack.c.l.b16 %v415
    %v1462 = vunpack.c.l.b16 %v416
    %v1463 = vunpack.c.h.b16 %v416
    %v1464 = vunpack.c.l.b16 %v417
    %v1465 = vunpack.c.h.b16 %v417
    %v1466 = vunpack.c.l.b16 %v418
    %v1467 = vunpack.c.h.b16 %v418
    %v1468 = vunpack.c.l.b16 %v419
    %v1469 = vunpack.c.l.b16 %v420
    %v1470 = vunpack.c.h.b16 %v420
    %v1471 = vunpack.c.l.b16 %v421
    %v1472 = vunpack.c.h.b16 %v421
    %v1473 = vunpack.c.l.b16 %v422
    %v1474 = vunpack.c.h.b16 %v422
    %v1475 = vunpack.c.l.b16 %v423
    %v1476 = vunpack.c.l.b16 %v424
    %v1477 = vunpack.c.h.b16 %v424
    %v1478 = vunpack.c.l.b16 %v425
    %v1479 = vunpack.c.h.b16 %v425
    %v1480 = vunpack.c.l.b16 %v426
    %v1481 = vunpack.c.h.b16 %v426
    %v1482 = vunpack.c.l.b16 %v427
    %v1483 = vunpack.c.l.b16 %v428
    %v1484 = vunpack.c.h.b16 %v428
    %v1485 = vunpack.c.l.b16 %v429
    %v1486 = vunpack.c.h.b16 %v429
    %v1487 = vunpack.c.l.b16 %v430
    %v1488 = vunpack.c.h.b16 %v430
    %v1489 = vunpack.c.l.b16 %v431
    %v1490 = vunpack.c.l.b16 %v432
    %v1491 = vunpack.c.h.b16 %v432
    %v1492 = vunpack.c.l.b16 %v433
    %v1493 = vunpack.c.h.b16 %v433
    %v1494 = vunpack.c.l.b16 %v434
    %v1495 = vunpack.c.h.b16 %v434
    %v1496 = vunpack.c.l.b16 %v435
    %v1497 = vunpack.c.l.b16 %v436
    %v1498 = vunpack.c.h.b16 %v436
    %v1499 = vunpack.c.l.b16 %v437
    %v1500 = vunpack.c.h.b16 %v437
    %v1501 = vunpack.c.l.b16 %v438
    %v1502 = vunpack.c.h.b16 %v438
    %v1503 = vunpack.c.l.b16 %v439
    %v1504 = vunpack.c.l.b16 %v440
    %v1505 = vunpack.c.h.b16 %v440
    %v1506 = vunpack.c.l.b16 %v441
    %v1507 = vunpack.c.h.b16 %v441
    %v1508 = vunpack.c.l.b16 %v442
    %v1509 = vunpack.c.h.b16 %v442
    %v1510 = vunpack.c.l.b16 %v443
    %v1511 = vunpack.c.l.b16 %v444
    %v1512 = vunpack.c.h.b16 %v444
    %v1513 = vunpack.c.l.b16 %v445
    %v1514 = vunpack.c.h.b16 %v445
    %v1515 = vunpack.c.l.b16 %v446
    %v1516 = vunpack.c.h.b16 %v446
    %v1517 = vunpack.c.l.b16 %v447
    %v1518 = vunpack.c.l.b16 %v448
    %v1519 = vunpack.c.h.b16 %v448
    %v1520 = vunpack.c.l.b16 %v449
    %v1521 = vunpack.c.h.b16 %v449
    %v1522 = vunpack.c.l.b16 %v450
    %v1523 = vunpack.c.h.b16 %v450
    %v1524 = vunpack.c.l.b16 %v451
    %v1525 = vunpack.c.l.b16 %v452
    %v1526 = vunpack.c.h.b16 %v452
    %v1527 = vunpack.c.l.b16 %v453
    %v1528 = vunpack.c.h.b16 %v453
    %v1529 = vunpack.c.l.b16 %v454
    %v1530 = vunpack.c.h.b16 %v454
    %v1531 = vunpack.c.l.b16 %v455
    %v1532 = vunpack.c.l.b16 %v456
    %v1533 = vunpack.c.h.b16 %v456
    %v1534 = vunpack.c.l.b16 %v457
    %v1535 = vunpack.c.h.b16 %v457
    %v1536 = vunpack.c.l.b16 %v458
    %v1537 = vunpack.c.h.b16 %v458
    %v1538 = vunpack.c.l.b16 %v459
    %v1539 = vunpack.c.l.b16 %v460
    %v1540 = vunpack.c.h.b16 %v460
    %v1541 = vunpack.c.l.b16 %v461
    %v1542 = vunpack.c.h.b16 %v461
    %v1543 = vunpack.c.l.b16 %v462
    %v1544 = vunpack.c.h.b16 %v462
    %v1545 = vunpack.c.l.b16 %v463
    %v1546 = vunpack.c.l.b16 %v464
    %v1547 = vunpack.c.h.b16 %v464
    %v1548 = vunpack.c.l.b16 %v465
    %v1549 = vunpack.c.h.b16 %v465
    %v1550 = vunpack.c.l.b16 %v466
    %v1551 = vunpack.c.h.b16 %v466
    %v1552 = vunpack.c.l.b16 %v467
    %v1553 = vunpack.c.l.b16 %v468
    %v1554 = vunpack.c.h.b16 %v468
    %v1555 = vunpack.c.l.b16 %v469
    %v1556 = vunpack.c.h.b16 %v469
    %v1557 = vunpack.c.l.b16 %v470
    %v1558 = vunpack.c.h.b16 %v470
    %v1559 = vunpack.c.l.b16 %v471
    %v1560 = vunpack.c.l.b16 %v472
    %v1561 = vunpack.c.h.b16 %v472
    %v1562 = vunpack.c.l.b16 %v473
    %v1563 = vunpack.c.h.b16 %v473
    %v1564 = vunpack.c.l.b16 %v474
    %v1565 = vunpack.c.h.b16 %v474
    %v1566 = vunpack.c.l.b16 %v475
    %v1567 = vunpack.c.l.b16 %v476
    %v1568 = vunpack.c.h.b16 %v476
    %v1569 = vunpack.c.l.b16 %v477
    %v1570 = vunpack.c.h.b16 %v477
    %v1571 = vunpack.c.l.b16 %v478
    %v1572 = vunpack.c.h.b16 %v478
    %v1573 = vunpack.c.l.b16 %v479
    %v1574 = vunpack.c.l.b16 %v480
    %v1575 = vunpack.c.h.b16 %v480
    %v1576 = vunpack.c.l.b16 %v481
    %v1577 = vunpack.c.h.b16 %v481
    %v1578 = vunpack.c.l.b16 %v482
    %v1579 = vunpack.c.h.b16 %v482
    %v1580 = vunpack.c.l.b16 %v483
    %v1581 = vunpack.c.l.b16 %v484
    %v1582 = vunpack.c.h.b16 %v484
    %v1583 = vunpack.c.l.b16 %v485
    %v1584 = vunpack.c.h.b16 %v485
    %v1585 = vunpack.c.l.b16 %v486
    %v1586 = vunpack.c.h.b16 %v486
    %v1587 = vunpack.c.l.b16 %v487
    %v1588 = vunpack.c.l.b16 %v488
    %v1589 = vunpack.c.h.b16 %v488
    %v1590 = vunpack.c.l.b16 %v489
    %v1591 = vunpack.c.h.b16 %v489
    %v1592 = vunpack.c.l.b16 %v490
    %v1593 = vunpack.c.h.b16 %v490
    %v1594 = vunpack.c.l.b16 %v491
    %v1595 = vunpack.c.l.b16 %v492
    %v1596 = vunpack.c.h.b16 %v492
    %v1597 = vunpack.c.l.b16 %v493
    %v1598 = vunpack.c.h.b16 %v493
    %v1599 = vunpack.c.l.b16 %v494
    %v1600 = vunpack.c.h.b16 %v494
    %v1601 = vunpack.c.l.b16 %v495
    %v1602 = vunpack.c.l.b16 %v496
    %v1603 = vunpack.c.h.b16 %v496
    %v1604 = vunpack.c.l.b16 %v497
    %v1605 = vunpack.c.h.b16 %v497
    %v1606 = vunpack.c.l.b16 %v498
    %v1607 = vunpack.c.h.b16 %v498
    %v1608 = vunpack.c.l.b16 %v499
    %v1609 = vunpack.c.l.b16 %v500
    %v1610 = vunpack.c.h.b16 %v500
    %v1611 = vunpack.c.l.b16 %v501
    %v1612 = vunpack.c.h.b16 %v501
    %v1613 = vunpack.c.l.b16 %v502
    %v1614 = vunpack.c.h.b16 %v502
    %v1615 = vunpack.c.l.b16 %v503
    %v1616 = vunpack.c.l.b16 %v504
    %v1617 = vunpack.c.h.b16 %v504
    %v1618 = vunpack.c.l.b16 %v505
    %v1619 = vunpack.c.h.b16 %v505
    %v1620 = vunpack.c.l.b16 %v506
    %v1621 = vunpack.c.h.b16 %v506
    %v1622 = vunpack.c.l.b16 %v507
    %v1623 = vunpack.c.l.b16 %v508
    %v1624 = vunpack.c.h.b16 %v508
    %v1625 = vunpack.c.l.b16 %v509
    %v1626 = vunpack.c.h.b16 %v509
    %v1627 = vunpack.c.l.b16 %v510
    %v1628 = vunpack.c.h.b16 %v510
    %v1629 = vunpack.c.l.b16 %v511
    %v1630 = vpack.c.b16 %v951, %v944
    %v1631 = vpack.c.b16 %v952, %v945
    %v1632 = vpack.c.b16 %v953, %v946
    %v1633 = vpack.c.b16 %v954, %v947
    %v1634 = vpack.c.b16 %v955, %v948
    %v1635 = vpack.c.b16 %v956, %v949
    %v1636 = vpack.c.b16 %v957, %v950
    %v1637 = vpack.c.b16 %v965, %v958
    %v1638 = vpack.c.b16 %v966, %v959
    %v1639 = vpack.c.b16 %v967, %v960
    %v1640 = vpack.c.b16 %v968, %v961
    %v1641 = vpack.c.b16 %v969, %v962
    %v1642 = vpack.c.b16 %v970, %v963
    %v1643 = vpack.c.b16 %v971, %v964
    %v1644 = vpack.c.b16 %v979, %v972
    %v1645 = vpack.c.b16 %v980, %v973
    %v1646 = vpack.c.b16 %v981, %v974
    %v1647 = vpack.c.b16 %v982, %v975
    %v1648 = vpack.c.b16 %v983, %v976
    %v1649 = vpack.c.b16 %v984, %v977
    %v1650 = vpack.c.b16 %v985, %v978
    %v1651 = vpack.c.b16 %v993, %v986
    %v1652 = vpack.c.b16 %v994, %v987
    %v1653 = vpack.c.b16 %v995, %v988
    %v1654 = vpack.c.b16 %v996, %v989
    %v1655 = vpack.c.b16 %v997, %v990
    %v1656 = vpack.c.b16 %v998, %v991
    %v1657 = vpack.c.b16 %v999, %v992
    %v1658 = vpack.c.b16 %v1007, %v1000
    %v1659 = vpack.c.b16 %v1008, %v1001
    %v1660 = vpack.c.b16 %v1009, %v1002
    %v1661 = vpack.c.b16 %v1010, %v1003
    %v1662 = vpack.c.b16 %v1011, %v1004
    %v1663 = vpack.c.b16 %v1012, %v1005
    %v1664 = vpack.c.b16 %v1013, %v1006
    %v1665 = vpack.c.b16 %v1021, %v1014
    %v1666 = vpack.c.b16 %v1022, %v1015
    %v1667 = vpack.c.b16 %v1023, %v1016
    %v1668 = vpack.c.b16 %v1024, %v1017
    %v1669 = vpack.c.b16 %v1025, %v1018
    %v1670 = vpack.c.b16 %v1026, %v1019
    %v1671 = vpack.c.b16 %v1027, %v1020
    %v1672 = vpack.c.b16 %v1035, %v1028
    %v1673 = vpack.c.b16 %v1036, %v1029
    %v1674 = vpack.c.b16 %v1037, %v1030
    %v1675 = vpack.c.b16 %v1038, %v1031
    %v1676 = vpack.c.b16 %v1039, %v1032
    %v1677 = vpack.c.b16 %v1040, %v1033
    %v1678 = vpack.c.b16 %v1041, %v1034
    %v1679 = vpack.c.b16 %v1049, %v1042
    %v1680 = vpack.c.b16 %v1050, %v1043
    %v1681 = vpack.c.b16 %v1051, %v1044
    %v1682 = vpack.c.b16 %v1052, %v1045
    %v1683 = vpack.c.b16 %v1053, %v1046
    %v1684 = vpack.c.b16 %v1054, %v1047
    %v1685 = vpack.c.b16 %v1055, %v1048
    %v1686 = vpack.c.b16 %v1063, %v1056
    %v1687 = vpack.c.b16 %v1064, %v1057
    %v1688 = vpack.c.b16 %v1065, %v1058
    %v1689 = vpack.c.b16 %v1066, %v1059
    %v1690 = vpack.c.b16 %v1067, %v1060
    %v1691 = vpack.c.b16 %v1068, %v1061
    %v1692 = vpack.c.b16 %v1069, %v1062
    %v1693 = vpack.c.b16 %v1077, %v1070
    %v1694 = vpack.c.b16 %v1078, %v1071
    %v1695 = vpack.c.b16 %v1079, %v1072
    %v1696 = vpack.c.b16 %v1080, %v1073
    %v1697 = vpack.c.b16 %v1081, %v1074
    %v1698 = vpack.c.b16 %v1082, %v1075
    %v1699 = vpack.c.b16 %v1083, %v1076
    %v1700 = vpack.c.b16 %v1091, %v1084
    %v1701 = vpack.c.b16 %v1092, %v1085
    %v1702 = vpack.c.b16 %v1093, %v1086
    %v1703 = vpack.c.b16 %v1094, %v1087
    %v1704 = vpack.c.b16 %v1095, %v1088
    %v1705 = vpack.c.b16 %v1096, %v1089
    %v1706 = vpack.c.b16 %v1097, %v1090
    %v1707 = vpack.c.b16 %v1105, %v1098
    %v1708 = vpack.c.b16 %v1106, %v1099
    %v1709 = vpack.c.b16 %v1107, %v1100
    %v1710 = vpack.c.b16 %v1108, %v1101
    %v1711 = vpack.c.b16 %v1109, %v1102
    %v1712 = vpack.c.b16 %v1110, %v1103
    %v1713 = vpack.c.b16 %v1111, %v1104
    %v1714 = vpack.c.b16 %v1119, %v1112
    %v1715 = vpack.c.b16 %v1120, %v1113
    %v1716 = vpack.c.b16 %v1121, %v1114
    %v1717 = vpack.c.b16 %v1122, %v1115
    %v1718 = vpack.c.b16 %v1123, %v1116
    %v1719 = vpack.c.b16 %v1124, %v1117
    %v1720 = vpack.c.b16 %v1125, %v1118
    %v1721 = vpack.c.b16 %v1133, %v1126
    %v1722 = vpack.c.b16 %v1134, %v1127
    %v1723 = vpack.c.b16 %v1135, %v1128
    %v1724 = vpack.c.b16 %v1136, %v1129
    %v1725 = vpack.c.b16 %v1137, %v1130
    %v1726 = vpack.c.b16 %v1138, %v1131
    %v1727 = vpack.c.b16 %v1139, %v1132
    %v1728 = vpack.c.b16 %v1147, %v1140
    %v1729 = vpack.c.b16 %v1148, %v1141
    %v1730 = vpack.c.b16 %v1149, %v1142
    %v1731 = vpack.c.b16 %v1150, %v1143
    %v1732 = vpack.c.b16 %v1151, %v1144
    %v1733 = vpack.c.b16 %v1152, %v1145
    %v1734 = vpack.c.b16 %v1153, %v1146
    %v1735 = vpack.c.b16 %v1161, %v1154
    %v1736 = vpack.c.b16 %v1162, %v1155
    %v1737 = vpack.c.b16 %v1163, %v1156
    %v1738 = vpack.c.b16 %v1164, %v1157
    %v1739 = vpack.c.b16 %v1165, %v1158
    %v1740 = vpack.c.b16 %v1166, %v1159
    %v1741 = vpack.c.b16 %v1167, %v1160
    %v1742 = vpack.c.b16 %v1175, %v1168
    %v1743 = vpack.c.b16 %v1176, %v1169
    %v1744 = vpack.c.b16 %v1177, %v1170
    %v1745 = vpack.c.b16 %v1178, %v1171
    %v1746 = vpack.c.b16 %v1179, %v1172
    %v1747 = vpack.c.b16 %v1180, %v1173
    %v1748 = vpack.c.b16 %v1181, %v1174
    %v1749 = vpack.c.b16 %v1189, %v1182
    %v1750 = vpack.c.b16 %v1190, %v1183
    %v1751 = vpack.c.b16 %v1191, %v1184
    %v1752 = vpack.c.b16 %v1192, %v1185
    %v1753 = vpack.c.b16 %v1193, %v1186
    %v1754 = vpack.c.b16 %v1194, %v1187
    %v1755 = vpack.c.b16 %v1195, %v1188
    %v1756 = vpack.c.b16 %v1203, %v1196
    %v1757 = vpack.c.b16 %v1204, %v1197
    %v1758 = vpack.c.b16 %v1205, %v1198
    %v1759 = vpack.c.b16 %v1206, %v1199
    %v1760 = vpack.c.b16 %v1207, %v1200
    %v1761 = vpack.c.b16 %v1208, %v1201
    %v1762 = vpack.c.b16 %v1209, %v1202
    %v1763 = vpack.c.b16 %v1217, %v1210
    %v1764 = vpack.c.b16 %v1218, %v1211
    %v1765 = vpack.c.b16 %v1219, %v1212
    %v1766 = vpack.c.b16 %v1220, %v1213
    %v1767 = vpack.c.b16 %v1221, %v1214
    %v1768 = vpack.c.b16 %v1222, %v1215
    %v1769 = vpack.c.b16 %v1223, %v1216
    %v1770 = vpack.c.b16 %v1231, %v1224
    %v1771 = vpack.c.b16 %v1232, %v1225
    %v1772 = vpack.c.b16 %v1233, %v1226
    %v1773 = vpack.c.b16 %v1234, %v1227
    %v1774 = vpack.c.b16 %v1235, %v1228
    %v1775 = vpack.c.b16 %v1236, %v1229
    %v1776 = vpack.c.b16 %v1237, %v1230
    %v1777 = vpack.c.b16 %v1245, %v1238
    %v1778 = vpack.c.b16 %v1246, %v1239
    %v1779 = vpack.c.b16 %v1247, %v1240
    %v1780 = vpack.c.b16 %v1248, %v1241
    %v1781 = vpack.c.b16 %v1249, %v1242
    %v1782 = vpack.c.b16 %v1250, %v1243
    %v1783 = vpack.c.b16 %v1251, %v1244
    %v1784 = vpack.c.b16 %v1259, %v1252
    %v1785 = vpack.c.b16 %v1260, %v1253
    %v1786 = vpack.c.b16 %v1261, %v1254
    %v1787 = vpack.c.b16 %v1262, %v1255
    %v1788 = vpack.c.b16 %v1263, %v1256
    %v1789 = vpack.c.b16 %v1264, %v1257
    %v1790 = vpack.c.b16 %v1265, %v1258
    %v1791 = vpack.c.b16 %v1273, %v1266
    %v1792 = vpack.c.b16 %v1274, %v1267
    %v1793 = vpack.c.b16 %v1275, %v1268
    %v1794 = vpack.c.b16 %v1276, %v1269
    %v1795 = vpack.c.b16 %v1277, %v1270
    %v1796 = vpack.c.b16 %v1278, %v1271
    %v1797 = vpack.c.b16 %v1279, %v1272
    %v1798 = vpack.c.b16 %v1287, %v1280
    %v1799 = vpack.c.b16 %v1288, %v1281
    %v1800 = vpack.c.b16 %v1289, %v1282
    %v1801 = vpack.c.b16 %v1290, %v1283
    %v1802 = vpack.c.b16 %v1291, %v1284
    %v1803 = vpack.c.b16 %v1292, %v1285
    %v1804 = vpack.c.b16 %v1293, %v1286
    %v1805 = vpack.c.b16 %v1301, %v1294
    %v1806 = vpack.c.b16 %v1302, %v1295
    %v1807 = vpack.c.b16 %v1303, %v1296
    %v1808 = vpack.c.b16 %v1304, %v1297
    %v1809 = vpack.c.b16 %v1305, %v1298
    %v1810 = vpack.c.b16 %v1306, %v1299
    %v1811 = vpack.c.b16 %v1307, %v1300
    %v1812 = vpack.c.b16 %v1315, %v1308
    %v1813 = vpack.c.b16 %v1316, %v1309
    %v1814 = vpack.c.b16 %v1317, %v1310
    %v1815 = vpack.c.b16 %v1318, %v1311
    %v1816 = vpack.c.b16 %v1319, %v1312
    %v1817 = vpack.c.b16 %v1320, %v1313
    %v1818 = vpack.c.b16 %v1321, %v1314
    %v1819 = vpack.c.b16 %v1329, %v1322
    %v1820 = vpack.c.b16 %v1330, %v1323
    %v1821 = vpack.c.b16 %v1331, %v1324
    %v1822 = vpack.c.b16 %v1332, %v1325
    %v1823 = vpack.c.b16 %v1333, %v1326
    %v1824 = vpack.c.b16 %v1334, %v1327
    %v1825 = vpack.c.b16 %v1335, %v1328
    %v1826 = vpack.c.b16 %v1343, %v1336
    %v1827 = vpack.c.b16 %v1344, %v1337
    %v1828 = vpack.c.b16 %v1345, %v1338
    %v1829 = vpack.c.b16 %v1346, %v1339
    %v1830 = vpack.c.b16 %v1347, %v1340
    %v1831 = vpack.c.b16 %v1348, %v1341
    %v1832 = vpack.c.b16 %v1349, %v1342
    %v1833 = vpack.c.b16 %v1357, %v1350
    %v1834 = vpack.c.b16 %v1358, %v1351
    %v1835 = vpack.c.b16 %v1359, %v1352
    %v1836 = vpack.c.b16 %v1360, %v1353
    %v1837 = vpack.c.b16 %v1361, %v1354
    %v1838 = vpack.c.b16 %v1362, %v1355
    %v1839 = vpack.c.b16 %v1363, %v1356
    %v1840 = vpack.c.b16 %v1371, %v1364
    %v1841 = vpack.c.b16 %v1372, %v1365
    %v1842 = vpack.c.b16 %v1373, %v1366
    %v1843 = vpack.c.b16 %v1374, %v1367
    %v1844 = vpack.c.b16 %v1375, %v1368
    %v1845 = vpack.c.b16 %v1376, %v1369
    %v1846 = vpack.c.b16 %v1377, %v1370
    %v1847 = vpack.c.b16 %v1385, %v1378
    %v1848 = vpack.c.b16 %v1386, %v1379
    %v1849 = vpack.c.b16 %v1387, %v1380
    %v1850 = vpack.c.b16 %v1388, %v1381
    %v1851 = vpack.c.b16 %v1389, %v1382
    %v1852 = vpack.c.b16 %v1390, %v1383
    %v1853 = vpack.c.b16 %v1391, %v1384
    %v1854 = vpack.c.b16 %v1399, %v1392
    %v1855 = vpack.c.b16 %v1400, %v1393
    %v1856 = vpack.c.b16 %v1401, %v1394
    %v1857 = vpack.c.b16 %v1402, %v1395
    %v1858 = vpack.c.b16 %v1403, %v1396
    %v1859 = vpack.c.b16 %v1404, %v1397
    %v1860 = vpack.c.b16 %v1405, %v1398
    %v1861 = vpack.c.b16 %v1413, %v1406
    %v1862 = vpack.c.b16 %v1414, %v1407
    %v1863 = vpack.c.b16 %v1415, %v1408
    %v1864 = vpack.c.b16 %v1416, %v1409
    %v1865 = vpack.c.b16 %v1417, %v1410
    %v1866 = vpack.c.b16 %v1418, %v1411
    %v1867 = vpack.c.b16 %v1419, %v1412
    %v1868 = vpack.c.b16 %v1427, %v1420
    %v1869 = vpack.c.b16 %v1428, %v1421
    %v1870 = vpack.c.b16 %v1429, %v1422
    %v1871 = vpack.c.b16 %v1430, %v1423
    %v1872 = vpack.c.b16 %v1431, %v1424
    %v1873 = vpack.c.b16 %v1432, %v1425
    %v1874 = vpack.c.b16 %v1433, %v1426
    %v1875 = vpack.c.b16 %v1441, %v1434
    %v1876 = vpack.c.b16 %v1442, %v1435
    %v1877 = vpack.c.b16 %v1443, %v1436
    %v1878 = vpack.c.b16 %v1444, %v1437
    %v1879 = vpack.c.b16 %v1445, %v1438
    %v1880 = vpack.c.b16 %v1446, %v1439
    %v1881 = vpack.c.b16 %v1447, %v1440
    %v1882 = vpack.c.b16 %v1455, %v1448
    %v1883 = vpack.c.b16 %v1456, %v1449
    %v1884 = vpack.c.b16 %v1457, %v1450
    %v1885 = vpack.c.b16 %v1458, %v1451
    %v1886 = vpack.c.b16 %v1459, %v1452
    %v1887 = vpack.c.b16 %v1460, %v1453
    %v1888 = vpack.c.b16 %v1461, %v1454
    %v1889 = vpack.c.b16 %v1469, %v1462
    %v1890 = vpack.c.b16 %v1470, %v1463
    %v1891 = vpack.c.b16 %v1471, %v1464
    %v1892 = vpack.c.b16 %v1472, %v1465
    %v1893 = vpack.c.b16 %v1473, %v1466
    %v1894 = vpack.c.b16 %v1474, %v1467
    %v1895 = vpack.c.b16 %v1475, %v1468
    %v1896 = vpack.c.b16 %v1483, %v1476
    %v1897 = vpack.c.b16 %v1484, %v1477
    %v1898 = vpack.c.b16 %v1485, %v1478
    %v1899 = vpack.c.b16 %v1486, %v1479
    %v1900 = vpack.c.b16 %v1487, %v1480
    %v1901 = vpack.c.b16 %v1488, %v1481
    %v1902 = vpack.c.b16 %v1489, %v1482
    %v1903 = vpack.c.b16 %v1497, %v1490
    %v1904 = vpack.c.b16 %v1498, %v1491
    %v1905 = vpack.c.b16 %v1499, %v1492
    %v1906 = vpack.c.b16 %v1500, %v1493
    %v1907 = vpack.c.b16 %v1501, %v1494
    %v1908 = vpack.c.b16 %v1502, %v1495
    %v1909 = vpack.c.b16 %v1503, %v1496
    %v1910 = vpack.c.b16 %v1511, %v1504
    %v1911 = vpack.c.b16 %v1512, %v1505
    %v1912 = vpack.c.b16 %v1513, %v1506
    %v1913 = vpack.c.b16 %v1514, %v1507
    %v1914 = vpack.c.b16 %v1515, %v1508
    %v1915 = vpack.c.b16 %v1516, %v1509
    %v1916 = vpack.c.b16 %v1517, %v1510
    %v1917 = vpack.c.b16 %v1525, %v1518
    %v1918 = vpack.c.b16 %v1526, %v1519
    %v1919 = vpack.c.b16 %v1527, %v1520
    %v1920 = vpack.c.b16 %v1528, %v1521
    %v1921 = vpack.c.b16 %v1529, %v1522
    %v1922 = vpack.c.b16 %v1530, %v1523
    %v1923 = vpack.c.b16 %v1531, %v1524
    %v1924 = vpack.c.b16 %v1539, %v1532
    %v1925 = vpack.c.b16 %v1540, %v1533
    %v1926 = vpack.c.b16 %v1541, %v1534
    %v1927 = vpack.c.b16 %v1542, %v1535
    %v1928 = vpack.c.b16 %v1543, %v1536
    %v1929 = vpack.c.b16 %v1544, %v1537
    %v1930 = vpack.c.b16 %v1545, %v1538
    %v1931 = vpack.c.b16 %v1553, %v1546
    %v1932 = vpack.c.b16 %v1554, %v1547
    %v1933 = vpack.c.b16 %v1555, %v1548
    %v1934 = vpack.c.b16 %v1556, %v1549
    %v1935 = vpack.c.b16 %v1557, %v1550
    %v1936 = vpack.c.b16 %v1558, %v1551
    %v1937 = vpack.c.b16 %v1559, %v1552
    %v1938 = vpack.c.b16 %v1567, %v1560
    %v1939 = vpack.c.b16 %v1568, %v1561
    %v1940 = vpack.c.b16 %v1569, %v1562
    %v1941 = vpack.c.b16 %v1570, %v1563
    %v1942 = vpack.c.b16 %v1571, %v1564
    %v1943 = vpack.c.b16 %v1572, %v1565
    %v1944 = vpack.c.b16 %v1573, %v1566
    %v1945 = vpack.c.b16 %v1581, %v1574
    %v1946 = vpack.c.b16 %v1582, %v1575
    %v1947 = vpack.c.b16 %v1583, %v1576
    %v1948 = vpack.c.b16 %v1584, %v1577
    %v1949 = vpack.c.b16 %v1585, %v1578
    %v1950 = vpack.c.b16 %v1586, %v1579
    %v1951 = vpack.c.b16 %v1587, %v1580
    %v1952 = vpack.c.b16 %v1595, %v1588
    %v1953 = vpack.c.b16 %v1596, %v1589
    %v1954 = vpack.c.b16 %v1597, %v1590
    %v1955 = vpack.c.b16 %v1598, %v1591
    %v1956 = vpack.c.b16 %v1599, %v1592
    %v1957 = vpack.c.b16 %v1600, %v1593
    %v1958 = vpack.c.b16 %v1601, %v1594
    %v1959 = vpack.c.b16 %v1609, %v1602
    %v1960 = vpack.c.b16 %v1610, %v1603
    %v1961 = vpack.c.b16 %v1611, %v1604
    %v1962 = vpack.c.b16 %v1612, %v1605
    %v1963 = vpack.c.b16 %v1613, %v1606
    %v1964 = vpack.c.b16 %v1614, %v1607
    %v1965 = vpack.c.b16 %v1615, %v1608
    %v1966 = vpack.c.b16 %v1623, %v1616
    %v1967 = vpack.c.b16 %v1624, %v1617
    %v1968 = vpack.c.b16 %v1625, %v1618
    %v1969 = vpack.c.b16 %v1626, %v1619
    %v1970 = vpack.c.b16 %v1627, %v1620
    %v1971 = vpack.c.b16 %v1628, %v1621
    %v1972 = vpack.c.b16 %v1629, %v1622
    %vm2316 = vcmask 130048
    %v2318 = vsel %vm2316, %v545, 0
    %2320 = vmatpush.bf16.msra.mxu0 %v1679
    %2321 = vmatpush.bf16.msra.mxu0 %v1672
    %2322 = vmatpush.bf16.msra.mxu0 %v1665
    %2323 = vmatpush.bf16.msra.mxu0 %v1658
    %2324 = vmatpush.bf16.msra.mxu0 %v1651
    %2325 = vmatpush.bf16.msra.mxu0 %v1644
    %2326 = vmatpush.bf16.msra.mxu0 %v1637
    %2327 = vmatpush.bf16.msra.mxu0 %v1630
    %2328 = vmatmul.bf16.gmra.mxu0 %v539
    %v2329 = vpop.f32.mrf.mxu0
    %v2330 = vadd.f32 %v514, %v2329
    %v2331 = vpop.f32.mrf.mxu0
    %2332 = vdwg.mxu0
    %2333 = vmatpush.bf16.msra.mxu0 %v1735
    %2334 = vmatpush.bf16.msra.mxu0 %v1728
    %2335 = vmatpush.bf16.msra.mxu0 %v1721
    %2336 = vmatpush.bf16.msra.mxu0 %v1714
    %2337 = vmatpush.bf16.msra.mxu0 %v1707
    %2338 = vmatpush.bf16.msra.mxu0 %v1700
    %2339 = vmatpush.bf16.msra.mxu0 %v1693
    %2340 = vmatpush.bf16.msra.mxu0 %v1686
    %2341 = vmatmul.bf16.gmra.mxu0 %v540
    %v2342 = vpop.f32.mrf.mxu0
    %v2343 = vadd.f32 %v2330, %v2342
    %v2344 = vpop.f32.mrf.mxu0
    %2345 = vdwg.mxu0
    %2346 = vmatpush.bf16.msra.mxu0 %v1791
    %2347 = vmatpush.bf16.msra.mxu0 %v1784
    %2348 = vmatpush.bf16.msra.mxu0 %v1777
    %2349 = vmatpush.bf16.msra.mxu0 %v1770
    %2350 = vmatpush.bf16.msra.mxu0 %v1763
    %2351 = vmatpush.bf16.msra.mxu0 %v1756
    %2352 = vmatpush.bf16.msra.mxu0 %v1749
    %2353 = vmatpush.bf16.msra.mxu0 %v1742
    %2354 = vmatmul.bf16.gmra.mxu0 %v541
    %v2355 = vpop.f32.mrf.mxu0
    %v2356 = vadd.f32 %v2343, %v2355
    %v2357 = vpop.f32.mrf.mxu0
    %2358 = vdwg.mxu0
    %2359 = vmatpush.bf16.msra.mxu0 %v1847
    %2360 = vmatpush.bf16.msra.mxu0 %v1840
    %2361 = vmatpush.bf16.msra.mxu0 %v1833
    %2362 = vmatpush.bf16.msra.mxu0 %v1826
    %2363 = vmatpush.bf16.msra.mxu0 %v1819
    %2364 = vmatpush.bf16.msra.mxu0 %v1812
    %2365 = vmatpush.bf16.msra.mxu0 %v1805
    %2366 = vmatpush.bf16.msra.mxu0 %v1798
    %2367 = vmatmul.bf16.gmra.mxu0 %v542
    %v2368 = vpop.f32.mrf.mxu0
    %v2369 = vadd.f32 %v2356, %v2368
    %v2370 = vpop.f32.mrf.mxu0
    %2371 = vdwg.mxu0
    %2372 = vmatpush.bf16.msra.mxu0 %v1903
    %2373 = vmatpush.bf16.msra.mxu0 %v1896
    %2374 = vmatpush.bf16.msra.mxu0 %v1889
    %2375 = vmatpush.bf16.msra.mxu0 %v1882
    %2376 = vmatpush.bf16.msra.mxu0 %v1875
    %2377 = vmatpush.bf16.msra.mxu0 %v1868
    %2378 = vmatpush.bf16.msra.mxu0 %v1861
    %2379 = vmatpush.bf16.msra.mxu0 %v1854
    %2380 = vmatmul.bf16.gmra.mxu0 %v543
    %v2381 = vpop.f32.mrf.mxu0
    %v2382 = vadd.f32 %v2369, %v2381
    %v2383 = vpop.f32.mrf.mxu0
    %2384 = vdwg.mxu0
    %2385 = vmatpush.bf16.msra.mxu0 %v1959
    %2386 = vmatpush.bf16.msra.mxu0 %v1952
    %2387 = vmatpush.bf16.msra.mxu0 %v1945
    %2388 = vmatpush.bf16.msra.mxu0 %v1938
    %2389 = vmatpush.bf16.msra.mxu0 %v1931
    %2390 = vmatpush.bf16.msra.mxu0 %v1924
    %2391 = vmatpush.bf16.msra.mxu0 %v1917
    %2392 = vmatpush.bf16.msra.mxu0 %v1910
    %2393 = vmatmul.bf16.gmra.mxu0 %v544
    %v2394 = vpop.f32.mrf.mxu0
    %v2395 = vadd.f32 %v2382, %v2394
    %v2396 = vpop.f32.mrf.mxu0
    %2397 = vdwg.mxu0
    %2398 = vmatpush.bf16.msra.mxu0 0
    %2399 = vmatpush.bf16.msra.mxu0 0
    %2400 = vmatpush.bf16.msra.mxu0 0
    %2401 = vmatpush.bf16.msra.mxu0 0
    %2402 = vmatpush.bf16.msra.mxu0 0
    %2403 = vmatpush.bf16.msra.mxu0 0
    %2404 = vmatpush.bf16.msra.mxu0 0
    %2405 = vmatpush.bf16.msra.mxu0 %v1966
    %2406 = vmatmul.bf16.gmra.mxu0 %v2318
    %v2407 = vpop.f32.mrf.mxu0
    %v2408 = vadd.f32 %v2395, %v2407
    %v2409 = vpop.f32.mrf.mxu0
    %2410 = vdwg.mxu0
    %2411 = vmatpush.bf16.msra.mxu0 %v1680
    %2412 = vmatpush.bf16.msra.mxu0 %v1673
    %2413 = vmatpush.bf16.msra.mxu0 %v1666
    %2414 = vmatpush.bf16.msra.mxu0 %v1659
    %2415 = vmatpush.bf16.msra.mxu0 %v1652
    %2416 = vmatpush.bf16.msra.mxu0 %v1645
    %2417 = vmatpush.bf16.msra.mxu0 %v1638
    %2418 = vmatpush.bf16.msra.mxu0 %v1631
    %2419 = vmatmul.bf16.gmra.mxu0 %v539
    %v2420 = vpop.f32.mrf.mxu0
    %v2421 = vadd.f32 %v515, %v2420
    %v2422 = vpop.f32.mrf.mxu0
    %2423 = vdwg.mxu0
    %2424 = vmatpush.bf16.msra.mxu0 %v1736
    %2425 = vmatpush.bf16.msra.mxu0 %v1729
    %2426 = vmatpush.bf16.msra.mxu0 %v1722
    %2427 = vmatpush.bf16.msra.mxu0 %v1715
    %2428 = vmatpush.bf16.msra.mxu0 %v1708
    %2429 = vmatpush.bf16.msra.mxu0 %v1701
    %2430 = vmatpush.bf16.msra.mxu0 %v1694
    %2431 = vmatpush.bf16.msra.mxu0 %v1687
    %2432 = vmatmul.bf16.gmra.mxu0 %v540
    %v2433 = vpop.f32.mrf.mxu0
    %v2434 = vadd.f32 %v2421, %v2433
    %v2435 = vpop.f32.mrf.mxu0
    %2436 = vdwg.mxu0
    %2437 = vmatpush.bf16.msra.mxu0 %v1792
    %2438 = vmatpush.bf16.msra.mxu0 %v1785
    %2439 = vmatpush.bf16.msra.mxu0 %v1778
    %2440 = vmatpush.bf16.msra.mxu0 %v1771
    %2441 = vmatpush.bf16.msra.mxu0 %v1764
    %2442 = vmatpush.bf16.msra.mxu0 %v1757
    %2443 = vmatpush.bf16.msra.mxu0 %v1750
    %2444 = vmatpush.bf16.msra.mxu0 %v1743
    %2445 = vmatmul.bf16.gmra.mxu0 %v541
    %v2446 = vpop.f32.mrf.mxu0
    %v2447 = vadd.f32 %v2434, %v2446
    %v2448 = vpop.f32.mrf.mxu0
    %2449 = vdwg.mxu0
    %2450 = vmatpush.bf16.msra.mxu0 %v1848
    %2451 = vmatpush.bf16.msra.mxu0 %v1841
    %2452 = vmatpush.bf16.msra.mxu0 %v1834
    %2453 = vmatpush.bf16.msra.mxu0 %v1827
    %2454 = vmatpush.bf16.msra.mxu0 %v1820
    %2455 = vmatpush.bf16.msra.mxu0 %v1813
    %2456 = vmatpush.bf16.msra.mxu0 %v1806
    %2457 = vmatpush.bf16.msra.mxu0 %v1799
    %2458 = vmatmul.bf16.gmra.mxu0 %v542
    %v2459 = vpop.f32.mrf.mxu0
    %v2460 = vadd.f32 %v2447, %v2459
    %v2461 = vpop.f32.mrf.mxu0
    %2462 = vdwg.mxu0
    %2463 = vmatpush.bf16.msra.mxu0 %v1904
    %2464 = vmatpush.bf16.msra.mxu0 %v1897
    %2465 = vmatpush.bf16.msra.mxu0 %v1890
    %2466 = vmatpush.bf16.msra.mxu0 %v1883
    %2467 = vmatpush.bf16.msra.mxu0 %v1876
    %2468 = vmatpush.bf16.msra.mxu0 %v1869
    %2469 = vmatpush.bf16.msra.mxu0 %v1862
    %2470 = vmatpush.bf16.msra.mxu0 %v1855
    %2471 = vmatmul.bf16.gmra.mxu0 %v543
    %v2472 = vpop.f32.mrf.mxu0
    %v2473 = vadd.f32 %v2460, %v2472
    %v2474 = vpop.f32.mrf.mxu0
    %2475 = vdwg.mxu0
    %2476 = vmatpush.bf16.msra.mxu0 %v1960
    %2477 = vmatpush.bf16.msra.mxu0 %v1953
    %2478 = vmatpush.bf16.msra.mxu0 %v1946
    %2479 = vmatpush.bf16.msra.mxu0 %v1939
    %2480 = vmatpush.bf16.msra.mxu0 %v1932
    %2481 = vmatpush.bf16.msra.mxu0 %v1925
    %2482 = vmatpush.bf16.msra.mxu0 %v1918
    %2483 = vmatpush.bf16.msra.mxu0 %v1911
    %2484 = vmatmul.bf16.gmra.mxu0 %v544
    %v2485 = vpop.f32.mrf.mxu0
    %v2486 = vadd.f32 %v2473, %v2485
    %v2487 = vpop.f32.mrf.mxu0
    %2488 = vdwg.mxu0
    %2489 = vmatpush.bf16.msra.mxu0 0
    %2490 = vmatpush.bf16.msra.mxu0 0
    %2491 = vmatpush.bf16.msra.mxu0 0
    %2492 = vmatpush.bf16.msra.mxu0 0
    %2493 = vmatpush.bf16.msra.mxu0 0
    %2494 = vmatpush.bf16.msra.mxu0 0
    %2495 = vmatpush.bf16.msra.mxu0 0
    %2496 = vmatpush.bf16.msra.mxu0 %v1967
    %2497 = vmatmul.bf16.gmra.mxu0 %v2318
    %v2498 = vpop.f32.mrf.mxu0
    %v2499 = vadd.f32 %v2486, %v2498
    %v2500 = vpop.f32.mrf.mxu0
    %2501 = vdwg.mxu0
    %2502 = vmatpush.bf16.msra.mxu0 %v1681
    %2503 = vmatpush.bf16.msra.mxu0 %v1674
    %2504 = vmatpush.bf16.msra.mxu0 %v1667
    %2505 = vmatpush.bf16.msra.mxu0 %v1660
    %2506 = vmatpush.bf16.msra.mxu0 %v1653
    %2507 = vmatpush.bf16.msra.mxu0 %v1646
    %2508 = vmatpush.bf16.msra.mxu0 %v1639
    %2509 = vmatpush.bf16.msra.mxu0 %v1632
    %2510 = vmatmul.bf16.gmra.mxu0 %v539
    %v2511 = vpop.f32.mrf.mxu0
    %v2512 = vadd.f32 %v516, %v2511
    %v2513 = vpop.f32.mrf.mxu0
    %2514 = vdwg.mxu0
    %2515 = vmatpush.bf16.msra.mxu0 %v1737
    %2516 = vmatpush.bf16.msra.mxu0 %v1730
    %2517 = vmatpush.bf16.msra.mxu0 %v1723
    %2518 = vmatpush.bf16.msra.mxu0 %v1716
    %2519 = vmatpush.bf16.msra.mxu0 %v1709
    %2520 = vmatpush.bf16.msra.mxu0 %v1702
    %2521 = vmatpush.bf16.msra.mxu0 %v1695
    %2522 = vmatpush.bf16.msra.mxu0 %v1688
    %2523 = vmatmul.bf16.gmra.mxu0 %v540
    %v2524 = vpop.f32.mrf.mxu0
    %v2525 = vadd.f32 %v2512, %v2524
    %v2526 = vpop.f32.mrf.mxu0
    %2527 = vdwg.mxu0
    %2528 = vmatpush.bf16.msra.mxu0 %v1793
    %2529 = vmatpush.bf16.msra.mxu0 %v1786
    %2530 = vmatpush.bf16.msra.mxu0 %v1779
    %2531 = vmatpush.bf16.msra.mxu0 %v1772
    %2532 = vmatpush.bf16.msra.mxu0 %v1765
    %2533 = vmatpush.bf16.msra.mxu0 %v1758
    %2534 = vmatpush.bf16.msra.mxu0 %v1751
    %2535 = vmatpush.bf16.msra.mxu0 %v1744
    %2536 = vmatmul.bf16.gmra.mxu0 %v541
    %v2537 = vpop.f32.mrf.mxu0
    %v2538 = vadd.f32 %v2525, %v2537
    %v2539 = vpop.f32.mrf.mxu0
    %2540 = vdwg.mxu0
    %2541 = vmatpush.bf16.msra.mxu0 %v1849
    %2542 = vmatpush.bf16.msra.mxu0 %v1842
    %2543 = vmatpush.bf16.msra.mxu0 %v1835
    %2544 = vmatpush.bf16.msra.mxu0 %v1828
    %2545 = vmatpush.bf16.msra.mxu0 %v1821
    %2546 = vmatpush.bf16.msra.mxu0 %v1814
    %2547 = vmatpush.bf16.msra.mxu0 %v1807
    %2548 = vmatpush.bf16.msra.mxu0 %v1800
    %2549 = vmatmul.bf16.gmra.mxu0 %v542
    %v2550 = vpop.f32.mrf.mxu0
    %v2551 = vadd.f32 %v2538, %v2550
    %v2552 = vpop.f32.mrf.mxu0
    %2553 = vdwg.mxu0
    %2554 = vmatpush.bf16.msra.mxu0 %v1905
    %2555 = vmatpush.bf16.msra.mxu0 %v1898
    %2556 = vmatpush.bf16.msra.mxu0 %v1891
    %2557 = vmatpush.bf16.msra.mxu0 %v1884
    %2558 = vmatpush.bf16.msra.mxu0 %v1877
    %2559 = vmatpush.bf16.msra.mxu0 %v1870
    %2560 = vmatpush.bf16.msra.mxu0 %v1863
    %2561 = vmatpush.bf16.msra.mxu0 %v1856
    %2562 = vmatmul.bf16.gmra.mxu0 %v543
    %v2563 = vpop.f32.mrf.mxu0
    %v2564 = vadd.f32 %v2551, %v2563
    %v2565 = vpop.f32.mrf.mxu0
    %2566 = vdwg.mxu0
    %2567 = vmatpush.bf16.msra.mxu0 %v1961
    %2568 = vmatpush.bf16.msra.mxu0 %v1954
    %2569 = vmatpush.bf16.msra.mxu0 %v1947
    %2570 = vmatpush.bf16.msra.mxu0 %v1940
    %2571 = vmatpush.bf16.msra.mxu0 %v1933
    %2572 = vmatpush.bf16.msra.mxu0 %v1926
    %2573 = vmatpush.bf16.msra.mxu0 %v1919
    %2574 = vmatpush.bf16.msra.mxu0 %v1912
    %2575 = vmatmul.bf16.gmra.mxu0 %v544
    %v2576 = vpop.f32.mrf.mxu0
    %v2577 = vadd.f32 %v2564, %v2576
    %v2578 = vpop.f32.mrf.mxu0
    %2579 = vdwg.mxu0
    %2580 = vmatpush.bf16.msra.mxu0 0
    %2581 = vmatpush.bf16.msra.mxu0 0
    %2582 = vmatpush.bf16.msra.mxu0 0
    %2583 = vmatpush.bf16.msra.mxu0 0
    %2584 = vmatpush.bf16.msra.mxu0 0
    %2585 = vmatpush.bf16.msra.mxu0 0
    %2586 = vmatpush.bf16.msra.mxu0 0
    %2587 = vmatpush.bf16.msra.mxu0 %v1968
    %2588 = vmatmul.bf16.gmra.mxu0 %v2318
    %v2589 = vpop.f32.mrf.mxu0
    %v2590 = vadd.f32 %v2577, %v2589
    %v2591 = vpop.f32.mrf.mxu0
    %2592 = vdwg.mxu0
    %2593 = vmatpush.bf16.msra.mxu0 %v1682
    %2594 = vmatpush.bf16.msra.mxu0 %v1675
    %2595 = vmatpush.bf16.msra.mxu0 %v1668
    %2596 = vmatpush.bf16.msra.mxu0 %v1661
    %2597 = vmatpush.bf16.msra.mxu0 %v1654
    %2598 = vmatpush.bf16.msra.mxu0 %v1647
    %2599 = vmatpush.bf16.msra.mxu0 %v1640
    %2600 = vmatpush.bf16.msra.mxu0 %v1633
    %2601 = vmatmul.bf16.gmra.mxu0 %v539
    %v2602 = vpop.f32.mrf.mxu0
    %v2603 = vadd.f32 %v517, %v2602
    %v2604 = vpop.f32.mrf.mxu0
    %2605 = vdwg.mxu0
    %2606 = vmatpush.bf16.msra.mxu0 %v1738
    %2607 = vmatpush.bf16.msra.mxu0 %v1731
    %2608 = vmatpush.bf16.msra.mxu0 %v1724
    %2609 = vmatpush.bf16.msra.mxu0 %v1717
    %2610 = vmatpush.bf16.msra.mxu0 %v1710
    %2611 = vmatpush.bf16.msra.mxu0 %v1703
    %2612 = vmatpush.bf16.msra.mxu0 %v1696
    %2613 = vmatpush.bf16.msra.mxu0 %v1689
    %2614 = vmatmul.bf16.gmra.mxu0 %v540
    %v2615 = vpop.f32.mrf.mxu0
    %v2616 = vadd.f32 %v2603, %v2615
    %v2617 = vpop.f32.mrf.mxu0
    %2618 = vdwg.mxu0
    %2619 = vmatpush.bf16.msra.mxu0 %v1794
    %2620 = vmatpush.bf16.msra.mxu0 %v1787
    %2621 = vmatpush.bf16.msra.mxu0 %v1780
    %2622 = vmatpush.bf16.msra.mxu0 %v1773
    %2623 = vmatpush.bf16.msra.mxu0 %v1766
    %2624 = vmatpush.bf16.msra.mxu0 %v1759
    %2625 = vmatpush.bf16.msra.mxu0 %v1752
    %2626 = vmatpush.bf16.msra.mxu0 %v1745
    %2627 = vmatmul.bf16.gmra.mxu0 %v541
    %v2628 = vpop.f32.mrf.mxu0
    %v2629 = vadd.f32 %v2616, %v2628
    %v2630 = vpop.f32.mrf.mxu0
    %2631 = vdwg.mxu0
    %2632 = vmatpush.bf16.msra.mxu0 %v1850
    %2633 = vmatpush.bf16.msra.mxu0 %v1843
    %2634 = vmatpush.bf16.msra.mxu0 %v1836
    %2635 = vmatpush.bf16.msra.mxu0 %v1829
    %2636 = vmatpush.bf16.msra.mxu0 %v1822
    %2637 = vmatpush.bf16.msra.mxu0 %v1815
    %2638 = vmatpush.bf16.msra.mxu0 %v1808
    %2639 = vmatpush.bf16.msra.mxu0 %v1801
    %2640 = vmatmul.bf16.gmra.mxu0 %v542
    %v2641 = vpop.f32.mrf.mxu0
    %v2642 = vadd.f32 %v2629, %v2641
    %v2643 = vpop.f32.mrf.mxu0
    %2644 = vdwg.mxu0
    %2645 = vmatpush.bf16.msra.mxu0 %v1906
    %2646 = vmatpush.bf16.msra.mxu0 %v1899
    %2647 = vmatpush.bf16.msra.mxu0 %v1892
    %2648 = vmatpush.bf16.msra.mxu0 %v1885
    %2649 = vmatpush.bf16.msra.mxu0 %v1878
    %2650 = vmatpush.bf16.msra.mxu0 %v1871
    %2651 = vmatpush.bf16.msra.mxu0 %v1864
    %2652 = vmatpush.bf16.msra.mxu0 %v1857
    %2653 = vmatmul.bf16.gmra.mxu0 %v543
    %v2654 = vpop.f32.mrf.mxu0
    %v2655 = vadd.f32 %v2642, %v2654
    %v2656 = vpop.f32.mrf.mxu0
    %2657 = vdwg.mxu0
    %2658 = vmatpush.bf16.msra.mxu0 %v1962
    %2659 = vmatpush.bf16.msra.mxu0 %v1955
    %2660 = vmatpush.bf16.msra.mxu0 %v1948
    %2661 = vmatpush.bf16.msra.mxu0 %v1941
    %2662 = vmatpush.bf16.msra.mxu0 %v1934
    %2663 = vmatpush.bf16.msra.mxu0 %v1927
    %2664 = vmatpush.bf16.msra.mxu0 %v1920
    %2665 = vmatpush.bf16.msra.mxu0 %v1913
    %2666 = vmatmul.bf16.gmra.mxu0 %v544
    %v2667 = vpop.f32.mrf.mxu0
    %v2668 = vadd.f32 %v2655, %v2667
    %v2669 = vpop.f32.mrf.mxu0
    %2670 = vdwg.mxu0
    %2671 = vmatpush.bf16.msra.mxu0 0
    %2672 = vmatpush.bf16.msra.mxu0 0
    %2673 = vmatpush.bf16.msra.mxu0 0
    %2674 = vmatpush.bf16.msra.mxu0 0
    %2675 = vmatpush.bf16.msra.mxu0 0
    %2676 = vmatpush.bf16.msra.mxu0 0
    %2677 = vmatpush.bf16.msra.mxu0 0
    %2678 = vmatpush.bf16.msra.mxu0 %v1969
    %2679 = vmatmul.bf16.gmra.mxu0 %v2318
    %v2680 = vpop.f32.mrf.mxu0
    %v2681 = vadd.f32 %v2668, %v2680
    %v2682 = vpop.f32.mrf.mxu0
    %2683 = vdwg.mxu0
    %2684 = vmatpush.bf16.msra.mxu0 %v1683
    %2685 = vmatpush.bf16.msra.mxu0 %v1676
    %2686 = vmatpush.bf16.msra.mxu0 %v1669
    %2687 = vmatpush.bf16.msra.mxu0 %v1662
    %2688 = vmatpush.bf16.msra.mxu0 %v1655
    %2689 = vmatpush.bf16.msra.mxu0 %v1648
    %2690 = vmatpush.bf16.msra.mxu0 %v1641
    %2691 = vmatpush.bf16.msra.mxu0 %v1634
    %2692 = vmatmul.bf16.gmra.mxu0 %v539
    %v2693 = vpop.f32.mrf.mxu0
    %v2694 = vadd.f32 %v518, %v2693
    %v2695 = vpop.f32.mrf.mxu0
    %2696 = vdwg.mxu0
    %2697 = vmatpush.bf16.msra.mxu0 %v1739
    %2698 = vmatpush.bf16.msra.mxu0 %v1732
    %2699 = vmatpush.bf16.msra.mxu0 %v1725
    %2700 = vmatpush.bf16.msra.mxu0 %v1718
    %2701 = vmatpush.bf16.msra.mxu0 %v1711
    %2702 = vmatpush.bf16.msra.mxu0 %v1704
    %2703 = vmatpush.bf16.msra.mxu0 %v1697
    %2704 = vmatpush.bf16.msra.mxu0 %v1690
    %2705 = vmatmul.bf16.gmra.mxu0 %v540
    %v2706 = vpop.f32.mrf.mxu0
    %v2707 = vadd.f32 %v2694, %v2706
    %v2708 = vpop.f32.mrf.mxu0
    %2709 = vdwg.mxu0
    %2710 = vmatpush.bf16.msra.mxu0 %v1795
    %2711 = vmatpush.bf16.msra.mxu0 %v1788
    %2712 = vmatpush.bf16.msra.mxu0 %v1781
    %2713 = vmatpush.bf16.msra.mxu0 %v1774
    %2714 = vmatpush.bf16.msra.mxu0 %v1767
    %2715 = vmatpush.bf16.msra.mxu0 %v1760
    %2716 = vmatpush.bf16.msra.mxu0 %v1753
    %2717 = vmatpush.bf16.msra.mxu0 %v1746
    %2718 = vmatmul.bf16.gmra.mxu0 %v541
    %v2719 = vpop.f32.mrf.mxu0
    %v2720 = vadd.f32 %v2707, %v2719
    %v2721 = vpop.f32.mrf.mxu0
    %2722 = vdwg.mxu0
    %2723 = vmatpush.bf16.msra.mxu0 %v1851
    %2724 = vmatpush.bf16.msra.mxu0 %v1844
    %2725 = vmatpush.bf16.msra.mxu0 %v1837
    %2726 = vmatpush.bf16.msra.mxu0 %v1830
    %2727 = vmatpush.bf16.msra.mxu0 %v1823
    %2728 = vmatpush.bf16.msra.mxu0 %v1816
    %2729 = vmatpush.bf16.msra.mxu0 %v1809
    %2730 = vmatpush.bf16.msra.mxu0 %v1802
    %2731 = vmatmul.bf16.gmra.mxu0 %v542
    %v2732 = vpop.f32.mrf.mxu0
    %v2733 = vadd.f32 %v2720, %v2732
    %v2734 = vpop.f32.mrf.mxu0
    %2735 = vdwg.mxu0
    %2736 = vmatpush.bf16.msra.mxu0 %v1907
    %2737 = vmatpush.bf16.msra.mxu0 %v1900
    %2738 = vmatpush.bf16.msra.mxu0 %v1893
    %2739 = vmatpush.bf16.msra.mxu0 %v1886
    %2740 = vmatpush.bf16.msra.mxu0 %v1879
    %2741 = vmatpush.bf16.msra.mxu0 %v1872
    %2742 = vmatpush.bf16.msra.mxu0 %v1865
    %2743 = vmatpush.bf16.msra.mxu0 %v1858
    %2744 = vmatmul.bf16.gmra.mxu0 %v543
    %v2745 = vpop.f32.mrf.mxu0
    %v2746 = vadd.f32 %v2733, %v2745
    %v2747 = vpop.f32.mrf.mxu0
    %2748 = vdwg.mxu0
    %2749 = vmatpush.bf16.msra.mxu0 %v1963
    %2750 = vmatpush.bf16.msra.mxu0 %v1956
    %2751 = vmatpush.bf16.msra.mxu0 %v1949
    %2752 = vmatpush.bf16.msra.mxu0 %v1942
    %2753 = vmatpush.bf16.msra.mxu0 %v1935
    %2754 = vmatpush.bf16.msra.mxu0 %v1928
    %2755 = vmatpush.bf16.msra.mxu0 %v1921
    %2756 = vmatpush.bf16.msra.mxu0 %v1914
    %2757 = vmatmul.bf16.gmra.mxu0 %v544
    %v2758 = vpop.f32.mrf.mxu0
    %v2759 = vadd.f32 %v2746, %v2758
    %v2760 = vpop.f32.mrf.mxu0
    %2761 = vdwg.mxu0
    %2762 = vmatpush.bf16.msra.mxu0 0
    %2763 = vmatpush.bf16.msra.mxu0 0
    %2764 = vmatpush.bf16.msra.mxu0 0
    %2765 = vmatpush.bf16.msra.mxu0 0
    %2766 = vmatpush.bf16.msra.mxu0 0
    %2767 = vmatpush.bf16.msra.mxu0 0
    %2768 = vmatpush.bf16.msra.mxu0 0
    %2769 = vmatpush.bf16.msra.mxu0 %v1970
    %2770 = vmatmul.bf16.gmra.mxu0 %v2318
    %v2771 = vpop.f32.mrf.mxu0
    %v2772 = vadd.f32 %v2759, %v2771
    %v2773 = vpop.f32.mrf.mxu0
    %2774 = vdwg.mxu0
    %2775 = vmatpush.bf16.msra.mxu0 %v1684
    %2776 = vmatpush.bf16.msra.mxu0 %v1677
    %2777 = vmatpush.bf16.msra.mxu0 %v1670
    %2778 = vmatpush.bf16.msra.mxu0 %v1663
    %2779 = vmatpush.bf16.msra.mxu0 %v1656
    %2780 = vmatpush.bf16.msra.mxu0 %v1649
    %2781 = vmatpush.bf16.msra.mxu0 %v1642
    %2782 = vmatpush.bf16.msra.mxu0 %v1635
    %2783 = vmatmul.bf16.gmra.mxu0 %v539
    %v2784 = vpop.f32.mrf.mxu0
    %v2785 = vadd.f32 %v519, %v2784
    %v2786 = vpop.f32.mrf.mxu0
    %2787 = vdwg.mxu0
    %2788 = vmatpush.bf16.msra.mxu0 %v1740
    %2789 = vmatpush.bf16.msra.mxu0 %v1733
    %2790 = vmatpush.bf16.msra.mxu0 %v1726
    %2791 = vmatpush.bf16.msra.mxu0 %v1719
    %2792 = vmatpush.bf16.msra.mxu0 %v1712
    %2793 = vmatpush.bf16.msra.mxu0 %v1705
    %2794 = vmatpush.bf16.msra.mxu0 %v1698
    %2795 = vmatpush.bf16.msra.mxu0 %v1691
    %2796 = vmatmul.bf16.gmra.mxu0 %v540
    %v2797 = vpop.f32.mrf.mxu0
    %v2798 = vadd.f32 %v2785, %v2797
    %v2799 = vpop.f32.mrf.mxu0
    %2800 = vdwg.mxu0
    %2801 = vmatpush.bf16.msra.mxu0 %v1796
    %2802 = vmatpush.bf16.msra.mxu0 %v1789
    %2803 = vmatpush.bf16.msra.mxu0 %v1782
    %2804 = vmatpush.bf16.msra.mxu0 %v1775
    %2805 = vmatpush.bf16.msra.mxu0 %v1768
    %2806 = vmatpush.bf16.msra.mxu0 %v1761
    %2807 = vmatpush.bf16.msra.mxu0 %v1754
    %2808 = vmatpush.bf16.msra.mxu0 %v1747
    %2809 = vmatmul.bf16.gmra.mxu0 %v541
    %v2810 = vpop.f32.mrf.mxu0
    %v2811 = vadd.f32 %v2798, %v2810
    %v2812 = vpop.f32.mrf.mxu0
    %2813 = vdwg.mxu0
    %2814 = vmatpush.bf16.msra.mxu0 %v1852
    %2815 = vmatpush.bf16.msra.mxu0 %v1845
    %2816 = vmatpush.bf16.msra.mxu0 %v1838
    %2817 = vmatpush.bf16.msra.mxu0 %v1831
    %2818 = vmatpush.bf16.msra.mxu0 %v1824
    %2819 = vmatpush.bf16.msra.mxu0 %v1817
    %2820 = vmatpush.bf16.msra.mxu0 %v1810
    %2821 = vmatpush.bf16.msra.mxu0 %v1803
    %2822 = vmatmul.bf16.gmra.mxu0 %v542
    %v2823 = vpop.f32.mrf.mxu0
    %v2824 = vadd.f32 %v2811, %v2823
    %v2825 = vpop.f32.mrf.mxu0
    %2826 = vdwg.mxu0
    %2827 = vmatpush.bf16.msra.mxu0 %v1908
    %2828 = vmatpush.bf16.msra.mxu0 %v1901
    %2829 = vmatpush.bf16.msra.mxu0 %v1894
    %2830 = vmatpush.bf16.msra.mxu0 %v1887
    %2831 = vmatpush.bf16.msra.mxu0 %v1880
    %2832 = vmatpush.bf16.msra.mxu0 %v1873
    %2833 = vmatpush.bf16.msra.mxu0 %v1866
    %2834 = vmatpush.bf16.msra.mxu0 %v1859
    %2835 = vmatmul.bf16.gmra.mxu0 %v543
    %v2836 = vpop.f32.mrf.mxu0
    %v2837 = vadd.f32 %v2824, %v2836
    %v2838 = vpop.f32.mrf.mxu0
    %2839 = vdwg.mxu0
    %2840 = vmatpush.bf16.msra.mxu0 %v1964
    %2841 = vmatpush.bf16.msra.mxu0 %v1957
    %2842 = vmatpush.bf16.msra.mxu0 %v1950
    %2843 = vmatpush.bf16.msra.mxu0 %v1943
    %2844 = vmatpush.bf16.msra.mxu0 %v1936
    %2845 = vmatpush.bf16.msra.mxu0 %v1929
    %2846 = vmatpush.bf16.msra.mxu0 %v1922
    %2847 = vmatpush.bf16.msra.mxu0 %v1915
    %2848 = vmatmul.bf16.gmra.mxu0 %v544
    %v2849 = vpop.f32.mrf.mxu0
    %v2850 = vadd.f32 %v2837, %v2849
    %v2851 = vpop.f32.mrf.mxu0
    %2852 = vdwg.mxu0
    %2853 = vmatpush.bf16.msra.mxu0 0
    %2854 = vmatpush.bf16.msra.mxu0 0
    %2855 = vmatpush.bf16.msra.mxu0 0
    %2856 = vmatpush.bf16.msra.mxu0 0
    %2857 = vmatpush.bf16.msra.mxu0 0
    %2858 = vmatpush.bf16.msra.mxu0 0
    %2859 = vmatpush.bf16.msra.mxu0 0
    %2860 = vmatpush.bf16.msra.mxu0 %v1971
    %2861 = vmatmul.bf16.gmra.mxu0 %v2318
    %v2862 = vpop.f32.mrf.mxu0
    %v2863 = vadd.f32 %v2850, %v2862
    %v2864 = vpop.f32.mrf.mxu0
    %2865 = vdwg.mxu0
    %2866 = vmatpush.bf16.msra.mxu0 %v1685
    %2867 = vmatpush.bf16.msra.mxu0 %v1678
    %2868 = vmatpush.bf16.msra.mxu0 %v1671
    %2869 = vmatpush.bf16.msra.mxu0 %v1664
    %2870 = vmatpush.bf16.msra.mxu0 %v1657
    %2871 = vmatpush.bf16.msra.mxu0 %v1650
    %2872 = vmatpush.bf16.msra.mxu0 %v1643
    %2873 = vmatpush.bf16.msra.mxu0 %v1636
    %2874 = vmatmul.bf16.gmra.mxu0 %v539
    %v2875 = vpop.f32.mrf.mxu0
    %v2876 = vadd.f32 %v520, %v2875
    %v2877 = vpop.f32.mrf.mxu0
    %2878 = vdwg.mxu0
    %2879 = vmatpush.bf16.msra.mxu0 %v1741
    %2880 = vmatpush.bf16.msra.mxu0 %v1734
    %2881 = vmatpush.bf16.msra.mxu0 %v1727
    %2882 = vmatpush.bf16.msra.mxu0 %v1720
    %2883 = vmatpush.bf16.msra.mxu0 %v1713
    %2884 = vmatpush.bf16.msra.mxu0 %v1706
    %2885 = vmatpush.bf16.msra.mxu0 %v1699
    %2886 = vmatpush.bf16.msra.mxu0 %v1692
    %2887 = vmatmul.bf16.gmra.mxu0 %v540
    %v2888 = vpop.f32.mrf.mxu0
    %v2889 = vadd.f32 %v2876, %v2888
    %v2890 = vpop.f32.mrf.mxu0
    %2891 = vdwg.mxu0
    %2892 = vmatpush.bf16.msra.mxu0 %v1797
    %2893 = vmatpush.bf16.msra.mxu0 %v1790
    %2894 = vmatpush.bf16.msra.mxu0 %v1783
    %2895 = vmatpush.bf16.msra.mxu0 %v1776
    %2896 = vmatpush.bf16.msra.mxu0 %v1769
    %2897 = vmatpush.bf16.msra.mxu0 %v1762
    %2898 = vmatpush.bf16.msra.mxu0 %v1755
    %2899 = vmatpush.bf16.msra.mxu0 %v1748
    %2900 = vmatmul.bf16.gmra.mxu0 %v541
    %v2901 = vpop.f32.mrf.mxu0
    %v2902 = vadd.f32 %v2889, %v2901
    %v2903 = vpop.f32.mrf.mxu0
    %2904 = vdwg.mxu0
    %2905 = vmatpush.bf16.msra.mxu0 %v1853
    %2906 = vmatpush.bf16.msra.mxu0 %v1846
    %2907 = vmatpush.bf16.msra.mxu0 %v1839
    %2908 = vmatpush.bf16.msra.mxu0 %v1832
    %2909 = vmatpush.bf16.msra.mxu0 %v1825
    %2910 = vmatpush.bf16.msra.mxu0 %v1818
    %2911 = vmatpush.bf16.msra.mxu0 %v1811
    %2912 = vmatpush.bf16.msra.mxu0 %v1804
    %2913 = vmatmul.bf16.gmra.mxu0 %v542
    %v2914 = vpop.f32.mrf.mxu0
    %v2915 = vadd.f32 %v2902, %v2914
    %v2916 = vpop.f32.mrf.mxu0
    %2917 = vdwg.mxu0
    %2918 = vmatpush.bf16.msra.mxu0 %v1909
    %2919 = vmatpush.bf16.msra.mxu0 %v1902
    %2920 = vmatpush.bf16.msra.mxu0 %v1895
    %2921 = vmatpush.bf16.msra.mxu0 %v1888
    %2922 = vmatpush.bf16.msra.mxu0 %v1881
    %2923 = vmatpush.bf16.msra.mxu0 %v1874
    %2924 = vmatpush.bf16.msra.mxu0 %v1867
    %2925 = vmatpush.bf16.msra.mxu0 %v1860
    %2926 = vmatmul.bf16.gmra.mxu0 %v543
    %v2927 = vpop.f32.mrf.mxu0
    %v2928 = vadd.f32 %v2915, %v2927
    %v2929 = vpop.f32.mrf.mxu0
    %2930 = vdwg.mxu0
    %2931 = vmatpush.bf16.msra.mxu0 %v1965
    %2932 = vmatpush.bf16.msra.mxu0 %v1958
    %2933 = vmatpush.bf16.msra.mxu0 %v1951
    %2934 = vmatpush.bf16.msra.mxu0 %v1944
    %2935 = vmatpush.bf16.msra.mxu0 %v1937
    %2936 = vmatpush.bf16.msra.mxu0 %v1930
    %2937 = vmatpush.bf16.msra.mxu0 %v1923
    %2938 = vmatpush.bf16.msra.mxu0 %v1916
    %2939 = vmatmul.bf16.gmra.mxu0 %v544
    %v2940 = vpop.f32.mrf.mxu0
    %v2941 = vadd.f32 %v2928, %v2940
    %v2942 = vpop.f32.mrf.mxu0
    %2943 = vdwg.mxu0
    %2944 = vmatpush.bf16.msra.mxu0 0
    %2945 = vmatpush.bf16.msra.mxu0 0
    %2946 = vmatpush.bf16.msra.mxu0 0
    %2947 = vmatpush.bf16.msra.mxu0 0
    %2948 = vmatpush.bf16.msra.mxu0 0
    %2949 = vmatpush.bf16.msra.mxu0 0
    %2950 = vmatpush.bf16.msra.mxu0 0
    %2951 = vmatpush.bf16.msra.mxu0 %v1972
    %2952 = vmatmul.bf16.gmra.mxu0 %v2318
    %v2953 = vpop.f32.mrf.mxu0
    %v2954 = vadd.f32 %v2941, %v2953
    %v2955 = vpop.f32.mrf.mxu0
    %2956 = vdwg.mxu0
    %v2957 = vmax.f32 %v2408, 0.0
    %v2958 = vmax.f32 %v2499, 0.0
    %v2959 = vmax.f32 %v2590, 0.0
    %v2960 = vmax.f32 %v2681, 0.0
    %v2961 = vmax.f32 %v2772, 0.0
    %v2962 = vmax.f32 %v2863, 0.0
    %v2963 = vmax.f32 %v2954, 0.0
    %v2964 = vpack.c.bf16 %v2957, %v2957
    %v2965 = vpack.c.bf16 %v2958, %v2958
    %v2966 = vpack.c.bf16 %v2959, %v2959
    %v2967 = vpack.c.bf16 %v2960, %v2960
    %v2968 = vpack.c.bf16 %v2961, %v2961
    %v2969 = vpack.c.bf16 %v2962, %v2962
    %v2970 = vpack.c.bf16 %v2963, %v2963
    %v2971 = vld [vmem:[#allocation7] sm:$0xff]
    %v2972 = vld [vmem:[#allocation7 + $0x8] sm:$0xff]
    %v2973 = vld [vmem:[#allocation7 + $0x10] sm:$0xff]
    %v2974 = vld [vmem:[#allocation7 + $0x18] sm:$0xf]
    %v2975 = vld [vmem:[#allocation7 + $0x1c] sm:$0xff]
    %v2976 = vld [vmem:[#allocation7 + $0x24] sm:$0xff]
    %v2977 = vld [vmem:[#allocation7 + $0x2c] sm:$0xff]
    %v2978 = vld [vmem:[#allocation7 + $0x34] sm:$0xf]
    %v2979 = vld [vmem:[#allocation7 + $0x38] sm:$0xff]
    %v2980 = vld [vmem:[#allocation7 + $0x40] sm:$0xff]
    %v2981 = vld [vmem:[#allocation7 + $0x48] sm:$0xff]
    %v2982 = vld [vmem:[#allocation7 + $0x50] sm:$0xf]
    %v2983 = vld [vmem:[#allocation7 + $0x54] sm:$0xff]
    %v2984 = vld [vmem:[#allocation7 + $0x5c] sm:$0xff]
    %v2985 = vld [vmem:[#allocation7 + $0x64] sm:$0xff]
    %v2986 = vld [vmem:[#allocation7 + $0x6c] sm:$0xf]
    %v2987 = vld [vmem:[#allocation7 + $0x70] sm:$0xff]
    %v2988 = vld [vmem:[#allocation7 + $0x78] sm:$0xff]
    %v2989 = vld [vmem:[#allocation7 + $0x80] sm:$0xff]
    %v2990 = vld [vmem:[#allocation7 + $0x88] sm:$0xf]
    %v2991 = vld [vmem:[#allocation7 + $0x8c] sm:$0xff]
    %v2992 = vld [vmem:[#allocation7 + $0x94] sm:$0xff]
    %v2993 = vld [vmem:[#allocation7 + $0x9c] sm:$0xff]
    %v2994 = vld [vmem:[#allocation7 + $0xa4] sm:$0xf]
    %v2995 = vld [vmem:[#allocation7 + $0xa8] sm:$0xff]
    %v2996 = vld [vmem:[#allocation7 + $0xb0] sm:$0xff]
    %v2997 = vld [vmem:[#allocation7 + $0xb8] sm:$0xff]
    %v2998 = vld [vmem:[#allocation7 + $0xc0] sm:$0xf]
    %v2999 = vld [vmem:[#allocation7 + $0xc4] sm:$0xff]
    %v3000 = vld [vmem:[#allocation7 + $0xcc] sm:$0xff]
    %v3001 = vld [vmem:[#allocation7 + $0xd4] sm:$0xff]
    %v3002 = vld [vmem:[#allocation7 + $0xdc] sm:$0xf]
    %v3003 = vld [vmem:[#allocation7 + $0xe0] sm:$0xff]
    %v3004 = vld [vmem:[#allocation7 + $0xe8] sm:$0xff]
    %v3005 = vld [vmem:[#allocation7 + $0xf0] sm:$0xff]
    %v3006 = vld [vmem:[#allocation7 + $0xf8] sm:$0xf]
    %v3007 = vld [vmem:[#allocation7 + $0xfc] sm:$0xff]
    %v3008 = vld [vmem:[#allocation7 + $0x104] sm:$0xff]
    %v3009 = vld [vmem:[#allocation7 + $0x10c] sm:$0xff]
    %v3010 = vld [vmem:[#allocation7 + $0x114] sm:$0xf]
    %v3011 = vld [vmem:[#allocation7 + $0x118] sm:$0xff]
    %v3012 = vld [vmem:[#allocation7 + $0x120] sm:$0xff]
    %v3013 = vld [vmem:[#allocation7 + $0x128] sm:$0xff]
    %v3014 = vld [vmem:[#allocation7 + $0x130] sm:$0xf]
    %v3015 = vld [vmem:[#allocation7 + $0x134] sm:$0xff]
    %v3016 = vld [vmem:[#allocation7 + $0x13c] sm:$0xff]
    %v3017 = vld [vmem:[#allocation7 + $0x144] sm:$0xff]
    %v3018 = vld [vmem:[#allocation7 + $0x14c] sm:$0xf]
    %v3019 = vld [vmem:[#allocation7 + $0x150] sm:$0xff]
    %v3020 = vld [vmem:[#allocation7 + $0x158] sm:$0xff]
    %v3021 = vld [vmem:[#allocation7 + $0x160] sm:$0xff]
    %v3022 = vld [vmem:[#allocation7 + $0x168] sm:$0xf]
    %v3023 = vld [vmem:[#allocation7 + $0x16c] sm:$0xff]
    %v3024 = vld [vmem:[#allocation7 + $0x174] sm:$0xff]
    %v3025 = vld [vmem:[#allocation7 + $0x17c] sm:$0xff]
    %v3026 = vld [vmem:[#allocation7 + $0x184] sm:$0xf]
    %v3027 = vld [vmem:[#allocation7 + $0x188] sm:$0xff]
    %v3028 = vld [vmem:[#allocation7 + $0x190] sm:$0xff]
    %v3029 = vld [vmem:[#allocation7 + $0x198] sm:$0xff]
    %v3030 = vld [vmem:[#allocation7 + $0x1a0] sm:$0xf]
    %v3031 = vld [vmem:[#allocation7 + $0x1a4] sm:$0xff]
    %v3032 = vld [vmem:[#allocation7 + $0x1ac] sm:$0xff]
    %v3033 = vld [vmem:[#allocation7 + $0x1b4] sm:$0xff]
    %v3034 = vld [vmem:[#allocation7 + $0x1bc] sm:$0xf]
    %v3035 = vld [vmem:[#allocation7 + $0x1c0] sm:$0xff]
    %v3036 = vld [vmem:[#allocation7 + $0x1c8] sm:$0xff]
    %v3037 = vld [vmem:[#allocation7 + $0x1d0] sm:$0xff]
    %v3038 = vld [vmem:[#allocation7 + $0x1d8] sm:$0xf]
    %v3039 = vld [vmem:[#allocation7 + $0x1dc] sm:$0xff]
    %v3040 = vld [vmem:[#allocation7 + $0x1e4] sm:$0xff]
    %v3041 = vld [vmem:[#allocation7 + $0x1ec] sm:$0xff]
    %v3042 = vld [vmem:[#allocation7 + $0x1f4] sm:$0xf]
    %v3043 = vld [vmem:[#allocation7 + $0x1f8] sm:$0xff]
    %v3044 = vld [vmem:[#allocation7 + $0x200] sm:$0xff]
    %v3045 = vld [vmem:[#allocation7 + $0x208] sm:$0xff]
    %v3046 = vld [vmem:[#allocation7 + $0x210] sm:$0xf]
    %v3047 = vld [vmem:[#allocation7 + $0x214] sm:$0xff]
    %v3048 = vld [vmem:[#allocation7 + $0x21c] sm:$0xff]
    %v3049 = vld [vmem:[#allocation7 + $0x224] sm:$0xff]
    %v3050 = vld [vmem:[#allocation7 + $0x22c] sm:$0xf]
    %v3051 = vld [vmem:[#allocation7 + $0x230] sm:$0xff]
    %v3052 = vld [vmem:[#allocation7 + $0x238] sm:$0xff]
    %v3053 = vld [vmem:[#allocation7 + $0x240] sm:$0xff]
    %v3054 = vld [vmem:[#allocation7 + $0x248] sm:$0xf]
    %v3055 = vld [vmem:[#allocation7 + $0x24c] sm:$0xff]
    %v3056 = vld [vmem:[#allocation7 + $0x254] sm:$0xff]
    %v3057 = vld [vmem:[#allocation7 + $0x25c] sm:$0xff]
    %v3058 = vld [vmem:[#allocation7 + $0x264] sm:$0xf]
    %v3059 = vld [vmem:[#allocation7 + $0x268] sm:$0xff]
    %v3060 = vld [vmem:[#allocation7 + $0x270] sm:$0xff]
    %v3061 = vld [vmem:[#allocation7 + $0x278] sm:$0xff]
    %v3062 = vld [vmem:[#allocation7 + $0x280] sm:$0xf]
    %v3063 = vld [vmem:[#allocation7 + $0x284] sm:$0xff]
    %v3064 = vld [vmem:[#allocation7 + $0x28c] sm:$0xff]
    %v3065 = vld [vmem:[#allocation7 + $0x294] sm:$0xff]
    %v3066 = vld [vmem:[#allocation7 + $0x29c] sm:$0xf]
    %v3067 = vld [vmem:[#allocation7 + $0x2a0] sm:$0xff]
    %v3068 = vld [vmem:[#allocation7 + $0x2a8] sm:$0xff]
    %v3069 = vld [vmem:[#allocation7 + $0x2b0] sm:$0xff]
    %v3070 = vld [vmem:[#allocation7 + $0x2b8] sm:$0xf]
    %v3071 = vld [vmem:[#allocation7 + $0x2bc] sm:$0xff]
    %v3072 = vld [vmem:[#allocation7 + $0x2c4] sm:$0xff]
    %v3073 = vld [vmem:[#allocation7 + $0x2cc] sm:$0xff]
    %v3074 = vld [vmem:[#allocation7 + $0x2d4] sm:$0xf]
    %v3075 = vld [vmem:[#allocation7 + $0x2d8] sm:$0xff]
    %v3076 = vld [vmem:[#allocation7 + $0x2e0] sm:$0xff]
    %v3077 = vld [vmem:[#allocation7 + $0x2e8] sm:$0xff]
    %v3078 = vld [vmem:[#allocation7 + $0x2f0] sm:$0xf]
    %v3079 = vld [vmem:[#allocation7 + $0x2f4] sm:$0xff]
    %v3080 = vld [vmem:[#allocation7 + $0x2fc] sm:$0xff]
    %v3081 = vld [vmem:[#allocation7 + $0x304] sm:$0xff]
    %v3082 = vld [vmem:[#allocation7 + $0x30c] sm:$0xf]
    %v3083 = vld [vmem:[#allocation7 + $0x310] sm:$0xff]
    %v3084 = vld [vmem:[#allocation7 + $0x318] sm:$0xff]
    %v3085 = vld [vmem:[#allocation7 + $0x320] sm:$0xff]
    %v3086 = vld [vmem:[#allocation7 + $0x328] sm:$0xf]
    %v3087 = vld [vmem:[#allocation7 + $0x32c] sm:$0xff]
    %v3088 = vld [vmem:[#allocation7 + $0x334] sm:$0xff]
    %v3089 = vld [vmem:[#allocation7 + $0x33c] sm:$0xff]
    %v3090 = vld [vmem:[#allocation7 + $0x344] sm:$0xf]
    %v3091 = vld [vmem:[#allocation7 + $0x348] sm:$0xff]
    %v3092 = vld [vmem:[#allocation7 + $0x350] sm:$0xff]
    %v3093 = vld [vmem:[#allocation7 + $0x358] sm:$0xff]
    %v3094 = vld [vmem:[#allocation7 + $0x360] sm:$0xf]
    %v3095 = vld [vmem:[#allocation7 + $0x364] sm:$0xff]
    %v3096 = vld [vmem:[#allocation7 + $0x36c] sm:$0xff]
    %v3097 = vld [vmem:[#allocation7 + $0x374] sm:$0xff]
    %v3098 = vld [vmem:[#allocation7 + $0x37c] sm:$0xf]
    %v3099 = vld [vmem:[#allocation7 + $0x380] sm:$0xff]
    %v3100 = vld [vmem:[#allocation7 + $0x388] sm:$0xff]
    %v3101 = vld [vmem:[#allocation7 + $0x390] sm:$0xff]
    %v3102 = vld [vmem:[#allocation7 + $0x398] sm:$0xf]
    %v3103 = vld [vmem:[#allocation7 + $0x39c] sm:$0xff]
    %v3104 = vld [vmem:[#allocation7 + $0x3a4] sm:$0xff]
    %v3105 = vld [vmem:[#allocation7 + $0x3ac] sm:$0xff]
    %v3106 = vld [vmem:[#allocation7 + $0x3b4] sm:$0xf]
    %v3107 = vld [vmem:[#allocation7 + $0x3b8] sm:$0xff]
    %v3108 = vld [vmem:[#allocation7 + $0x3c0] sm:$0xff]
    %v3109 = vld [vmem:[#allocation7 + $0x3c8] sm:$0xff]
    %v3110 = vld [vmem:[#allocation7 + $0x3d0] sm:$0xf]
    %v3111 = vld [vmem:[#allocation7 + $0x3d4] sm:$0xff]
    %v3112 = vld [vmem:[#allocation7 + $0x3dc] sm:$0xff]
    %v3113 = vld [vmem:[#allocation7 + $0x3e4] sm:$0xff]
    %v3114 = vld [vmem:[#allocation7 + $0x3ec] sm:$0xf]
    %v3115 = vld [vmem:[#allocation7 + $0x3f0] sm:$0xff]
    %v3116 = vld [vmem:[#allocation7 + $0x3f8] sm:$0xff]
    %v3117 = vld [vmem:[#allocation7 + $0x400] sm:$0xff]
    %v3118 = vld [vmem:[#allocation7 + $0x408] sm:$0xf]
    %v3119 = vld [vmem:[#allocation7 + $0x40c] sm:$0xff]
    %v3120 = vld [vmem:[#allocation7 + $0x414] sm:$0xff]
    %v3121 = vld [vmem:[#allocation7 + $0x41c] sm:$0xff]
    %v3122 = vld [vmem:[#allocation7 + $0x424] sm:$0xf]
    %v3123 = vld [vmem:[#allocation7 + $0x428] sm:$0xff]
    %v3124 = vld [vmem:[#allocation7 + $0x430] sm:$0xff]
    %v3125 = vld [vmem:[#allocation7 + $0x438] sm:$0xff]
    %v3126 = vld [vmem:[#allocation7 + $0x440] sm:$0xf]
    %v3127 = vld [vmem:[#allocation7 + $0x444] sm:$0xff]
    %v3128 = vld [vmem:[#allocation7 + $0x44c] sm:$0xff]
    %v3129 = vld [vmem:[#allocation7 + $0x454] sm:$0xff]
    %v3130 = vld [vmem:[#allocation7 + $0x45c] sm:$0xf]
    %v3131 = vld [vmem:[#allocation7 + $0x460] sm:$0xff]
    %v3132 = vld [vmem:[#allocation7 + $0x468] sm:$0xff]
    %v3133 = vld [vmem:[#allocation7 + $0x470] sm:$0xff]
    %v3134 = vld [vmem:[#allocation7 + $0x478] sm:$0xf]
    %v3135 = vld [vmem:[#allocation7 + $0x47c] sm:$0xff]
    %v3136 = vld [vmem:[#allocation7 + $0x484] sm:$0xff]
    %v3137 = vld [vmem:[#allocation7 + $0x48c] sm:$0xff]
    %v3138 = vld [vmem:[#allocation7 + $0x494] sm:$0xf]
    %v3139 = vld [vmem:[#allocation7 + $0x498] sm:$0xff]
    %v3140 = vld [vmem:[#allocation7 + $0x4a0] sm:$0xff]
    %v3141 = vld [vmem:[#allocation7 + $0x4a8] sm:$0xff]
    %v3142 = vld [vmem:[#allocation7 + $0x4b0] sm:$0xf]
    %v3143 = vld [vmem:[#allocation7 + $0x4b4] sm:$0xff]
    %v3144 = vld [vmem:[#allocation7 + $0x4bc] sm:$0xff]
    %v3145 = vld [vmem:[#allocation7 + $0x4c4] sm:$0xff]
    %v3146 = vld [vmem:[#allocation7 + $0x4cc] sm:$0xf]
    %v3147 = vld [vmem:[#allocation7 + $0x4d0] sm:$0xff]
    %v3148 = vld [vmem:[#allocation7 + $0x4d8] sm:$0xff]
    %v3149 = vld [vmem:[#allocation7 + $0x4e0] sm:$0xff]
    %v3150 = vld [vmem:[#allocation7 + $0x4e8] sm:$0xf]
    %v3151 = vld [vmem:[#allocation7 + $0x4ec] sm:$0xff]
    %v3152 = vld [vmem:[#allocation7 + $0x4f4] sm:$0xff]
    %v3153 = vld [vmem:[#allocation7 + $0x4fc] sm:$0xff]
    %v3154 = vld [vmem:[#allocation7 + $0x504] sm:$0xf]
    %v3155 = vld [vmem:[#allocation7 + $0x508] sm:$0xff]
    %v3156 = vld [vmem:[#allocation7 + $0x510] sm:$0xff]
    %v3157 = vld [vmem:[#allocation7 + $0x518] sm:$0xff]
    %v3158 = vld [vmem:[#allocation7 + $0x520] sm:$0xf]
    %v3159 = vld [vmem:[#allocation7 + $0x524] sm:$0xff]
    %v3160 = vld [vmem:[#allocation7 + $0x52c] sm:$0xff]
    %v3161 = vld [vmem:[#allocation7 + $0x534] sm:$0xff]
    %v3162 = vld [vmem:[#allocation7 + $0x53c] sm:$0xf]
    %v3163 = vld [vmem:[#allocation7 + $0x540] sm:$0xff]
    %v3164 = vld [vmem:[#allocation7 + $0x548] sm:$0xff]
    %v3165 = vld [vmem:[#allocation7 + $0x550] sm:$0xff]
    %v3166 = vld [vmem:[#allocation7 + $0x558] sm:$0xf]
    %v3167 = vld [vmem:[#allocation7 + $0x55c] sm:$0xff]
    %v3168 = vld [vmem:[#allocation7 + $0x564] sm:$0xff]
    %v3169 = vld [vmem:[#allocation7 + $0x56c] sm:$0xff]
    %v3170 = vld [vmem:[#allocation7 + $0x574] sm:$0xf]
    %v3171 = vld [vmem:[#allocation7 + $0x578] sm:$0xff]
    %v3172 = vld [vmem:[#allocation7 + $0x580] sm:$0xff]
    %v3173 = vld [vmem:[#allocation7 + $0x588] sm:$0xff]
    %v3174 = vld [vmem:[#allocation7 + $0x590] sm:$0xf]
    %v3175 = vld [vmem:[#allocation7 + $0x594] sm:$0xff]
    %v3176 = vld [vmem:[#allocation7 + $0x59c] sm:$0xff]
    %v3177 = vld [vmem:[#allocation7 + $0x5a4] sm:$0xff]
    %v3178 = vld [vmem:[#allocation7 + $0x5ac] sm:$0xf]
    %v3179 = vld [vmem:[#allocation7 + $0x5b0] sm:$0xff]
    %v3180 = vld [vmem:[#allocation7 + $0x5b8] sm:$0xff]
    %v3181 = vld [vmem:[#allocation7 + $0x5c0] sm:$0xff]
    %v3182 = vld [vmem:[#allocation7 + $0x5c8] sm:$0xf]
    %v3183 = vld [vmem:[#allocation7 + $0x5cc] sm:$0xff]
    %v3184 = vld [vmem:[#allocation7 + $0x5d4] sm:$0xff]
    %v3185 = vld [vmem:[#allocation7 + $0x5dc] sm:$0xff]
    %v3186 = vld [vmem:[#allocation7 + $0x5e4] sm:$0xf]
    %v3187 = vld [vmem:[#allocation7 + $0x5e8] sm:$0xff]
    %v3188 = vld [vmem:[#allocation7 + $0x5f0] sm:$0xff]
    %v3189 = vld [vmem:[#allocation7 + $0x5f8] sm:$0xff]
    %v3190 = vld [vmem:[#allocation7 + $0x600] sm:$0xf]
    %v3191 = vld [vmem:[#allocation7 + $0x604] sm:$0xff]
    %v3192 = vld [vmem:[#allocation7 + $0x60c] sm:$0xff]
    %v3193 = vld [vmem:[#allocation7 + $0x614] sm:$0xff]
    %v3194 = vld [vmem:[#allocation7 + $0x61c] sm:$0xf]
    %v3195 = vld [vmem:[#allocation7 + $0x620] sm:$0xff]
    %v3196 = vld [vmem:[#allocation7 + $0x628] sm:$0xff]
    %v3197 = vld [vmem:[#allocation7 + $0x630] sm:$0xff]
    %v3198 = vld [vmem:[#allocation7 + $0x638] sm:$0xf]
    %v3199 = vld [vmem:[#allocation7 + $0x63c] sm:$0xff]
    %v3200 = vld [vmem:[#allocation7 + $0x644] sm:$0xff]
    %v3201 = vld [vmem:[#allocation7 + $0x64c] sm:$0xff]
    %v3202 = vld [vmem:[#allocation7 + $0x654] sm:$0xf]
    %v3203 = vld [vmem:[#allocation7 + $0x658] sm:$0xff]
    %v3204 = vld [vmem:[#allocation7 + $0x660] sm:$0xff]
    %v3205 = vld [vmem:[#allocation7 + $0x668] sm:$0xff]
    %v3206 = vld [vmem:[#allocation7 + $0x670] sm:$0xf]
    %v3207 = vld [vmem:[#allocation7 + $0x674] sm:$0xff]
    %v3208 = vld [vmem:[#allocation7 + $0x67c] sm:$0xff]
    %v3209 = vld [vmem:[#allocation7 + $0x684] sm:$0xff]
    %v3210 = vld [vmem:[#allocation7 + $0x68c] sm:$0xf]
    %v3211 = vld [vmem:[#allocation7 + $0x690] sm:$0xff]
    %v3212 = vld [vmem:[#allocation7 + $0x698] sm:$0xff]
    %v3213 = vld [vmem:[#allocation7 + $0x6a0] sm:$0xff]
    %v3214 = vld [vmem:[#allocation7 + $0x6a8] sm:$0xf]
    %v3215 = vld [vmem:[#allocation7 + $0x6ac] sm:$0xff]
    %v3216 = vld [vmem:[#allocation7 + $0x6b4] sm:$0xff]
    %v3217 = vld [vmem:[#allocation7 + $0x6bc] sm:$0xff]
    %v3218 = vld [vmem:[#allocation7 + $0x6c4] sm:$0xf]
    %v3219 = vld [vmem:[#allocation7 + $0x6c8] sm:$0xff]
    %v3220 = vld [vmem:[#allocation7 + $0x6d0] sm:$0xff]
    %v3221 = vld [vmem:[#allocation7 + $0x6d8] sm:$0xff]
    %v3222 = vld [vmem:[#allocation7 + $0x6e0] sm:$0xf]
    %v3223 = vld [vmem:[#allocation7 + $0x6e4] sm:$0xff]
    %v3224 = vld [vmem:[#allocation7 + $0x6ec] sm:$0xff]
    %v3225 = vld [vmem:[#allocation7 + $0x6f4] sm:$0xff]
    %v3226 = vld [vmem:[#allocation7 + $0x6fc] sm:$0xf]
    %v3227 = vld [vmem:[#allocation7 + $0x700] sm:$0xff]
    %v3228 = vld [vmem:[#allocation7 + $0x708] sm:$0xff]
    %v3229 = vld [vmem:[#allocation7 + $0x710] sm:$0xff]
    %v3230 = vld [vmem:[#allocation7 + $0x718] sm:$0xf]
    %v3231 = vld [vmem:[#allocation7 + $0x71c] sm:$0xff]
    %v3232 = vld [vmem:[#allocation7 + $0x724] sm:$0xff]
    %v3233 = vld [vmem:[#allocation7 + $0x72c] sm:$0xff]
    %v3234 = vld [vmem:[#allocation7 + $0x734] sm:$0xf]
    %v3235 = vld [vmem:[#allocation7 + $0x738] sm:$0xff]
    %v3236 = vld [vmem:[#allocation7 + $0x740] sm:$0xff]
    %v3237 = vld [vmem:[#allocation7 + $0x748] sm:$0xff]
    %v3238 = vld [vmem:[#allocation7 + $0x750] sm:$0xf]
    %v3239 = vld [vmem:[#allocation7 + $0x754] sm:$0xff]
    %v3240 = vld [vmem:[#allocation7 + $0x75c] sm:$0xff]
    %v3241 = vld [vmem:[#allocation7 + $0x764] sm:$0xff]
    %v3242 = vld [vmem:[#allocation7 + $0x76c] sm:$0xf]
    %v3243 = vld [vmem:[#allocation7 + $0x770] sm:$0xff]
    %v3244 = vld [vmem:[#allocation7 + $0x778] sm:$0xff]
    %v3245 = vld [vmem:[#allocation7 + $0x780] sm:$0xff]
    %v3246 = vld [vmem:[#allocation7 + $0x788] sm:$0xf]
    %v3247 = vld [vmem:[#allocation7 + $0x78c] sm:$0xff]
    %v3248 = vld [vmem:[#allocation7 + $0x794] sm:$0xff]
    %v3249 = vld [vmem:[#allocation7 + $0x79c] sm:$0xff]
    %v3250 = vld [vmem:[#allocation7 + $0x7a4] sm:$0xf]
    %v3251 = vld [vmem:[#allocation7 + $0x7a8] sm:$0xff]
    %v3252 = vld [vmem:[#allocation7 + $0x7b0] sm:$0xff]
    %v3253 = vld [vmem:[#allocation7 + $0x7b8] sm:$0xff]
    %v3254 = vld [vmem:[#allocation7 + $0x7c0] sm:$0xf]
    %v3255 = vld [vmem:[#allocation7 + $0x7c4] sm:$0xff]
    %v3256 = vld [vmem:[#allocation7 + $0x7cc] sm:$0xff]
    %v3257 = vld [vmem:[#allocation7 + $0x7d4] sm:$0xff]
    %v3258 = vld [vmem:[#allocation7 + $0x7dc] sm:$0xf]
    %v3259 = vld [vmem:[#allocation7 + $0x7e0] sm:$0xff]
    %v3260 = vld [vmem:[#allocation7 + $0x7e8] sm:$0xff]
    %v3261 = vld [vmem:[#allocation7 + $0x7f0] sm:$0xff]
    %v3262 = vld [vmem:[#allocation7 + $0x7f8] sm:$0xf]
    %v3263 = vld [vmem:[#allocation7 + $0x7fc] sm:$0xff]
    %v3264 = vld [vmem:[#allocation7 + $0x804] sm:$0xff]
    %v3265 = vld [vmem:[#allocation7 + $0x80c] sm:$0xff]
    %v3266 = vld [vmem:[#allocation7 + $0x814] sm:$0xf]
    %v3267 = vld [vmem:[#allocation7 + $0x818] sm:$0xff]
    %v3268 = vld [vmem:[#allocation7 + $0x820] sm:$0xff]
    %v3269 = vld [vmem:[#allocation7 + $0x828] sm:$0xff]
    %v3270 = vld [vmem:[#allocation7 + $0x830] sm:$0xf]
    %v3271 = vld [vmem:[#allocation7 + $0x834] sm:$0xff]
    %v3272 = vld [vmem:[#allocation7 + $0x83c] sm:$0xff]
    %v3273 = vld [vmem:[#allocation7 + $0x844] sm:$0xff]
    %v3274 = vld [vmem:[#allocation7 + $0x84c] sm:$0xf]
    %v3275 = vld [vmem:[#allocation7 + $0x850] sm:$0xff]
    %v3276 = vld [vmem:[#allocation7 + $0x858] sm:$0xff]
    %v3277 = vld [vmem:[#allocation7 + $0x860] sm:$0xff]
    %v3278 = vld [vmem:[#allocation7 + $0x868] sm:$0xf]
    %v3279 = vld [vmem:[#allocation7 + $0x86c] sm:$0xff]
    %v3280 = vld [vmem:[#allocation7 + $0x874] sm:$0xff]
    %v3281 = vld [vmem:[#allocation7 + $0x87c] sm:$0xff]
    %v3282 = vld [vmem:[#allocation7 + $0x884] sm:$0xf]
    %v3283 = vld [vmem:[#allocation7 + $0x888] sm:$0xff]
    %v3284 = vld [vmem:[#allocation7 + $0x890] sm:$0xff]
    %v3285 = vld [vmem:[#allocation7 + $0x898] sm:$0xff]
    %v3286 = vld [vmem:[#allocation7 + $0x8a0] sm:$0xf]
    %v3287 = vld [vmem:[#allocation7 + $0x8a4] sm:$0xff]
    %v3288 = vld [vmem:[#allocation7 + $0x8ac] sm:$0xff]
    %v3289 = vld [vmem:[#allocation7 + $0x8b4] sm:$0xff]
    %v3290 = vld [vmem:[#allocation7 + $0x8bc] sm:$0xf]
    %v3291 = vld [vmem:[#allocation7 + $0x8c0] sm:$0xff]
    %v3292 = vld [vmem:[#allocation7 + $0x8c8] sm:$0xff]
    %v3293 = vld [vmem:[#allocation7 + $0x8d0] sm:$0xff]
    %v3294 = vld [vmem:[#allocation7 + $0x8d8] sm:$0xf]
    %v3295 = vld [vmem:[#allocation7 + $0x8dc] sm:$0xff]
    %v3296 = vld [vmem:[#allocation7 + $0x8e4] sm:$0xff]
    %v3297 = vld [vmem:[#allocation7 + $0x8ec] sm:$0xff]
    %v3298 = vld [vmem:[#allocation7 + $0x8f4] sm:$0xf]
    %v3299 = vld [vmem:[#allocation7 + $0x8f8] sm:$0xff]
    %v3300 = vld [vmem:[#allocation7 + $0x900] sm:$0xff]
    %v3301 = vld [vmem:[#allocation7 + $0x908] sm:$0xff]
    %v3302 = vld [vmem:[#allocation7 + $0x910] sm:$0xf]
    %v3303 = vld [vmem:[#allocation7 + $0x914] sm:$0xff]
    %v3304 = vld [vmem:[#allocation7 + $0x91c] sm:$0xff]
    %v3305 = vld [vmem:[#allocation7 + $0x924] sm:$0xff]
    %v3306 = vld [vmem:[#allocation7 + $0x92c] sm:$0xf]
    %v3307 = vld [vmem:[#allocation7 + $0x930] sm:$0xff]
    %v3308 = vld [vmem:[#allocation7 + $0x938] sm:$0xff]
    %v3309 = vld [vmem:[#allocation7 + $0x940] sm:$0xff]
    %v3310 = vld [vmem:[#allocation7 + $0x948] sm:$0xf]
    %v3311 = vld [vmem:[#allocation7 + $0x94c] sm:$0xff]
    %v3312 = vld [vmem:[#allocation7 + $0x954] sm:$0xff]
    %v3313 = vld [vmem:[#allocation7 + $0x95c] sm:$0xff]
    %v3314 = vld [vmem:[#allocation7 + $0x964] sm:$0xf]
    %v3315 = vld [vmem:[#allocation7 + $0x968] sm:$0xff]
    %v3316 = vld [vmem:[#allocation7 + $0x970] sm:$0xff]
    %v3317 = vld [vmem:[#allocation7 + $0x978] sm:$0xff]
    %v3318 = vld [vmem:[#allocation7 + $0x980] sm:$0xf]
    %v3319 = vld [vmem:[#allocation7 + $0x984] sm:$0xff]
    %v3320 = vld [vmem:[#allocation7 + $0x98c] sm:$0xff]
    %v3321 = vld [vmem:[#allocation7 + $0x994] sm:$0xff]
    %v3322 = vld [vmem:[#allocation7 + $0x99c] sm:$0xf]
    %v3323 = vld [vmem:[#allocation7 + $0x9a0] sm:$0xff]
    %v3324 = vld [vmem:[#allocation7 + $0x9a8] sm:$0xff]
    %v3325 = vld [vmem:[#allocation7 + $0x9b0] sm:$0xff]
    %v3326 = vld [vmem:[#allocation7 + $0x9b8] sm:$0xf]
    %v3327 = vld [vmem:[#allocation7 + $0x9bc] sm:$0xff]
    %v3328 = vld [vmem:[#allocation7 + $0x9c4] sm:$0xff]
    %v3329 = vld [vmem:[#allocation7 + $0x9cc] sm:$0xff]
    %v3330 = vld [vmem:[#allocation7 + $0x9d4] sm:$0xf]
    %v3331 = vld [vmem:[#allocation7 + $0x9d8] sm:$0xff]
    %v3332 = vld [vmem:[#allocation7 + $0x9e0] sm:$0xff]
    %v3333 = vld [vmem:[#allocation7 + $0x9e8] sm:$0xff]
    %v3334 = vld [vmem:[#allocation7 + $0x9f0] sm:$0xf]
    %v3335 = vld [vmem:[#allocation7 + $0x9f4] sm:$0xff]
    %v3336 = vld [vmem:[#allocation7 + $0x9fc] sm:$0xff]
    %v3337 = vld [vmem:[#allocation7 + $0xa04] sm:$0xff]
    %v3338 = vld [vmem:[#allocation7 + $0xa0c] sm:$0xf]
    %v3339 = vld [vmem:[#allocation7 + $0xa10] sm:$0xff]
    %v3340 = vld [vmem:[#allocation7 + $0xa18] sm:$0xff]
    %v3341 = vld [vmem:[#allocation7 + $0xa20] sm:$0xff]
    %v3342 = vld [vmem:[#allocation7 + $0xa28] sm:$0xf]
    %v3343 = vld [vmem:[#allocation7 + $0xa2c] sm:$0xff]
    %v3344 = vld [vmem:[#allocation7 + $0xa34] sm:$0xff]
    %v3345 = vld [vmem:[#allocation7 + $0xa3c] sm:$0xff]
    %v3346 = vld [vmem:[#allocation7 + $0xa44] sm:$0xf]
    %v3347 = vld [vmem:[#allocation7 + $0xa48] sm:$0xff]
    %v3348 = vld [vmem:[#allocation7 + $0xa50] sm:$0xff]
    %v3349 = vld [vmem:[#allocation7 + $0xa58] sm:$0xff]
    %v3350 = vld [vmem:[#allocation7 + $0xa60] sm:$0xf]
    %v3351 = vld [vmem:[#allocation7 + $0xa64] sm:$0xff]
    %v3352 = vld [vmem:[#allocation7 + $0xa6c] sm:$0xff]
    %v3353 = vld [vmem:[#allocation7 + $0xa74] sm:$0xff]
    %v3354 = vld [vmem:[#allocation7 + $0xa7c] sm:$0xf]
    %v3355 = vld [vmem:[#allocation7 + $0xa80] sm:$0xff]
    %v3356 = vld [vmem:[#allocation7 + $0xa88] sm:$0xff]
    %v3357 = vld [vmem:[#allocation7 + $0xa90] sm:$0xff]
    %v3358 = vld [vmem:[#allocation7 + $0xa98] sm:$0xf]
    %v3359 = vld [vmem:[#allocation7 + $0xa9c] sm:$0xff]
    %v3360 = vld [vmem:[#allocation7 + $0xaa4] sm:$0xff]
    %v3361 = vld [vmem:[#allocation7 + $0xaac] sm:$0xff]
    %v3362 = vld [vmem:[#allocation7 + $0xab4] sm:$0xf]
    %v3363 = vld [vmem:[#allocation7 + $0xab8] sm:$0xff]
    %v3364 = vld [vmem:[#allocation7 + $0xac0] sm:$0xff]
    %v3365 = vld [vmem:[#allocation7 + $0xac8] sm:$0xff]
    %v3366 = vld [vmem:[#allocation7 + $0xad0] sm:$0xf]
    %v3367 = vld [vmem:[#allocation7 + $0xad4] sm:$0xff]
    %v3368 = vld [vmem:[#allocation7 + $0xadc] sm:$0xff]
    %v3369 = vld [vmem:[#allocation7 + $0xae4] sm:$0xff]
    %v3370 = vld [vmem:[#allocation7 + $0xaec] sm:$0xf]
    %v3371 = vld [vmem:[#allocation7 + $0xaf0] sm:$0xff]
    %v3372 = vld [vmem:[#allocation7 + $0xaf8] sm:$0xff]
    %v3373 = vld [vmem:[#allocation7 + $0xb00] sm:$0xff]
    %v3374 = vld [vmem:[#allocation7 + $0xb08] sm:$0xf]
    %v3375 = vld [vmem:[#allocation7 + $0xb0c] sm:$0xff]
    %v3376 = vld [vmem:[#allocation7 + $0xb14] sm:$0xff]
    %v3377 = vld [vmem:[#allocation7 + $0xb1c] sm:$0xff]
    %v3378 = vld [vmem:[#allocation7 + $0xb24] sm:$0xf]
    %v3379 = vld [vmem:[#allocation7 + $0xb28] sm:$0xff]
    %v3380 = vld [vmem:[#allocation7 + $0xb30] sm:$0xff]
    %v3381 = vld [vmem:[#allocation7 + $0xb38] sm:$0xff]
    %v3382 = vld [vmem:[#allocation7 + $0xb40] sm:$0xf]
    %v3383 = vld [vmem:[#allocation7 + $0xb44] sm:$0xff]
    %v3384 = vld [vmem:[#allocation7 + $0xb4c] sm:$0xff]
    %v3385 = vld [vmem:[#allocation7 + $0xb54] sm:$0xff]
    %v3386 = vld [vmem:[#allocation7 + $0xb5c] sm:$0xf]
    %v3387 = vld [vmem:[#allocation7 + $0xb60] sm:$0xff]
    %v3388 = vld [vmem:[#allocation7 + $0xb68] sm:$0xff]
    %v3389 = vld [vmem:[#allocation7 + $0xb70] sm:$0xff]
    %v3390 = vld [vmem:[#allocation7 + $0xb78] sm:$0xf]
    %v3391 = vld [vmem:[#allocation7 + $0xb7c] sm:$0xff]
    %v3392 = vld [vmem:[#allocation7 + $0xb84] sm:$0xff]
    %v3393 = vld [vmem:[#allocation7 + $0xb8c] sm:$0xff]
    %v3394 = vld [vmem:[#allocation7 + $0xb94] sm:$0xf]
    %v3395 = vld [vmem:[#allocation7 + $0xb98] sm:$0xff]
    %v3396 = vld [vmem:[#allocation7 + $0xba0] sm:$0xff]
    %v3397 = vld [vmem:[#allocation7 + $0xba8] sm:$0xff]
    %v3398 = vld [vmem:[#allocation7 + $0xbb0] sm:$0xf]
    %v3399 = vld [vmem:[#allocation7 + $0xbb4] sm:$0xff]
    %v3400 = vld [vmem:[#allocation7 + $0xbbc] sm:$0xff]
    %v3401 = vld [vmem:[#allocation7 + $0xbc4] sm:$0xff]
    %v3402 = vld [vmem:[#allocation7 + $0xbcc] sm:$0xf]
    %v3403 = vld [vmem:[#allocation7 + $0xbd0] sm:$0xff]
    %v3404 = vld [vmem:[#allocation7 + $0xbd8] sm:$0xff]
    %v3405 = vld [vmem:[#allocation7 + $0xbe0] sm:$0xff]
    %v3406 = vld [vmem:[#allocation7 + $0xbe8] sm:$0xf]
    %v3407 = vld [vmem:[#allocation7 + $0xbec] sm:$0xff]
    %v3408 = vld [vmem:[#allocation7 + $0xbf4] sm:$0xff]
    %v3409 = vld [vmem:[#allocation7 + $0xbfc] sm:$0xff]
    %v3410 = vld [vmem:[#allocation7 + $0xc04] sm:$0xf]
    %v3411 = vld [vmem:[#allocation7 + $0xc08] sm:$0xff]
    %v3412 = vld [vmem:[#allocation7 + $0xc10] sm:$0xff]
    %v3413 = vld [vmem:[#allocation7 + $0xc18] sm:$0xff]
    %v3414 = vld [vmem:[#allocation7 + $0xc20] sm:$0xf]
    %v3415 = vld [vmem:[#allocation7 + $0xc24] sm:$0xff]
    %v3416 = vld [vmem:[#allocation7 + $0xc2c] sm:$0xff]
    %v3417 = vld [vmem:[#allocation7 + $0xc34] sm:$0xff]
    %v3418 = vld [vmem:[#allocation7 + $0xc3c] sm:$0xf]
    %v3419 = vld [vmem:[#allocation8] sm:$0xff]
    %v3421 = vperm.slane %v3419, 0
    %v3422 = vperm.slane %v3419, 1
    %v3423 = vperm.slane %v3419, 2
    %v3424 = vperm.slane %v3419, 3
    %v3425 = vperm.slane %v3419, 4
    %v3426 = vperm.slane %v3419, 5
    %v3427 = vperm.slane %v3419, 6
    %v3883 = vunpack.c.l.b16 %v2971
    %v3884 = vunpack.c.h.b16 %v2971
    %v3885 = vunpack.c.l.b16 %v2972
    %v3886 = vunpack.c.h.b16 %v2972
    %v3887 = vunpack.c.l.b16 %v2973
    %v3888 = vunpack.c.h.b16 %v2973
    %v3889 = vunpack.c.l.b16 %v2974
    %v3890 = vunpack.c.l.b16 %v2975
    %v3891 = vunpack.c.h.b16 %v2975
    %v3892 = vunpack.c.l.b16 %v2976
    %v3893 = vunpack.c.h.b16 %v2976
    %v3894 = vunpack.c.l.b16 %v2977
    %v3895 = vunpack.c.h.b16 %v2977
    %v3896 = vunpack.c.l.b16 %v2978
    %v3897 = vunpack.c.l.b16 %v2979
    %v3898 = vunpack.c.h.b16 %v2979
    %v3899 = vunpack.c.l.b16 %v2980
    %v3900 = vunpack.c.h.b16 %v2980
    %v3901 = vunpack.c.l.b16 %v2981
    %v3902 = vunpack.c.h.b16 %v2981
    %v3903 = vunpack.c.l.b16 %v2982
    %v3904 = vunpack.c.l.b16 %v2983
    %v3905 = vunpack.c.h.b16 %v2983
    %v3906 = vunpack.c.l.b16 %v2984
    %v3907 = vunpack.c.h.b16 %v2984
    %v3908 = vunpack.c.l.b16 %v2985
    %v3909 = vunpack.c.h.b16 %v2985
    %v3910 = vunpack.c.l.b16 %v2986
    %v3911 = vunpack.c.l.b16 %v2987
    %v3912 = vunpack.c.h.b16 %v2987
    %v3913 = vunpack.c.l.b16 %v2988
    %v3914 = vunpack.c.h.b16 %v2988
    %v3915 = vunpack.c.l.b16 %v2989
    %v3916 = vunpack.c.h.b16 %v2989
    %v3917 = vunpack.c.l.b16 %v2990
    %v3918 = vunpack.c.l.b16 %v2991
    %v3919 = vunpack.c.h.b16 %v2991
    %v3920 = vunpack.c.l.b16 %v2992
    %v3921 = vunpack.c.h.b16 %v2992
    %v3922 = vunpack.c.l.b16 %v2993
    %v3923 = vunpack.c.h.b16 %v2993
    %v3924 = vunpack.c.l.b16 %v2994
    %v3925 = vunpack.c.l.b16 %v2995
    %v3926 = vunpack.c.h.b16 %v2995
    %v3927 = vunpack.c.l.b16 %v2996
    %v3928 = vunpack.c.h.b16 %v2996
    %v3929 = vunpack.c.l.b16 %v2997
    %v3930 = vunpack.c.h.b16 %v2997
    %v3931 = vunpack.c.l.b16 %v2998
    %v3932 = vunpack.c.l.b16 %v2999
    %v3933 = vunpack.c.h.b16 %v2999
    %v3934 = vunpack.c.l.b16 %v3000
    %v3935 = vunpack.c.h.b16 %v3000
    %v3936 = vunpack.c.l.b16 %v3001
    %v3937 = vunpack.c.h.b16 %v3001
    %v3938 = vunpack.c.l.b16 %v3002
    %v3939 = vunpack.c.l.b16 %v3003
    %v3940 = vunpack.c.h.b16 %v3003
    %v3941 = vunpack.c.l.b16 %v3004
    %v3942 = vunpack.c.h.b16 %v3004
    %v3943 = vunpack.c.l.b16 %v3005
    %v3944 = vunpack.c.h.b16 %v3005
    %v3945 = vunpack.c.l.b16 %v3006
    %v3946 = vunpack.c.l.b16 %v3007
    %v3947 = vunpack.c.h.b16 %v3007
    %v3948 = vunpack.c.l.b16 %v3008
    %v3949 = vunpack.c.h.b16 %v3008
    %v3950 = vunpack.c.l.b16 %v3009
    %v3951 = vunpack.c.h.b16 %v3009
    %v3952 = vunpack.c.l.b16 %v3010
    %v3953 = vunpack.c.l.b16 %v3011
    %v3954 = vunpack.c.h.b16 %v3011
    %v3955 = vunpack.c.l.b16 %v3012
    %v3956 = vunpack.c.h.b16 %v3012
    %v3957 = vunpack.c.l.b16 %v3013
    %v3958 = vunpack.c.h.b16 %v3013
    %v3959 = vunpack.c.l.b16 %v3014
    %v3960 = vunpack.c.l.b16 %v3015
    %v3961 = vunpack.c.h.b16 %v3015
    %v3962 = vunpack.c.l.b16 %v3016
    %v3963 = vunpack.c.h.b16 %v3016
    %v3964 = vunpack.c.l.b16 %v3017
    %v3965 = vunpack.c.h.b16 %v3017
    %v3966 = vunpack.c.l.b16 %v3018
    %v3967 = vunpack.c.l.b16 %v3019
    %v3968 = vunpack.c.h.b16 %v3019
    %v3969 = vunpack.c.l.b16 %v3020
    %v3970 = vunpack.c.h.b16 %v3020
    %v3971 = vunpack.c.l.b16 %v3021
    %v3972 = vunpack.c.h.b16 %v3021
    %v3973 = vunpack.c.l.b16 %v3022
    %v3974 = vunpack.c.l.b16 %v3023
    %v3975 = vunpack.c.h.b16 %v3023
    %v3976 = vunpack.c.l.b16 %v3024
    %v3977 = vunpack.c.h.b16 %v3024
    %v3978 = vunpack.c.l.b16 %v3025
    %v3979 = vunpack.c.h.b16 %v3025
    %v3980 = vunpack.c.l.b16 %v3026
    %v3981 = vunpack.c.l.b16 %v3027
    %v3982 = vunpack.c.h.b16 %v3027
    %v3983 = vunpack.c.l.b16 %v3028
    %v3984 = vunpack.c.h.b16 %v3028
    %v3985 = vunpack.c.l.b16 %v3029
    %v3986 = vunpack.c.h.b16 %v3029
    %v3987 = vunpack.c.l.b16 %v3030
    %v3988 = vunpack.c.l.b16 %v3031
    %v3989 = vunpack.c.h.b16 %v3031
    %v3990 = vunpack.c.l.b16 %v3032
    %v3991 = vunpack.c.h.b16 %v3032
    %v3992 = vunpack.c.l.b16 %v3033
    %v3993 = vunpack.c.h.b16 %v3033
    %v3994 = vunpack.c.l.b16 %v3034
    %v3995 = vunpack.c.l.b16 %v3035
    %v3996 = vunpack.c.h.b16 %v3035
    %v3997 = vunpack.c.l.b16 %v3036
    %v3998 = vunpack.c.h.b16 %v3036
    %v3999 = vunpack.c.l.b16 %v3037
    %v4000 = vunpack.c.h.b16 %v3037
    %v4001 = vunpack.c.l.b16 %v3038
    %v4002 = vunpack.c.l.b16 %v3039
    %v4003 = vunpack.c.h.b16 %v3039
    %v4004 = vunpack.c.l.b16 %v3040
    %v4005 = vunpack.c.h.b16 %v3040
    %v4006 = vunpack.c.l.b16 %v3041
    %v4007 = vunpack.c.h.b16 %v3041
    %v4008 = vunpack.c.l.b16 %v3042
    %v4009 = vunpack.c.l.b16 %v3043
    %v4010 = vunpack.c.h.b16 %v3043
    %v4011 = vunpack.c.l.b16 %v3044
    %v4012 = vunpack.c.h.b16 %v3044
    %v4013 = vunpack.c.l.b16 %v3045
    %v4014 = vunpack.c.h.b16 %v3045
    %v4015 = vunpack.c.l.b16 %v3046
    %v4016 = vunpack.c.l.b16 %v3047
    %v4017 = vunpack.c.h.b16 %v3047
    %v4018 = vunpack.c.l.b16 %v3048
    %v4019 = vunpack.c.h.b16 %v3048
    %v4020 = vunpack.c.l.b16 %v3049
    %v4021 = vunpack.c.h.b16 %v3049
    %v4022 = vunpack.c.l.b16 %v3050
    %v4023 = vunpack.c.l.b16 %v3051
    %v4024 = vunpack.c.h.b16 %v3051
    %v4025 = vunpack.c.l.b16 %v3052
    %v4026 = vunpack.c.h.b16 %v3052
    %v4027 = vunpack.c.l.b16 %v3053
    %v4028 = vunpack.c.h.b16 %v3053
    %v4029 = vunpack.c.l.b16 %v3054
    %v4030 = vunpack.c.l.b16 %v3055
    %v4031 = vunpack.c.h.b16 %v3055
    %v4032 = vunpack.c.l.b16 %v3056
    %v4033 = vunpack.c.h.b16 %v3056
    %v4034 = vunpack.c.l.b16 %v3057
    %v4035 = vunpack.c.h.b16 %v3057
    %v4036 = vunpack.c.l.b16 %v3058
    %v4037 = vunpack.c.l.b16 %v3059
    %v4038 = vunpack.c.h.b16 %v3059
    %v4039 = vunpack.c.l.b16 %v3060
    %v4040 = vunpack.c.h.b16 %v3060
    %v4041 = vunpack.c.l.b16 %v3061
    %v4042 = vunpack.c.h.b16 %v3061
    %v4043 = vunpack.c.l.b16 %v3062
    %v4044 = vunpack.c.l.b16 %v3063
    %v4045 = vunpack.c.h.b16 %v3063
    %v4046 = vunpack.c.l.b16 %v3064
    %v4047 = vunpack.c.h.b16 %v3064
    %v4048 = vunpack.c.l.b16 %v3065
    %v4049 = vunpack.c.h.b16 %v3065
    %v4050 = vunpack.c.l.b16 %v3066
    %v4051 = vunpack.c.l.b16 %v3067
    %v4052 = vunpack.c.h.b16 %v3067
    %v4053 = vunpack.c.l.b16 %v3068
    %v4054 = vunpack.c.h.b16 %v3068
    %v4055 = vunpack.c.l.b16 %v3069
    %v4056 = vunpack.c.h.b16 %v3069
    %v4057 = vunpack.c.l.b16 %v3070
    %v4058 = vunpack.c.l.b16 %v3071
    %v4059 = vunpack.c.h.b16 %v3071
    %v4060 = vunpack.c.l.b16 %v3072
    %v4061 = vunpack.c.h.b16 %v3072
    %v4062 = vunpack.c.l.b16 %v3073
    %v4063 = vunpack.c.h.b16 %v3073
    %v4064 = vunpack.c.l.b16 %v3074
    %v4065 = vunpack.c.l.b16 %v3075
    %v4066 = vunpack.c.h.b16 %v3075
    %v4067 = vunpack.c.l.b16 %v3076
    %v4068 = vunpack.c.h.b16 %v3076
    %v4069 = vunpack.c.l.b16 %v3077
    %v4070 = vunpack.c.h.b16 %v3077
    %v4071 = vunpack.c.l.b16 %v3078
    %v4072 = vunpack.c.l.b16 %v3079
    %v4073 = vunpack.c.h.b16 %v3079
    %v4074 = vunpack.c.l.b16 %v3080
    %v4075 = vunpack.c.h.b16 %v3080
    %v4076 = vunpack.c.l.b16 %v3081
    %v4077 = vunpack.c.h.b16 %v3081
    %v4078 = vunpack.c.l.b16 %v3082
    %v4079 = vunpack.c.l.b16 %v3083
    %v4080 = vunpack.c.h.b16 %v3083
    %v4081 = vunpack.c.l.b16 %v3084
    %v4082 = vunpack.c.h.b16 %v3084
    %v4083 = vunpack.c.l.b16 %v3085
    %v4084 = vunpack.c.h.b16 %v3085
    %v4085 = vunpack.c.l.b16 %v3086
    %v4086 = vunpack.c.l.b16 %v3087
    %v4087 = vunpack.c.h.b16 %v3087
    %v4088 = vunpack.c.l.b16 %v3088
    %v4089 = vunpack.c.h.b16 %v3088
    %v4090 = vunpack.c.l.b16 %v3089
    %v4091 = vunpack.c.h.b16 %v3089
    %v4092 = vunpack.c.l.b16 %v3090
    %v4093 = vunpack.c.l.b16 %v3091
    %v4094 = vunpack.c.h.b16 %v3091
    %v4095 = vunpack.c.l.b16 %v3092
    %v4096 = vunpack.c.h.b16 %v3092
    %v4097 = vunpack.c.l.b16 %v3093
    %v4098 = vunpack.c.h.b16 %v3093
    %v4099 = vunpack.c.l.b16 %v3094
    %v4100 = vunpack.c.l.b16 %v3095
    %v4101 = vunpack.c.h.b16 %v3095
    %v4102 = vunpack.c.l.b16 %v3096
    %v4103 = vunpack.c.h.b16 %v3096
    %v4104 = vunpack.c.l.b16 %v3097
    %v4105 = vunpack.c.h.b16 %v3097
    %v4106 = vunpack.c.l.b16 %v3098
    %v4107 = vunpack.c.l.b16 %v3099
    %v4108 = vunpack.c.h.b16 %v3099
    %v4109 = vunpack.c.l.b16 %v3100
    %v4110 = vunpack.c.h.b16 %v3100
    %v4111 = vunpack.c.l.b16 %v3101
    %v4112 = vunpack.c.h.b16 %v3101
    %v4113 = vunpack.c.l.b16 %v3102
    %v4114 = vunpack.c.l.b16 %v3103
    %v4115 = vunpack.c.h.b16 %v3103
    %v4116 = vunpack.c.l.b16 %v3104
    %v4117 = vunpack.c.h.b16 %v3104
    %v4118 = vunpack.c.l.b16 %v3105
    %v4119 = vunpack.c.h.b16 %v3105
    %v4120 = vunpack.c.l.b16 %v3106
    %v4121 = vunpack.c.l.b16 %v3107
    %v4122 = vunpack.c.h.b16 %v3107
    %v4123 = vunpack.c.l.b16 %v3108
    %v4124 = vunpack.c.h.b16 %v3108
    %v4125 = vunpack.c.l.b16 %v3109
    %v4126 = vunpack.c.h.b16 %v3109
    %v4127 = vunpack.c.l.b16 %v3110
    %v4128 = vunpack.c.l.b16 %v3111
    %v4129 = vunpack.c.h.b16 %v3111
    %v4130 = vunpack.c.l.b16 %v3112
    %v4131 = vunpack.c.h.b16 %v3112
    %v4132 = vunpack.c.l.b16 %v3113
    %v4133 = vunpack.c.h.b16 %v3113
    %v4134 = vunpack.c.l.b16 %v3114
    %v4135 = vunpack.c.l.b16 %v3115
    %v4136 = vunpack.c.h.b16 %v3115
    %v4137 = vunpack.c.l.b16 %v3116
    %v4138 = vunpack.c.h.b16 %v3116
    %v4139 = vunpack.c.l.b16 %v3117
    %v4140 = vunpack.c.h.b16 %v3117
    %v4141 = vunpack.c.l.b16 %v3118
    %v4142 = vunpack.c.l.b16 %v3119
    %v4143 = vunpack.c.h.b16 %v3119
    %v4144 = vunpack.c.l.b16 %v3120
    %v4145 = vunpack.c.h.b16 %v3120
    %v4146 = vunpack.c.l.b16 %v3121
    %v4147 = vunpack.c.h.b16 %v3121
    %v4148 = vunpack.c.l.b16 %v3122
    %v4149 = vunpack.c.l.b16 %v3123
    %v4150 = vunpack.c.h.b16 %v3123
    %v4151 = vunpack.c.l.b16 %v3124
    %v4152 = vunpack.c.h.b16 %v3124
    %v4153 = vunpack.c.l.b16 %v3125
    %v4154 = vunpack.c.h.b16 %v3125
    %v4155 = vunpack.c.l.b16 %v3126
    %v4156 = vunpack.c.l.b16 %v3127
    %v4157 = vunpack.c.h.b16 %v3127
    %v4158 = vunpack.c.l.b16 %v3128
    %v4159 = vunpack.c.h.b16 %v3128
    %v4160 = vunpack.c.l.b16 %v3129
    %v4161 = vunpack.c.h.b16 %v3129
    %v4162 = vunpack.c.l.b16 %v3130
    %v4163 = vunpack.c.l.b16 %v3131
    %v4164 = vunpack.c.h.b16 %v3131
    %v4165 = vunpack.c.l.b16 %v3132
    %v4166 = vunpack.c.h.b16 %v3132
    %v4167 = vunpack.c.l.b16 %v3133
    %v4168 = vunpack.c.h.b16 %v3133
    %v4169 = vunpack.c.l.b16 %v3134
    %v4170 = vunpack.c.l.b16 %v3135
    %v4171 = vunpack.c.h.b16 %v3135
    %v4172 = vunpack.c.l.b16 %v3136
    %v4173 = vunpack.c.h.b16 %v3136
    %v4174 = vunpack.c.l.b16 %v3137
    %v4175 = vunpack.c.h.b16 %v3137
    %v4176 = vunpack.c.l.b16 %v3138
    %v4177 = vunpack.c.l.b16 %v3139
    %v4178 = vunpack.c.h.b16 %v3139
    %v4179 = vunpack.c.l.b16 %v3140
    %v4180 = vunpack.c.h.b16 %v3140
    %v4181 = vunpack.c.l.b16 %v3141
    %v4182 = vunpack.c.h.b16 %v3141
    %v4183 = vunpack.c.l.b16 %v3142
    %v4184 = vunpack.c.l.b16 %v3143
    %v4185 = vunpack.c.h.b16 %v3143
    %v4186 = vunpack.c.l.b16 %v3144
    %v4187 = vunpack.c.h.b16 %v3144
    %v4188 = vunpack.c.l.b16 %v3145
    %v4189 = vunpack.c.h.b16 %v3145
    %v4190 = vunpack.c.l.b16 %v3146
    %v4191 = vunpack.c.l.b16 %v3147
    %v4192 = vunpack.c.h.b16 %v3147
    %v4193 = vunpack.c.l.b16 %v3148
    %v4194 = vunpack.c.h.b16 %v3148
    %v4195 = vunpack.c.l.b16 %v3149
    %v4196 = vunpack.c.h.b16 %v3149
    %v4197 = vunpack.c.l.b16 %v3150
    %v4198 = vunpack.c.l.b16 %v3151
    %v4199 = vunpack.c.h.b16 %v3151
    %v4200 = vunpack.c.l.b16 %v3152
    %v4201 = vunpack.c.h.b16 %v3152
    %v4202 = vunpack.c.l.b16 %v3153
    %v4203 = vunpack.c.h.b16 %v3153
    %v4204 = vunpack.c.l.b16 %v3154
    %v4205 = vunpack.c.l.b16 %v3155
    %v4206 = vunpack.c.h.b16 %v3155
    %v4207 = vunpack.c.l.b16 %v3156
    %v4208 = vunpack.c.h.b16 %v3156
    %v4209 = vunpack.c.l.b16 %v3157
    %v4210 = vunpack.c.h.b16 %v3157
    %v4211 = vunpack.c.l.b16 %v3158
    %v4212 = vunpack.c.l.b16 %v3159
    %v4213 = vunpack.c.h.b16 %v3159
    %v4214 = vunpack.c.l.b16 %v3160
    %v4215 = vunpack.c.h.b16 %v3160
    %v4216 = vunpack.c.l.b16 %v3161
    %v4217 = vunpack.c.h.b16 %v3161
    %v4218 = vunpack.c.l.b16 %v3162
    %v4219 = vunpack.c.l.b16 %v3163
    %v4220 = vunpack.c.h.b16 %v3163
    %v4221 = vunpack.c.l.b16 %v3164
    %v4222 = vunpack.c.h.b16 %v3164
    %v4223 = vunpack.c.l.b16 %v3165
    %v4224 = vunpack.c.h.b16 %v3165
    %v4225 = vunpack.c.l.b16 %v3166
    %v4226 = vunpack.c.l.b16 %v3167
    %v4227 = vunpack.c.h.b16 %v3167
    %v4228 = vunpack.c.l.b16 %v3168
    %v4229 = vunpack.c.h.b16 %v3168
    %v4230 = vunpack.c.l.b16 %v3169
    %v4231 = vunpack.c.h.b16 %v3169
    %v4232 = vunpack.c.l.b16 %v3170
    %v4233 = vunpack.c.l.b16 %v3171
    %v4234 = vunpack.c.h.b16 %v3171
    %v4235 = vunpack.c.l.b16 %v3172
    %v4236 = vunpack.c.h.b16 %v3172
    %v4237 = vunpack.c.l.b16 %v3173
    %v4238 = vunpack.c.h.b16 %v3173
    %v4239 = vunpack.c.l.b16 %v3174
    %v4240 = vunpack.c.l.b16 %v3175
    %v4241 = vunpack.c.h.b16 %v3175
    %v4242 = vunpack.c.l.b16 %v3176
    %v4243 = vunpack.c.h.b16 %v3176
    %v4244 = vunpack.c.l.b16 %v3177
    %v4245 = vunpack.c.h.b16 %v3177
    %v4246 = vunpack.c.l.b16 %v3178
    %v4247 = vunpack.c.l.b16 %v3179
    %v4248 = vunpack.c.h.b16 %v3179
    %v4249 = vunpack.c.l.b16 %v3180
    %v4250 = vunpack.c.h.b16 %v3180
    %v4251 = vunpack.c.l.b16 %v3181
    %v4252 = vunpack.c.h.b16 %v3181
    %v4253 = vunpack.c.l.b16 %v3182
    %v4254 = vunpack.c.l.b16 %v3183
    %v4255 = vunpack.c.h.b16 %v3183
    %v4256 = vunpack.c.l.b16 %v3184
    %v4257 = vunpack.c.h.b16 %v3184
    %v4258 = vunpack.c.l.b16 %v3185
    %v4259 = vunpack.c.h.b16 %v3185
    %v4260 = vunpack.c.l.b16 %v3186
    %v4261 = vunpack.c.l.b16 %v3187
    %v4262 = vunpack.c.h.b16 %v3187
    %v4263 = vunpack.c.l.b16 %v3188
    %v4264 = vunpack.c.h.b16 %v3188
    %v4265 = vunpack.c.l.b16 %v3189
    %v4266 = vunpack.c.h.b16 %v3189
    %v4267 = vunpack.c.l.b16 %v3190
    %v4268 = vunpack.c.l.b16 %v3191
    %v4269 = vunpack.c.h.b16 %v3191
    %v4270 = vunpack.c.l.b16 %v3192
    %v4271 = vunpack.c.h.b16 %v3192
    %v4272 = vunpack.c.l.b16 %v3193
    %v4273 = vunpack.c.h.b16 %v3193
    %v4274 = vunpack.c.l.b16 %v3194
    %v4275 = vunpack.c.l.b16 %v3195
    %v4276 = vunpack.c.h.b16 %v3195
    %v4277 = vunpack.c.l.b16 %v3196
    %v4278 = vunpack.c.h.b16 %v3196
    %v4279 = vunpack.c.l.b16 %v3197
    %v4280 = vunpack.c.h.b16 %v3197
    %v4281 = vunpack.c.l.b16 %v3198
    %v4282 = vunpack.c.l.b16 %v3199
    %v4283 = vunpack.c.h.b16 %v3199
    %v4284 = vunpack.c.l.b16 %v3200
    %v4285 = vunpack.c.h.b16 %v3200
    %v4286 = vunpack.c.l.b16 %v3201
    %v4287 = vunpack.c.h.b16 %v3201
    %v4288 = vunpack.c.l.b16 %v3202
    %v4289 = vunpack.c.l.b16 %v3203
    %v4290 = vunpack.c.h.b16 %v3203
    %v4291 = vunpack.c.l.b16 %v3204
    %v4292 = vunpack.c.h.b16 %v3204
    %v4293 = vunpack.c.l.b16 %v3205
    %v4294 = vunpack.c.h.b16 %v3205
    %v4295 = vunpack.c.l.b16 %v3206
    %v4296 = vunpack.c.l.b16 %v3207
    %v4297 = vunpack.c.h.b16 %v3207
    %v4298 = vunpack.c.l.b16 %v3208
    %v4299 = vunpack.c.h.b16 %v3208
    %v4300 = vunpack.c.l.b16 %v3209
    %v4301 = vunpack.c.h.b16 %v3209
    %v4302 = vunpack.c.l.b16 %v3210
    %v4303 = vunpack.c.l.b16 %v3211
    %v4304 = vunpack.c.h.b16 %v3211
    %v4305 = vunpack.c.l.b16 %v3212
    %v4306 = vunpack.c.h.b16 %v3212
    %v4307 = vunpack.c.l.b16 %v3213
    %v4308 = vunpack.c.h.b16 %v3213
    %v4309 = vunpack.c.l.b16 %v3214
    %v4310 = vunpack.c.l.b16 %v3215
    %v4311 = vunpack.c.h.b16 %v3215
    %v4312 = vunpack.c.l.b16 %v3216
    %v4313 = vunpack.c.h.b16 %v3216
    %v4314 = vunpack.c.l.b16 %v3217
    %v4315 = vunpack.c.h.b16 %v3217
    %v4316 = vunpack.c.l.b16 %v3218
    %v4317 = vunpack.c.l.b16 %v3219
    %v4318 = vunpack.c.h.b16 %v3219
    %v4319 = vunpack.c.l.b16 %v3220
    %v4320 = vunpack.c.h.b16 %v3220
    %v4321 = vunpack.c.l.b16 %v3221
    %v4322 = vunpack.c.h.b16 %v3221
    %v4323 = vunpack.c.l.b16 %v3222
    %v4324 = vunpack.c.l.b16 %v3223
    %v4325 = vunpack.c.h.b16 %v3223
    %v4326 = vunpack.c.l.b16 %v3224
    %v4327 = vunpack.c.h.b16 %v3224
    %v4328 = vunpack.c.l.b16 %v3225
    %v4329 = vunpack.c.h.b16 %v3225
    %v4330 = vunpack.c.l.b16 %v3226
    %v4331 = vunpack.c.l.b16 %v3227
    %v4332 = vunpack.c.h.b16 %v3227
    %v4333 = vunpack.c.l.b16 %v3228
    %v4334 = vunpack.c.h.b16 %v3228
    %v4335 = vunpack.c.l.b16 %v3229
    %v4336 = vunpack.c.h.b16 %v3229
    %v4337 = vunpack.c.l.b16 %v3230
    %v4338 = vunpack.c.l.b16 %v3231
    %v4339 = vunpack.c.h.b16 %v3231
    %v4340 = vunpack.c.l.b16 %v3232
    %v4341 = vunpack.c.h.b16 %v3232
    %v4342 = vunpack.c.l.b16 %v3233
    %v4343 = vunpack.c.h.b16 %v3233
    %v4344 = vunpack.c.l.b16 %v3234
    %v4345 = vunpack.c.l.b16 %v3235
    %v4346 = vunpack.c.h.b16 %v3235
    %v4347 = vunpack.c.l.b16 %v3236
    %v4348 = vunpack.c.h.b16 %v3236
    %v4349 = vunpack.c.l.b16 %v3237
    %v4350 = vunpack.c.h.b16 %v3237
    %v4351 = vunpack.c.l.b16 %v3238
    %v4352 = vunpack.c.l.b16 %v3239
    %v4353 = vunpack.c.h.b16 %v3239
    %v4354 = vunpack.c.l.b16 %v3240
    %v4355 = vunpack.c.h.b16 %v3240
    %v4356 = vunpack.c.l.b16 %v3241
    %v4357 = vunpack.c.h.b16 %v3241
    %v4358 = vunpack.c.l.b16 %v3242
    %v4359 = vunpack.c.l.b16 %v3243
    %v4360 = vunpack.c.h.b16 %v3243
    %v4361 = vunpack.c.l.b16 %v3244
    %v4362 = vunpack.c.h.b16 %v3244
    %v4363 = vunpack.c.l.b16 %v3245
    %v4364 = vunpack.c.h.b16 %v3245
    %v4365 = vunpack.c.l.b16 %v3246
    %v4366 = vunpack.c.l.b16 %v3247
    %v4367 = vunpack.c.h.b16 %v3247
    %v4368 = vunpack.c.l.b16 %v3248
    %v4369 = vunpack.c.h.b16 %v3248
    %v4370 = vunpack.c.l.b16 %v3249
    %v4371 = vunpack.c.h.b16 %v3249
    %v4372 = vunpack.c.l.b16 %v3250
    %v4373 = vunpack.c.l.b16 %v3251
    %v4374 = vunpack.c.h.b16 %v3251
    %v4375 = vunpack.c.l.b16 %v3252
    %v4376 = vunpack.c.h.b16 %v3252
    %v4377 = vunpack.c.l.b16 %v3253
    %v4378 = vunpack.c.h.b16 %v3253
    %v4379 = vunpack.c.l.b16 %v3254
    %v4380 = vunpack.c.l.b16 %v3255
    %v4381 = vunpack.c.h.b16 %v3255
    %v4382 = vunpack.c.l.b16 %v3256
    %v4383 = vunpack.c.h.b16 %v3256
    %v4384 = vunpack.c.l.b16 %v3257
    %v4385 = vunpack.c.h.b16 %v3257
    %v4386 = vunpack.c.l.b16 %v3258
    %v4387 = vunpack.c.l.b16 %v3259
    %v4388 = vunpack.c.h.b16 %v3259
    %v4389 = vunpack.c.l.b16 %v3260
    %v4390 = vunpack.c.h.b16 %v3260
    %v4391 = vunpack.c.l.b16 %v3261
    %v4392 = vunpack.c.h.b16 %v3261
    %v4393 = vunpack.c.l.b16 %v3262
    %v4394 = vunpack.c.l.b16 %v3263
    %v4395 = vunpack.c.h.b16 %v3263
    %v4396 = vunpack.c.l.b16 %v3264
    %v4397 = vunpack.c.h.b16 %v3264
    %v4398 = vunpack.c.l.b16 %v3265
    %v4399 = vunpack.c.h.b16 %v3265
    %v4400 = vunpack.c.l.b16 %v3266
    %v4401 = vunpack.c.l.b16 %v3267
    %v4402 = vunpack.c.h.b16 %v3267
    %v4403 = vunpack.c.l.b16 %v3268
    %v4404 = vunpack.c.h.b16 %v3268
    %v4405 = vunpack.c.l.b16 %v3269
    %v4406 = vunpack.c.h.b16 %v3269
    %v4407 = vunpack.c.l.b16 %v3270
    %v4408 = vunpack.c.l.b16 %v3271
    %v4409 = vunpack.c.h.b16 %v3271
    %v4410 = vunpack.c.l.b16 %v3272
    %v4411 = vunpack.c.h.b16 %v3272
    %v4412 = vunpack.c.l.b16 %v3273
    %v4413 = vunpack.c.h.b16 %v3273
    %v4414 = vunpack.c.l.b16 %v3274
    %v4415 = vunpack.c.l.b16 %v3275
    %v4416 = vunpack.c.h.b16 %v3275
    %v4417 = vunpack.c.l.b16 %v3276
    %v4418 = vunpack.c.h.b16 %v3276
    %v4419 = vunpack.c.l.b16 %v3277
    %v4420 = vunpack.c.h.b16 %v3277
    %v4421 = vunpack.c.l.b16 %v3278
    %v4422 = vunpack.c.l.b16 %v3279
    %v4423 = vunpack.c.h.b16 %v3279
    %v4424 = vunpack.c.l.b16 %v3280
    %v4425 = vunpack.c.h.b16 %v3280
    %v4426 = vunpack.c.l.b16 %v3281
    %v4427 = vunpack.c.h.b16 %v3281
    %v4428 = vunpack.c.l.b16 %v3282
    %v4429 = vunpack.c.l.b16 %v3283
    %v4430 = vunpack.c.h.b16 %v3283
    %v4431 = vunpack.c.l.b16 %v3284
    %v4432 = vunpack.c.h.b16 %v3284
    %v4433 = vunpack.c.l.b16 %v3285
    %v4434 = vunpack.c.h.b16 %v3285
    %v4435 = vunpack.c.l.b16 %v3286
    %v4436 = vunpack.c.l.b16 %v3287
    %v4437 = vunpack.c.h.b16 %v3287
    %v4438 = vunpack.c.l.b16 %v3288
    %v4439 = vunpack.c.h.b16 %v3288
    %v4440 = vunpack.c.l.b16 %v3289
    %v4441 = vunpack.c.h.b16 %v3289
    %v4442 = vunpack.c.l.b16 %v3290
    %v4443 = vunpack.c.l.b16 %v3291
    %v4444 = vunpack.c.h.b16 %v3291
    %v4445 = vunpack.c.l.b16 %v3292
    %v4446 = vunpack.c.h.b16 %v3292
    %v4447 = vunpack.c.l.b16 %v3293
    %v4448 = vunpack.c.h.b16 %v3293
    %v4449 = vunpack.c.l.b16 %v3294
    %v4450 = vunpack.c.l.b16 %v3295
    %v4451 = vunpack.c.h.b16 %v3295
    %v4452 = vunpack.c.l.b16 %v3296
    %v4453 = vunpack.c.h.b16 %v3296
    %v4454 = vunpack.c.l.b16 %v3297
    %v4455 = vunpack.c.h.b16 %v3297
    %v4456 = vunpack.c.l.b16 %v3298
    %v4457 = vunpack.c.l.b16 %v3299
    %v4458 = vunpack.c.h.b16 %v3299
    %v4459 = vunpack.c.l.b16 %v3300
    %v4460 = vunpack.c.h.b16 %v3300
    %v4461 = vunpack.c.l.b16 %v3301
    %v4462 = vunpack.c.h.b16 %v3301
    %v4463 = vunpack.c.l.b16 %v3302
    %v4464 = vunpack.c.l.b16 %v3303
    %v4465 = vunpack.c.h.b16 %v3303
    %v4466 = vunpack.c.l.b16 %v3304
    %v4467 = vunpack.c.h.b16 %v3304
    %v4468 = vunpack.c.l.b16 %v3305
    %v4469 = vunpack.c.h.b16 %v3305
    %v4470 = vunpack.c.l.b16 %v3306
    %v4471 = vunpack.c.l.b16 %v3307
    %v4472 = vunpack.c.h.b16 %v3307
    %v4473 = vunpack.c.l.b16 %v3308
    %v4474 = vunpack.c.h.b16 %v3308
    %v4475 = vunpack.c.l.b16 %v3309
    %v4476 = vunpack.c.h.b16 %v3309
    %v4477 = vunpack.c.l.b16 %v3310
    %v4478 = vunpack.c.l.b16 %v3311
    %v4479 = vunpack.c.h.b16 %v3311
    %v4480 = vunpack.c.l.b16 %v3312
    %v4481 = vunpack.c.h.b16 %v3312
    %v4482 = vunpack.c.l.b16 %v3313
    %v4483 = vunpack.c.h.b16 %v3313
    %v4484 = vunpack.c.l.b16 %v3314
    %v4485 = vunpack.c.l.b16 %v3315
    %v4486 = vunpack.c.h.b16 %v3315
    %v4487 = vunpack.c.l.b16 %v3316
    %v4488 = vunpack.c.h.b16 %v3316
    %v4489 = vunpack.c.l.b16 %v3317
    %v4490 = vunpack.c.h.b16 %v3317
    %v4491 = vunpack.c.l.b16 %v3318
    %v4492 = vunpack.c.l.b16 %v3319
    %v4493 = vunpack.c.h.b16 %v3319
    %v4494 = vunpack.c.l.b16 %v3320
    %v4495 = vunpack.c.h.b16 %v3320
    %v4496 = vunpack.c.l.b16 %v3321
    %v4497 = vunpack.c.h.b16 %v3321
    %v4498 = vunpack.c.l.b16 %v3322
    %v4499 = vunpack.c.l.b16 %v3323
    %v4500 = vunpack.c.h.b16 %v3323
    %v4501 = vunpack.c.l.b16 %v3324
    %v4502 = vunpack.c.h.b16 %v3324
    %v4503 = vunpack.c.l.b16 %v3325
    %v4504 = vunpack.c.h.b16 %v3325
    %v4505 = vunpack.c.l.b16 %v3326
    %v4506 = vunpack.c.l.b16 %v3327
    %v4507 = vunpack.c.h.b16 %v3327
    %v4508 = vunpack.c.l.b16 %v3328
    %v4509 = vunpack.c.h.b16 %v3328
    %v4510 = vunpack.c.l.b16 %v3329
    %v4511 = vunpack.c.h.b16 %v3329
    %v4512 = vunpack.c.l.b16 %v3330
    %v4513 = vunpack.c.l.b16 %v3331
    %v4514 = vunpack.c.h.b16 %v3331
    %v4515 = vunpack.c.l.b16 %v3332
    %v4516 = vunpack.c.h.b16 %v3332
    %v4517 = vunpack.c.l.b16 %v3333
    %v4518 = vunpack.c.h.b16 %v3333
    %v4519 = vunpack.c.l.b16 %v3334
    %v4520 = vunpack.c.l.b16 %v3335
    %v4521 = vunpack.c.h.b16 %v3335
    %v4522 = vunpack.c.l.b16 %v3336
    %v4523 = vunpack.c.h.b16 %v3336
    %v4524 = vunpack.c.l.b16 %v3337
    %v4525 = vunpack.c.h.b16 %v3337
    %v4526 = vunpack.c.l.b16 %v3338
    %v4527 = vunpack.c.l.b16 %v3339
    %v4528 = vunpack.c.h.b16 %v3339
    %v4529 = vunpack.c.l.b16 %v3340
    %v4530 = vunpack.c.h.b16 %v3340
    %v4531 = vunpack.c.l.b16 %v3341
    %v4532 = vunpack.c.h.b16 %v3341
    %v4533 = vunpack.c.l.b16 %v3342
    %v4534 = vunpack.c.l.b16 %v3343
    %v4535 = vunpack.c.h.b16 %v3343
    %v4536 = vunpack.c.l.b16 %v3344
    %v4537 = vunpack.c.h.b16 %v3344
    %v4538 = vunpack.c.l.b16 %v3345
    %v4539 = vunpack.c.h.b16 %v3345
    %v4540 = vunpack.c.l.b16 %v3346
    %v4541 = vunpack.c.l.b16 %v3347
    %v4542 = vunpack.c.h.b16 %v3347
    %v4543 = vunpack.c.l.b16 %v3348
    %v4544 = vunpack.c.h.b16 %v3348
    %v4545 = vunpack.c.l.b16 %v3349
    %v4546 = vunpack.c.h.b16 %v3349
    %v4547 = vunpack.c.l.b16 %v3350
    %v4548 = vunpack.c.l.b16 %v3351
    %v4549 = vunpack.c.h.b16 %v3351
    %v4550 = vunpack.c.l.b16 %v3352
    %v4551 = vunpack.c.h.b16 %v3352
    %v4552 = vunpack.c.l.b16 %v3353
    %v4553 = vunpack.c.h.b16 %v3353
    %v4554 = vunpack.c.l.b16 %v3354
    %v4555 = vunpack.c.l.b16 %v3355
    %v4556 = vunpack.c.h.b16 %v3355
    %v4557 = vunpack.c.l.b16 %v3356
    %v4558 = vunpack.c.h.b16 %v3356
    %v4559 = vunpack.c.l.b16 %v3357
    %v4560 = vunpack.c.h.b16 %v3357
    %v4561 = vunpack.c.l.b16 %v3358
    %v4562 = vunpack.c.l.b16 %v3359
    %v4563 = vunpack.c.h.b16 %v3359
    %v4564 = vunpack.c.l.b16 %v3360
    %v4565 = vunpack.c.h.b16 %v3360
    %v4566 = vunpack.c.l.b16 %v3361
    %v4567 = vunpack.c.h.b16 %v3361
    %v4568 = vunpack.c.l.b16 %v3362
    %v4569 = vunpack.c.l.b16 %v3363
    %v4570 = vunpack.c.h.b16 %v3363
    %v4571 = vunpack.c.l.b16 %v3364
    %v4572 = vunpack.c.h.b16 %v3364
    %v4573 = vunpack.c.l.b16 %v3365
    %v4574 = vunpack.c.h.b16 %v3365
    %v4575 = vunpack.c.l.b16 %v3366
    %v4576 = vunpack.c.l.b16 %v3367
    %v4577 = vunpack.c.h.b16 %v3367
    %v4578 = vunpack.c.l.b16 %v3368
    %v4579 = vunpack.c.h.b16 %v3368
    %v4580 = vunpack.c.l.b16 %v3369
    %v4581 = vunpack.c.h.b16 %v3369
    %v4582 = vunpack.c.l.b16 %v3370
    %v4583 = vunpack.c.l.b16 %v3371
    %v4584 = vunpack.c.h.b16 %v3371
    %v4585 = vunpack.c.l.b16 %v3372
    %v4586 = vunpack.c.h.b16 %v3372
    %v4587 = vunpack.c.l.b16 %v3373
    %v4588 = vunpack.c.h.b16 %v3373
    %v4589 = vunpack.c.l.b16 %v3374
    %v4590 = vunpack.c.l.b16 %v3375
    %v4591 = vunpack.c.h.b16 %v3375
    %v4592 = vunpack.c.l.b16 %v3376
    %v4593 = vunpack.c.h.b16 %v3376
    %v4594 = vunpack.c.l.b16 %v3377
    %v4595 = vunpack.c.h.b16 %v3377
    %v4596 = vunpack.c.l.b16 %v3378
    %v4597 = vunpack.c.l.b16 %v3379
    %v4598 = vunpack.c.h.b16 %v3379
    %v4599 = vunpack.c.l.b16 %v3380
    %v4600 = vunpack.c.h.b16 %v3380
    %v4601 = vunpack.c.l.b16 %v3381
    %v4602 = vunpack.c.h.b16 %v3381
    %v4603 = vunpack.c.l.b16 %v3382
    %v4604 = vunpack.c.l.b16 %v3383
    %v4605 = vunpack.c.h.b16 %v3383
    %v4606 = vunpack.c.l.b16 %v3384
    %v4607 = vunpack.c.h.b16 %v3384
    %v4608 = vunpack.c.l.b16 %v3385
    %v4609 = vunpack.c.h.b16 %v3385
    %v4610 = vunpack.c.l.b16 %v3386
    %v4611 = vunpack.c.l.b16 %v3387
    %v4612 = vunpack.c.h.b16 %v3387
    %v4613 = vunpack.c.l.b16 %v3388
    %v4614 = vunpack.c.h.b16 %v3388
    %v4615 = vunpack.c.l.b16 %v3389
    %v4616 = vunpack.c.h.b16 %v3389
    %v4617 = vunpack.c.l.b16 %v3390
    %v4618 = vunpack.c.l.b16 %v3391
    %v4619 = vunpack.c.h.b16 %v3391
    %v4620 = vunpack.c.l.b16 %v3392
    %v4621 = vunpack.c.h.b16 %v3392
    %v4622 = vunpack.c.l.b16 %v3393
    %v4623 = vunpack.c.h.b16 %v3393
    %v4624 = vunpack.c.l.b16 %v3394
    %v4625 = vunpack.c.l.b16 %v3395
    %v4626 = vunpack.c.h.b16 %v3395
    %v4627 = vunpack.c.l.b16 %v3396
    %v4628 = vunpack.c.h.b16 %v3396
    %v4629 = vunpack.c.l.b16 %v3397
    %v4630 = vunpack.c.h.b16 %v3397
    %v4631 = vunpack.c.l.b16 %v3398
    %v4632 = vunpack.c.l.b16 %v3399
    %v4633 = vunpack.c.h.b16 %v3399
    %v4634 = vunpack.c.l.b16 %v3400
    %v4635 = vunpack.c.h.b16 %v3400
    %v4636 = vunpack.c.l.b16 %v3401
    %v4637 = vunpack.c.h.b16 %v3401
    %v4638 = vunpack.c.l.b16 %v3402
    %v4639 = vunpack.c.l.b16 %v3403
    %v4640 = vunpack.c.h.b16 %v3403
    %v4641 = vunpack.c.l.b16 %v3404
    %v4642 = vunpack.c.h.b16 %v3404
    %v4643 = vunpack.c.l.b16 %v3405
    %v4644 = vunpack.c.h.b16 %v3405
    %v4645 = vunpack.c.l.b16 %v3406
    %v4646 = vunpack.c.l.b16 %v3407
    %v4647 = vunpack.c.h.b16 %v3407
    %v4648 = vunpack.c.l.b16 %v3408
    %v4649 = vunpack.c.h.b16 %v3408
    %v4650 = vunpack.c.l.b16 %v3409
    %v4651 = vunpack.c.h.b16 %v3409
    %v4652 = vunpack.c.l.b16 %v3410
    %v4653 = vunpack.c.l.b16 %v3411
    %v4654 = vunpack.c.h.b16 %v3411
    %v4655 = vunpack.c.l.b16 %v3412
    %v4656 = vunpack.c.h.b16 %v3412
    %v4657 = vunpack.c.l.b16 %v3413
    %v4658 = vunpack.c.h.b16 %v3413
    %v4659 = vunpack.c.l.b16 %v3414
    %v4660 = vunpack.c.l.b16 %v3415
    %v4661 = vunpack.c.h.b16 %v3415
    %v4662 = vunpack.c.l.b16 %v3416
    %v4663 = vunpack.c.h.b16 %v3416
    %v4664 = vunpack.c.l.b16 %v3417
    %v4665 = vunpack.c.h.b16 %v3417
    %v4666 = vunpack.c.l.b16 %v3418
    %v4667 = vpack.c.b16 %v3890, %v3883
    %v4668 = vpack.c.b16 %v3891, %v3884
    %v4669 = vpack.c.b16 %v3892, %v3885
    %v4670 = vpack.c.b16 %v3893, %v3886
    %v4671 = vpack.c.b16 %v3894, %v3887
    %v4672 = vpack.c.b16 %v3895, %v3888
    %v4673 = vpack.c.b16 %v3896, %v3889
    %v4674 = vpack.c.b16 %v3904, %v3897
    %v4675 = vpack.c.b16 %v3905, %v3898
    %v4676 = vpack.c.b16 %v3906, %v3899
    %v4677 = vpack.c.b16 %v3907, %v3900
    %v4678 = vpack.c.b16 %v3908, %v3901
    %v4679 = vpack.c.b16 %v3909, %v3902
    %v4680 = vpack.c.b16 %v3910, %v3903
    %v4681 = vpack.c.b16 %v3918, %v3911
    %v4682 = vpack.c.b16 %v3919, %v3912
    %v4683 = vpack.c.b16 %v3920, %v3913
    %v4684 = vpack.c.b16 %v3921, %v3914
    %v4685 = vpack.c.b16 %v3922, %v3915
    %v4686 = vpack.c.b16 %v3923, %v3916
    %v4687 = vpack.c.b16 %v3924, %v3917
    %v4688 = vpack.c.b16 %v3932, %v3925
    %v4689 = vpack.c.b16 %v3933, %v3926
    %v4690 = vpack.c.b16 %v3934, %v3927
    %v4691 = vpack.c.b16 %v3935, %v3928
    %v4692 = vpack.c.b16 %v3936, %v3929
    %v4693 = vpack.c.b16 %v3937, %v3930
    %v4694 = vpack.c.b16 %v3938, %v3931
    %v4695 = vpack.c.b16 %v3946, %v3939
    %v4696 = vpack.c.b16 %v3947, %v3940
    %v4697 = vpack.c.b16 %v3948, %v3941
    %v4698 = vpack.c.b16 %v3949, %v3942
    %v4699 = vpack.c.b16 %v3950, %v3943
    %v4700 = vpack.c.b16 %v3951, %v3944
    %v4701 = vpack.c.b16 %v3952, %v3945
    %v4702 = vpack.c.b16 %v3960, %v3953
    %v4703 = vpack.c.b16 %v3961, %v3954
    %v4704 = vpack.c.b16 %v3962, %v3955
    %v4705 = vpack.c.b16 %v3963, %v3956
    %v4706 = vpack.c.b16 %v3964, %v3957
    %v4707 = vpack.c.b16 %v3965, %v3958
    %v4708 = vpack.c.b16 %v3966, %v3959
    %v4709 = vpack.c.b16 %v3974, %v3967
    %v4710 = vpack.c.b16 %v3975, %v3968
    %v4711 = vpack.c.b16 %v3976, %v3969
    %v4712 = vpack.c.b16 %v3977, %v3970
    %v4713 = vpack.c.b16 %v3978, %v3971
    %v4714 = vpack.c.b16 %v3979, %v3972
    %v4715 = vpack.c.b16 %v3980, %v3973
    %v4716 = vpack.c.b16 %v3988, %v3981
    %v4717 = vpack.c.b16 %v3989, %v3982
    %v4718 = vpack.c.b16 %v3990, %v3983
    %v4719 = vpack.c.b16 %v3991, %v3984
    %v4720 = vpack.c.b16 %v3992, %v3985
    %v4721 = vpack.c.b16 %v3993, %v3986
    %v4722 = vpack.c.b16 %v3994, %v3987
    %v4723 = vpack.c.b16 %v4002, %v3995
    %v4724 = vpack.c.b16 %v4003, %v3996
    %v4725 = vpack.c.b16 %v4004, %v3997
    %v4726 = vpack.c.b16 %v4005, %v3998
    %v4727 = vpack.c.b16 %v4006, %v3999
    %v4728 = vpack.c.b16 %v4007, %v4000
    %v4729 = vpack.c.b16 %v4008, %v4001
    %v4730 = vpack.c.b16 %v4016, %v4009
    %v4731 = vpack.c.b16 %v4017, %v4010
    %v4732 = vpack.c.b16 %v4018, %v4011
    %v4733 = vpack.c.b16 %v4019, %v4012
    %v4734 = vpack.c.b16 %v4020, %v4013
    %v4735 = vpack.c.b16 %v4021, %v4014
    %v4736 = vpack.c.b16 %v4022, %v4015
    %v4737 = vpack.c.b16 %v4030, %v4023
    %v4738 = vpack.c.b16 %v4031, %v4024
    %v4739 = vpack.c.b16 %v4032, %v4025
    %v4740 = vpack.c.b16 %v4033, %v4026
    %v4741 = vpack.c.b16 %v4034, %v4027
    %v4742 = vpack.c.b16 %v4035, %v4028
    %v4743 = vpack.c.b16 %v4036, %v4029
    %v4744 = vpack.c.b16 %v4044, %v4037
    %v4745 = vpack.c.b16 %v4045, %v4038
    %v4746 = vpack.c.b16 %v4046, %v4039
    %v4747 = vpack.c.b16 %v4047, %v4040
    %v4748 = vpack.c.b16 %v4048, %v4041
    %v4749 = vpack.c.b16 %v4049, %v4042
    %v4750 = vpack.c.b16 %v4050, %v4043
    %v4751 = vpack.c.b16 %v4058, %v4051
    %v4752 = vpack.c.b16 %v4059, %v4052
    %v4753 = vpack.c.b16 %v4060, %v4053
    %v4754 = vpack.c.b16 %v4061, %v4054
    %v4755 = vpack.c.b16 %v4062, %v4055
    %v4756 = vpack.c.b16 %v4063, %v4056
    %v4757 = vpack.c.b16 %v4064, %v4057
    %v4758 = vpack.c.b16 %v4072, %v4065
    %v4759 = vpack.c.b16 %v4073, %v4066
    %v4760 = vpack.c.b16 %v4074, %v4067
    %v4761 = vpack.c.b16 %v4075, %v4068
    %v4762 = vpack.c.b16 %v4076, %v4069
    %v4763 = vpack.c.b16 %v4077, %v4070
    %v4764 = vpack.c.b16 %v4078, %v4071
    %v4765 = vpack.c.b16 %v4086, %v4079
    %v4766 = vpack.c.b16 %v4087, %v4080
    %v4767 = vpack.c.b16 %v4088, %v4081
    %v4768 = vpack.c.b16 %v4089, %v4082
    %v4769 = vpack.c.b16 %v4090, %v4083
    %v4770 = vpack.c.b16 %v4091, %v4084
    %v4771 = vpack.c.b16 %v4092, %v4085
    %v4772 = vpack.c.b16 %v4100, %v4093
    %v4773 = vpack.c.b16 %v4101, %v4094
    %v4774 = vpack.c.b16 %v4102, %v4095
    %v4775 = vpack.c.b16 %v4103, %v4096
    %v4776 = vpack.c.b16 %v4104, %v4097
    %v4777 = vpack.c.b16 %v4105, %v4098
    %v4778 = vpack.c.b16 %v4106, %v4099
    %v4779 = vpack.c.b16 %v4114, %v4107
    %v4780 = vpack.c.b16 %v4115, %v4108
    %v4781 = vpack.c.b16 %v4116, %v4109
    %v4782 = vpack.c.b16 %v4117, %v4110
    %v4783 = vpack.c.b16 %v4118, %v4111
    %v4784 = vpack.c.b16 %v4119, %v4112
    %v4785 = vpack.c.b16 %v4120, %v4113
    %v4786 = vpack.c.b16 %v4128, %v4121
    %v4787 = vpack.c.b16 %v4129, %v4122
    %v4788 = vpack.c.b16 %v4130, %v4123
    %v4789 = vpack.c.b16 %v4131, %v4124
    %v4790 = vpack.c.b16 %v4132, %v4125
    %v4791 = vpack.c.b16 %v4133, %v4126
    %v4792 = vpack.c.b16 %v4134, %v4127
    %v4793 = vpack.c.b16 %v4142, %v4135
    %v4794 = vpack.c.b16 %v4143, %v4136
    %v4795 = vpack.c.b16 %v4144, %v4137
    %v4796 = vpack.c.b16 %v4145, %v4138
    %v4797 = vpack.c.b16 %v4146, %v4139
    %v4798 = vpack.c.b16 %v4147, %v4140
    %v4799 = vpack.c.b16 %v4148, %v4141
    %v4800 = vpack.c.b16 %v4156, %v4149
    %v4801 = vpack.c.b16 %v4157, %v4150
    %v4802 = vpack.c.b16 %v4158, %v4151
    %v4803 = vpack.c.b16 %v4159, %v4152
    %v4804 = vpack.c.b16 %v4160, %v4153
    %v4805 = vpack.c.b16 %v4161, %v4154
    %v4806 = vpack.c.b16 %v4162, %v4155
    %v4807 = vpack.c.b16 %v4170, %v4163
    %v4808 = vpack.c.b16 %v4171, %v4164
    %v4809 = vpack.c.b16 %v4172, %v4165
    %v4810 = vpack.c.b16 %v4173, %v4166
    %v4811 = vpack.c.b16 %v4174, %v4167
    %v4812 = vpack.c.b16 %v4175, %v4168
    %v4813 = vpack.c.b16 %v4176, %v4169
    %v4814 = vpack.c.b16 %v4184, %v4177
    %v4815 = vpack.c.b16 %v4185, %v4178
    %v4816 = vpack.c.b16 %v4186, %v4179
    %v4817 = vpack.c.b16 %v4187, %v4180
    %v4818 = vpack.c.b16 %v4188, %v4181
    %v4819 = vpack.c.b16 %v4189, %v4182
    %v4820 = vpack.c.b16 %v4190, %v4183
    %v4821 = vpack.c.b16 %v4198, %v4191
    %v4822 = vpack.c.b16 %v4199, %v4192
    %v4823 = vpack.c.b16 %v4200, %v4193
    %v4824 = vpack.c.b16 %v4201, %v4194
    %v4825 = vpack.c.b16 %v4202, %v4195
    %v4826 = vpack.c.b16 %v4203, %v4196
    %v4827 = vpack.c.b16 %v4204, %v4197
    %v4828 = vpack.c.b16 %v4212, %v4205
    %v4829 = vpack.c.b16 %v4213, %v4206
    %v4830 = vpack.c.b16 %v4214, %v4207
    %v4831 = vpack.c.b16 %v4215, %v4208
    %v4832 = vpack.c.b16 %v4216, %v4209
    %v4833 = vpack.c.b16 %v4217, %v4210
    %v4834 = vpack.c.b16 %v4218, %v4211
    %v4835 = vpack.c.b16 %v4226, %v4219
    %v4836 = vpack.c.b16 %v4227, %v4220
    %v4837 = vpack.c.b16 %v4228, %v4221
    %v4838 = vpack.c.b16 %v4229, %v4222
    %v4839 = vpack.c.b16 %v4230, %v4223
    %v4840 = vpack.c.b16 %v4231, %v4224
    %v4841 = vpack.c.b16 %v4232, %v4225
    %v4842 = vpack.c.b16 %v4240, %v4233
    %v4843 = vpack.c.b16 %v4241, %v4234
    %v4844 = vpack.c.b16 %v4242, %v4235
    %v4845 = vpack.c.b16 %v4243, %v4236
    %v4846 = vpack.c.b16 %v4244, %v4237
    %v4847 = vpack.c.b16 %v4245, %v4238
    %v4848 = vpack.c.b16 %v4246, %v4239
    %v4849 = vpack.c.b16 %v4254, %v4247
    %v4850 = vpack.c.b16 %v4255, %v4248
    %v4851 = vpack.c.b16 %v4256, %v4249
    %v4852 = vpack.c.b16 %v4257, %v4250
    %v4853 = vpack.c.b16 %v4258, %v4251
    %v4854 = vpack.c.b16 %v4259, %v4252
    %v4855 = vpack.c.b16 %v4260, %v4253
    %v4856 = vpack.c.b16 %v4268, %v4261
    %v4857 = vpack.c.b16 %v4269, %v4262
    %v4858 = vpack.c.b16 %v4270, %v4263
    %v4859 = vpack.c.b16 %v4271, %v4264
    %v4860 = vpack.c.b16 %v4272, %v4265
    %v4861 = vpack.c.b16 %v4273, %v4266
    %v4862 = vpack.c.b16 %v4274, %v4267
    %v4863 = vpack.c.b16 %v4282, %v4275
    %v4864 = vpack.c.b16 %v4283, %v4276
    %v4865 = vpack.c.b16 %v4284, %v4277
    %v4866 = vpack.c.b16 %v4285, %v4278
    %v4867 = vpack.c.b16 %v4286, %v4279
    %v4868 = vpack.c.b16 %v4287, %v4280
    %v4869 = vpack.c.b16 %v4288, %v4281
    %v4870 = vpack.c.b16 %v4296, %v4289
    %v4871 = vpack.c.b16 %v4297, %v4290
    %v4872 = vpack.c.b16 %v4298, %v4291
    %v4873 = vpack.c.b16 %v4299, %v4292
    %v4874 = vpack.c.b16 %v4300, %v4293
    %v4875 = vpack.c.b16 %v4301, %v4294
    %v4876 = vpack.c.b16 %v4302, %v4295
    %v4877 = vpack.c.b16 %v4310, %v4303
    %v4878 = vpack.c.b16 %v4311, %v4304
    %v4879 = vpack.c.b16 %v4312, %v4305
    %v4880 = vpack.c.b16 %v4313, %v4306
    %v4881 = vpack.c.b16 %v4314, %v4307
    %v4882 = vpack.c.b16 %v4315, %v4308
    %v4883 = vpack.c.b16 %v4316, %v4309
    %v4884 = vpack.c.b16 %v4324, %v4317
    %v4885 = vpack.c.b16 %v4325, %v4318
    %v4886 = vpack.c.b16 %v4326, %v4319
    %v4887 = vpack.c.b16 %v4327, %v4320
    %v4888 = vpack.c.b16 %v4328, %v4321
    %v4889 = vpack.c.b16 %v4329, %v4322
    %v4890 = vpack.c.b16 %v4330, %v4323
    %v4891 = vpack.c.b16 %v4338, %v4331
    %v4892 = vpack.c.b16 %v4339, %v4332
    %v4893 = vpack.c.b16 %v4340, %v4333
    %v4894 = vpack.c.b16 %v4341, %v4334
    %v4895 = vpack.c.b16 %v4342, %v4335
    %v4896 = vpack.c.b16 %v4343, %v4336
    %v4897 = vpack.c.b16 %v4344, %v4337
    %v4898 = vpack.c.b16 %v4352, %v4345
    %v4899 = vpack.c.b16 %v4353, %v4346
    %v4900 = vpack.c.b16 %v4354, %v4347
    %v4901 = vpack.c.b16 %v4355, %v4348
    %v4902 = vpack.c.b16 %v4356, %v4349
    %v4903 = vpack.c.b16 %v4357, %v4350
    %v4904 = vpack.c.b16 %v4358, %v4351
    %v4905 = vpack.c.b16 %v4366, %v4359
    %v4906 = vpack.c.b16 %v4367, %v4360
    %v4907 = vpack.c.b16 %v4368, %v4361
    %v4908 = vpack.c.b16 %v4369, %v4362
    %v4909 = vpack.c.b16 %v4370, %v4363
    %v4910 = vpack.c.b16 %v4371, %v4364
    %v4911 = vpack.c.b16 %v4372, %v4365
    %v4912 = vpack.c.b16 %v4380, %v4373
    %v4913 = vpack.c.b16 %v4381, %v4374
    %v4914 = vpack.c.b16 %v4382, %v4375
    %v4915 = vpack.c.b16 %v4383, %v4376
    %v4916 = vpack.c.b16 %v4384, %v4377
    %v4917 = vpack.c.b16 %v4385, %v4378
    %v4918 = vpack.c.b16 %v4386, %v4379
    %v4919 = vpack.c.b16 %v4394, %v4387
    %v4920 = vpack.c.b16 %v4395, %v4388
    %v4921 = vpack.c.b16 %v4396, %v4389
    %v4922 = vpack.c.b16 %v4397, %v4390
    %v4923 = vpack.c.b16 %v4398, %v4391
    %v4924 = vpack.c.b16 %v4399, %v4392
    %v4925 = vpack.c.b16 %v4400, %v4393
    %v4926 = vpack.c.b16 %v4408, %v4401
    %v4927 = vpack.c.b16 %v4409, %v4402
    %v4928 = vpack.c.b16 %v4410, %v4403
    %v4929 = vpack.c.b16 %v4411, %v4404
    %v4930 = vpack.c.b16 %v4412, %v4405
    %v4931 = vpack.c.b16 %v4413, %v4406
    %v4932 = vpack.c.b16 %v4414, %v4407
    %v4933 = vpack.c.b16 %v4422, %v4415
    %v4934 = vpack.c.b16 %v4423, %v4416
    %v4935 = vpack.c.b16 %v4424, %v4417
    %v4936 = vpack.c.b16 %v4425, %v4418
    %v4937 = vpack.c.b16 %v4426, %v4419
    %v4938 = vpack.c.b16 %v4427, %v4420
    %v4939 = vpack.c.b16 %v4428, %v4421
    %v4940 = vpack.c.b16 %v4436, %v4429
    %v4941 = vpack.c.b16 %v4437, %v4430
    %v4942 = vpack.c.b16 %v4438, %v4431
    %v4943 = vpack.c.b16 %v4439, %v4432
    %v4944 = vpack.c.b16 %v4440, %v4433
    %v4945 = vpack.c.b16 %v4441, %v4434
    %v4946 = vpack.c.b16 %v4442, %v4435
    %v4947 = vpack.c.b16 %v4450, %v4443
    %v4948 = vpack.c.b16 %v4451, %v4444
    %v4949 = vpack.c.b16 %v4452, %v4445
    %v4950 = vpack.c.b16 %v4453, %v4446
    %v4951 = vpack.c.b16 %v4454, %v4447
    %v4952 = vpack.c.b16 %v4455, %v4448
    %v4953 = vpack.c.b16 %v4456, %v4449
    %v4954 = vpack.c.b16 %v4464, %v4457
    %v4955 = vpack.c.b16 %v4465, %v4458
    %v4956 = vpack.c.b16 %v4466, %v4459
    %v4957 = vpack.c.b16 %v4467, %v4460
    %v4958 = vpack.c.b16 %v4468, %v4461
    %v4959 = vpack.c.b16 %v4469, %v4462
    %v4960 = vpack.c.b16 %v4470, %v4463
    %v4961 = vpack.c.b16 %v4478, %v4471
    %v4962 = vpack.c.b16 %v4479, %v4472
    %v4963 = vpack.c.b16 %v4480, %v4473
    %v4964 = vpack.c.b16 %v4481, %v4474
    %v4965 = vpack.c.b16 %v4482, %v4475
    %v4966 = vpack.c.b16 %v4483, %v4476
    %v4967 = vpack.c.b16 %v4484, %v4477
    %v4968 = vpack.c.b16 %v4492, %v4485
    %v4969 = vpack.c.b16 %v4493, %v4486
    %v4970 = vpack.c.b16 %v4494, %v4487
    %v4971 = vpack.c.b16 %v4495, %v4488
    %v4972 = vpack.c.b16 %v4496, %v4489
    %v4973 = vpack.c.b16 %v4497, %v4490
    %v4974 = vpack.c.b16 %v4498, %v4491
    %v4975 = vpack.c.b16 %v4506, %v4499
    %v4976 = vpack.c.b16 %v4507, %v4500
    %v4977 = vpack.c.b16 %v4508, %v4501
    %v4978 = vpack.c.b16 %v4509, %v4502
    %v4979 = vpack.c.b16 %v4510, %v4503
    %v4980 = vpack.c.b16 %v4511, %v4504
    %v4981 = vpack.c.b16 %v4512, %v4505
    %v4982 = vpack.c.b16 %v4520, %v4513
    %v4983 = vpack.c.b16 %v4521, %v4514
    %v4984 = vpack.c.b16 %v4522, %v4515
    %v4985 = vpack.c.b16 %v4523, %v4516
    %v4986 = vpack.c.b16 %v4524, %v4517
    %v4987 = vpack.c.b16 %v4525, %v4518
    %v4988 = vpack.c.b16 %v4526, %v4519
    %v4989 = vpack.c.b16 %v4534, %v4527
    %v4990 = vpack.c.b16 %v4535, %v4528
    %v4991 = vpack.c.b16 %v4536, %v4529
    %v4992 = vpack.c.b16 %v4537, %v4530
    %v4993 = vpack.c.b16 %v4538, %v4531
    %v4994 = vpack.c.b16 %v4539, %v4532
    %v4995 = vpack.c.b16 %v4540, %v4533
    %v4996 = vpack.c.b16 %v4548, %v4541
    %v4997 = vpack.c.b16 %v4549, %v4542
    %v4998 = vpack.c.b16 %v4550, %v4543
    %v4999 = vpack.c.b16 %v4551, %v4544
    %v5000 = vpack.c.b16 %v4552, %v4545
    %v5001 = vpack.c.b16 %v4553, %v4546
    %v5002 = vpack.c.b16 %v4554, %v4547
    %v5003 = vpack.c.b16 %v4562, %v4555
    %v5004 = vpack.c.b16 %v4563, %v4556
    %v5005 = vpack.c.b16 %v4564, %v4557
    %v5006 = vpack.c.b16 %v4565, %v4558
    %v5007 = vpack.c.b16 %v4566, %v4559
    %v5008 = vpack.c.b16 %v4567, %v4560
    %v5009 = vpack.c.b16 %v4568, %v4561
    %v5010 = vpack.c.b16 %v4576, %v4569
    %v5011 = vpack.c.b16 %v4577, %v4570
    %v5012 = vpack.c.b16 %v4578, %v4571
    %v5013 = vpack.c.b16 %v4579, %v4572
    %v5014 = vpack.c.b16 %v4580, %v4573
    %v5015 = vpack.c.b16 %v4581, %v4574
    %v5016 = vpack.c.b16 %v4582, %v4575
    %v5017 = vpack.c.b16 %v4590, %v4583
    %v5018 = vpack.c.b16 %v4591, %v4584
    %v5019 = vpack.c.b16 %v4592, %v4585
    %v5020 = vpack.c.b16 %v4593, %v4586
    %v5021 = vpack.c.b16 %v4594, %v4587
    %v5022 = vpack.c.b16 %v4595, %v4588
    %v5023 = vpack.c.b16 %v4596, %v4589
    %v5024 = vpack.c.b16 %v4604, %v4597
    %v5025 = vpack.c.b16 %v4605, %v4598
    %v5026 = vpack.c.b16 %v4606, %v4599
    %v5027 = vpack.c.b16 %v4607, %v4600
    %v5028 = vpack.c.b16 %v4608, %v4601
    %v5029 = vpack.c.b16 %v4609, %v4602
    %v5030 = vpack.c.b16 %v4610, %v4603
    %v5031 = vpack.c.b16 %v4618, %v4611
    %v5032 = vpack.c.b16 %v4619, %v4612
    %v5033 = vpack.c.b16 %v4620, %v4613
    %v5034 = vpack.c.b16 %v4621, %v4614
    %v5035 = vpack.c.b16 %v4622, %v4615
    %v5036 = vpack.c.b16 %v4623, %v4616
    %v5037 = vpack.c.b16 %v4624, %v4617
    %v5038 = vpack.c.b16 %v4632, %v4625
    %v5039 = vpack.c.b16 %v4633, %v4626
    %v5040 = vpack.c.b16 %v4634, %v4627
    %v5041 = vpack.c.b16 %v4635, %v4628
    %v5042 = vpack.c.b16 %v4636, %v4629
    %v5043 = vpack.c.b16 %v4637, %v4630
    %v5044 = vpack.c.b16 %v4638, %v4631
    %v5045 = vpack.c.b16 %v4646, %v4639
    %v5046 = vpack.c.b16 %v4647, %v4640
    %v5047 = vpack.c.b16 %v4648, %v4641
    %v5048 = vpack.c.b16 %v4649, %v4642
    %v5049 = vpack.c.b16 %v4650, %v4643
    %v5050 = vpack.c.b16 %v4651, %v4644
    %v5051 = vpack.c.b16 %v4652, %v4645
    %v5052 = vpack.c.b16 %v4660, %v4653
    %v5053 = vpack.c.b16 %v4661, %v4654
    %v5054 = vpack.c.b16 %v4662, %v4655
    %v5055 = vpack.c.b16 %v4663, %v4656
    %v5056 = vpack.c.b16 %v4664, %v4657
    %v5057 = vpack.c.b16 %v4665, %v4658
    %v5058 = vpack.c.b16 %v4666, %v4659
    %5451 = vmatpush.bf16.msra.mxu0 %v4716
    %5452 = vmatpush.bf16.msra.mxu0 %v4709
    %5453 = vmatpush.bf16.msra.mxu0 %v4702
    %5454 = vmatpush.bf16.msra.mxu0 %v4695
    %5455 = vmatpush.bf16.msra.mxu0 %v4688
    %5456 = vmatpush.bf16.msra.mxu0 %v4681
    %5457 = vmatpush.bf16.msra.mxu0 %v4674
    %5458 = vmatpush.bf16.msra.mxu0 %v4667
    %5459 = vmatmul.bf16.gmra.mxu0 %v2964
    %v5460 = vpop.f32.mrf.mxu0
    %v5461 = vadd.f32 %v3421, %v5460
    %v5462 = vpop.f32.mrf.mxu0
    %5463 = vdwg.mxu0
    %5464 = vmatpush.bf16.msra.mxu0 %v4772
    %5465 = vmatpush.bf16.msra.mxu0 %v4765
    %5466 = vmatpush.bf16.msra.mxu0 %v4758
    %5467 = vmatpush.bf16.msra.mxu0 %v4751
    %5468 = vmatpush.bf16.msra.mxu0 %v4744
    %5469 = vmatpush.bf16.msra.mxu0 %v4737
    %5470 = vmatpush.bf16.msra.mxu0 %v4730
    %5471 = vmatpush.bf16.msra.mxu0 %v4723
    %5472 = vmatmul.bf16.gmra.mxu0 %v2965
    %v5473 = vpop.f32.mrf.mxu0
    %v5474 = vadd.f32 %v5461, %v5473
    %v5475 = vpop.f32.mrf.mxu0
    %5476 = vdwg.mxu0
    %5477 = vmatpush.bf16.msra.mxu0 %v4828
    %5478 = vmatpush.bf16.msra.mxu0 %v4821
    %5479 = vmatpush.bf16.msra.mxu0 %v4814
    %5480 = vmatpush.bf16.msra.mxu0 %v4807
    %5481 = vmatpush.bf16.msra.mxu0 %v4800
    %5482 = vmatpush.bf16.msra.mxu0 %v4793
    %5483 = vmatpush.bf16.msra.mxu0 %v4786
    %5484 = vmatpush.bf16.msra.mxu0 %v4779
    %5485 = vmatmul.bf16.gmra.mxu0 %v2966
    %v5486 = vpop.f32.mrf.mxu0
    %v5487 = vadd.f32 %v5474, %v5486
    %v5488 = vpop.f32.mrf.mxu0
    %5489 = vdwg.mxu0
    %5490 = vmatpush.bf16.msra.mxu0 %v4884
    %5491 = vmatpush.bf16.msra.mxu0 %v4877
    %5492 = vmatpush.bf16.msra.mxu0 %v4870
    %5493 = vmatpush.bf16.msra.mxu0 %v4863
    %5494 = vmatpush.bf16.msra.mxu0 %v4856
    %5495 = vmatpush.bf16.msra.mxu0 %v4849
    %5496 = vmatpush.bf16.msra.mxu0 %v4842
    %5497 = vmatpush.bf16.msra.mxu0 %v4835
    %5498 = vmatmul.bf16.gmra.mxu0 %v2967
    %v5499 = vpop.f32.mrf.mxu0
    %v5500 = vadd.f32 %v5487, %v5499
    %v5501 = vpop.f32.mrf.mxu0
    %5502 = vdwg.mxu0
    %5503 = vmatpush.bf16.msra.mxu0 %v4940
    %5504 = vmatpush.bf16.msra.mxu0 %v4933
    %5505 = vmatpush.bf16.msra.mxu0 %v4926
    %5506 = vmatpush.bf16.msra.mxu0 %v4919
    %5507 = vmatpush.bf16.msra.mxu0 %v4912
    %5508 = vmatpush.bf16.msra.mxu0 %v4905
    %5509 = vmatpush.bf16.msra.mxu0 %v4898
    %5510 = vmatpush.bf16.msra.mxu0 %v4891
    %5511 = vmatmul.bf16.gmra.mxu0 %v2968
    %v5512 = vpop.f32.mrf.mxu0
    %v5513 = vadd.f32 %v5500, %v5512
    %v5514 = vpop.f32.mrf.mxu0
    %5515 = vdwg.mxu0
    %5516 = vmatpush.bf16.msra.mxu0 %v4996
    %5517 = vmatpush.bf16.msra.mxu0 %v4989
    %5518 = vmatpush.bf16.msra.mxu0 %v4982
    %5519 = vmatpush.bf16.msra.mxu0 %v4975
    %5520 = vmatpush.bf16.msra.mxu0 %v4968
    %5521 = vmatpush.bf16.msra.mxu0 %v4961
    %5522 = vmatpush.bf16.msra.mxu0 %v4954
    %5523 = vmatpush.bf16.msra.mxu0 %v4947
    %5524 = vmatmul.bf16.gmra.mxu0 %v2969
    %v5525 = vpop.f32.mrf.mxu0
    %v5526 = vadd.f32 %v5513, %v5525
    %v5527 = vpop.f32.mrf.mxu0
    %5528 = vdwg.mxu0
    %5529 = vmatpush.bf16.msra.mxu0 %v5052
    %5530 = vmatpush.bf16.msra.mxu0 %v5045
    %5531 = vmatpush.bf16.msra.mxu0 %v5038
    %5532 = vmatpush.bf16.msra.mxu0 %v5031
    %5533 = vmatpush.bf16.msra.mxu0 %v5024
    %5534 = vmatpush.bf16.msra.mxu0 %v5017
    %5535 = vmatpush.bf16.msra.mxu0 %v5010
    %5536 = vmatpush.bf16.msra.mxu0 %v5003
    %5537 = vmatmul.bf16.gmra.mxu0 %v2970
    %v5538 = vpop.f32.mrf.mxu0
    %v5539 = vadd.f32 %v5526, %v5538
    %v5540 = vpop.f32.mrf.mxu0
    %5541 = vdwg.mxu0
    %5542 = vmatpush.bf16.msra.mxu0 %v4717
    %5543 = vmatpush.bf16.msra.mxu0 %v4710
    %5544 = vmatpush.bf16.msra.mxu0 %v4703
    %5545 = vmatpush.bf16.msra.mxu0 %v4696
    %5546 = vmatpush.bf16.msra.mxu0 %v4689
    %5547 = vmatpush.bf16.msra.mxu0 %v4682
    %5548 = vmatpush.bf16.msra.mxu0 %v4675
    %5549 = vmatpush.bf16.msra.mxu0 %v4668
    %5550 = vmatmul.bf16.gmra.mxu0 %v2964
    %v5551 = vpop.f32.mrf.mxu0
    %v5552 = vadd.f32 %v3422, %v5551
    %v5553 = vpop.f32.mrf.mxu0
    %5554 = vdwg.mxu0
    %5555 = vmatpush.bf16.msra.mxu0 %v4773
    %5556 = vmatpush.bf16.msra.mxu0 %v4766
    %5557 = vmatpush.bf16.msra.mxu0 %v4759
    %5558 = vmatpush.bf16.msra.mxu0 %v4752
    %5559 = vmatpush.bf16.msra.mxu0 %v4745
    %5560 = vmatpush.bf16.msra.mxu0 %v4738
    %5561 = vmatpush.bf16.msra.mxu0 %v4731
    %5562 = vmatpush.bf16.msra.mxu0 %v4724
    %5563 = vmatmul.bf16.gmra.mxu0 %v2965
    %v5564 = vpop.f32.mrf.mxu0
    %v5565 = vadd.f32 %v5552, %v5564
    %v5566 = vpop.f32.mrf.mxu0
    %5567 = vdwg.mxu0
    %5568 = vmatpush.bf16.msra.mxu0 %v4829
    %5569 = vmatpush.bf16.msra.mxu0 %v4822
    %5570 = vmatpush.bf16.msra.mxu0 %v4815
    %5571 = vmatpush.bf16.msra.mxu0 %v4808
    %5572 = vmatpush.bf16.msra.mxu0 %v4801
    %5573 = vmatpush.bf16.msra.mxu0 %v4794
    %5574 = vmatpush.bf16.msra.mxu0 %v4787
    %5575 = vmatpush.bf16.msra.mxu0 %v4780
    %5576 = vmatmul.bf16.gmra.mxu0 %v2966
    %v5577 = vpop.f32.mrf.mxu0
    %v5578 = vadd.f32 %v5565, %v5577
    %v5579 = vpop.f32.mrf.mxu0
    %5580 = vdwg.mxu0
    %5581 = vmatpush.bf16.msra.mxu0 %v4885
    %5582 = vmatpush.bf16.msra.mxu0 %v4878
    %5583 = vmatpush.bf16.msra.mxu0 %v4871
    %5584 = vmatpush.bf16.msra.mxu0 %v4864
    %5585 = vmatpush.bf16.msra.mxu0 %v4857
    %5586 = vmatpush.bf16.msra.mxu0 %v4850
    %5587 = vmatpush.bf16.msra.mxu0 %v4843
    %5588 = vmatpush.bf16.msra.mxu0 %v4836
    %5589 = vmatmul.bf16.gmra.mxu0 %v2967
    %v5590 = vpop.f32.mrf.mxu0
    %v5591 = vadd.f32 %v5578, %v5590
    %v5592 = vpop.f32.mrf.mxu0
    %5593 = vdwg.mxu0
    %5594 = vmatpush.bf16.msra.mxu0 %v4941
    %5595 = vmatpush.bf16.msra.mxu0 %v4934
    %5596 = vmatpush.bf16.msra.mxu0 %v4927
    %5597 = vmatpush.bf16.msra.mxu0 %v4920
    %5598 = vmatpush.bf16.msra.mxu0 %v4913
    %5599 = vmatpush.bf16.msra.mxu0 %v4906
    %5600 = vmatpush.bf16.msra.mxu0 %v4899
    %5601 = vmatpush.bf16.msra.mxu0 %v4892
    %5602 = vmatmul.bf16.gmra.mxu0 %v2968
    %v5603 = vpop.f32.mrf.mxu0
    %v5604 = vadd.f32 %v5591, %v5603
    %v5605 = vpop.f32.mrf.mxu0
    %5606 = vdwg.mxu0
    %5607 = vmatpush.bf16.msra.mxu0 %v4997
    %5608 = vmatpush.bf16.msra.mxu0 %v4990
    %5609 = vmatpush.bf16.msra.mxu0 %v4983
    %5610 = vmatpush.bf16.msra.mxu0 %v4976
    %5611 = vmatpush.bf16.msra.mxu0 %v4969
    %5612 = vmatpush.bf16.msra.mxu0 %v4962
    %5613 = vmatpush.bf16.msra.mxu0 %v4955
    %5614 = vmatpush.bf16.msra.mxu0 %v4948
    %5615 = vmatmul.bf16.gmra.mxu0 %v2969
    %v5616 = vpop.f32.mrf.mxu0
    %v5617 = vadd.f32 %v5604, %v5616
    %v5618 = vpop.f32.mrf.mxu0
    %5619 = vdwg.mxu0
    %5620 = vmatpush.bf16.msra.mxu0 %v5053
    %5621 = vmatpush.bf16.msra.mxu0 %v5046
    %5622 = vmatpush.bf16.msra.mxu0 %v5039
    %5623 = vmatpush.bf16.msra.mxu0 %v5032
    %5624 = vmatpush.bf16.msra.mxu0 %v5025
    %5625 = vmatpush.bf16.msra.mxu0 %v5018
    %5626 = vmatpush.bf16.msra.mxu0 %v5011
    %5627 = vmatpush.bf16.msra.mxu0 %v5004
    %5628 = vmatmul.bf16.gmra.mxu0 %v2970
    %v5629 = vpop.f32.mrf.mxu0
    %v5630 = vadd.f32 %v5617, %v5629
    %v5631 = vpop.f32.mrf.mxu0
    %5632 = vdwg.mxu0
    %5633 = vmatpush.bf16.msra.mxu0 %v4718
    %5634 = vmatpush.bf16.msra.mxu0 %v4711
    %5635 = vmatpush.bf16.msra.mxu0 %v4704
    %5636 = vmatpush.bf16.msra.mxu0 %v4697
    %5637 = vmatpush.bf16.msra.mxu0 %v4690
    %5638 = vmatpush.bf16.msra.mxu0 %v4683
    %5639 = vmatpush.bf16.msra.mxu0 %v4676
    %5640 = vmatpush.bf16.msra.mxu0 %v4669
    %5641 = vmatmul.bf16.gmra.mxu0 %v2964
    %v5642 = vpop.f32.mrf.mxu0
    %v5643 = vadd.f32 %v3423, %v5642
    %v5644 = vpop.f32.mrf.mxu0
    %5645 = vdwg.mxu0
    %5646 = vmatpush.bf16.msra.mxu0 %v4774
    %5647 = vmatpush.bf16.msra.mxu0 %v4767
    %5648 = vmatpush.bf16.msra.mxu0 %v4760
    %5649 = vmatpush.bf16.msra.mxu0 %v4753
    %5650 = vmatpush.bf16.msra.mxu0 %v4746
    %5651 = vmatpush.bf16.msra.mxu0 %v4739
    %5652 = vmatpush.bf16.msra.mxu0 %v4732
    %5653 = vmatpush.bf16.msra.mxu0 %v4725
    %5654 = vmatmul.bf16.gmra.mxu0 %v2965
    %v5655 = vpop.f32.mrf.mxu0
    %v5656 = vadd.f32 %v5643, %v5655
    %v5657 = vpop.f32.mrf.mxu0
    %5658 = vdwg.mxu0
    %5659 = vmatpush.bf16.msra.mxu0 %v4830
    %5660 = vmatpush.bf16.msra.mxu0 %v4823
    %5661 = vmatpush.bf16.msra.mxu0 %v4816
    %5662 = vmatpush.bf16.msra.mxu0 %v4809
    %5663 = vmatpush.bf16.msra.mxu0 %v4802
    %5664 = vmatpush.bf16.msra.mxu0 %v4795
    %5665 = vmatpush.bf16.msra.mxu0 %v4788
    %5666 = vmatpush.bf16.msra.mxu0 %v4781
    %5667 = vmatmul.bf16.gmra.mxu0 %v2966
    %v5668 = vpop.f32.mrf.mxu0
    %v5669 = vadd.f32 %v5656, %v5668
    %v5670 = vpop.f32.mrf.mxu0
    %5671 = vdwg.mxu0
    %5672 = vmatpush.bf16.msra.mxu0 %v4886
    %5673 = vmatpush.bf16.msra.mxu0 %v4879
    %5674 = vmatpush.bf16.msra.mxu0 %v4872
    %5675 = vmatpush.bf16.msra.mxu0 %v4865
    %5676 = vmatpush.bf16.msra.mxu0 %v4858
    %5677 = vmatpush.bf16.msra.mxu0 %v4851
    %5678 = vmatpush.bf16.msra.mxu0 %v4844
    %5679 = vmatpush.bf16.msra.mxu0 %v4837
    %5680 = vmatmul.bf16.gmra.mxu0 %v2967
    %v5681 = vpop.f32.mrf.mxu0
    %v5682 = vadd.f32 %v5669, %v5681
    %v5683 = vpop.f32.mrf.mxu0
    %5684 = vdwg.mxu0
    %5685 = vmatpush.bf16.msra.mxu0 %v4942
    %5686 = vmatpush.bf16.msra.mxu0 %v4935
    %5687 = vmatpush.bf16.msra.mxu0 %v4928
    %5688 = vmatpush.bf16.msra.mxu0 %v4921
    %5689 = vmatpush.bf16.msra.mxu0 %v4914
    %5690 = vmatpush.bf16.msra.mxu0 %v4907
    %5691 = vmatpush.bf16.msra.mxu0 %v4900
    %5692 = vmatpush.bf16.msra.mxu0 %v4893
    %5693 = vmatmul.bf16.gmra.mxu0 %v2968
    %v5694 = vpop.f32.mrf.mxu0
    %v5695 = vadd.f32 %v5682, %v5694
    %v5696 = vpop.f32.mrf.mxu0
    %5697 = vdwg.mxu0
    %5698 = vmatpush.bf16.msra.mxu0 %v4998
    %5699 = vmatpush.bf16.msra.mxu0 %v4991
    %5700 = vmatpush.bf16.msra.mxu0 %v4984
    %5701 = vmatpush.bf16.msra.mxu0 %v4977
    %5702 = vmatpush.bf16.msra.mxu0 %v4970
    %5703 = vmatpush.bf16.msra.mxu0 %v4963
    %5704 = vmatpush.bf16.msra.mxu0 %v4956
    %5705 = vmatpush.bf16.msra.mxu0 %v4949
    %5706 = vmatmul.bf16.gmra.mxu0 %v2969
    %v5707 = vpop.f32.mrf.mxu0
    %v5708 = vadd.f32 %v5695, %v5707
    %v5709 = vpop.f32.mrf.mxu0
    %5710 = vdwg.mxu0
    %5711 = vmatpush.bf16.msra.mxu0 %v5054
    %5712 = vmatpush.bf16.msra.mxu0 %v5047
    %5713 = vmatpush.bf16.msra.mxu0 %v5040
    %5714 = vmatpush.bf16.msra.mxu0 %v5033
    %5715 = vmatpush.bf16.msra.mxu0 %v5026
    %5716 = vmatpush.bf16.msra.mxu0 %v5019
    %5717 = vmatpush.bf16.msra.mxu0 %v5012
    %5718 = vmatpush.bf16.msra.mxu0 %v5005
    %5719 = vmatmul.bf16.gmra.mxu0 %v2970
    %v5720 = vpop.f32.mrf.mxu0
    %v5721 = vadd.f32 %v5708, %v5720
    %v5722 = vpop.f32.mrf.mxu0
    %5723 = vdwg.mxu0
    %5724 = vmatpush.bf16.msra.mxu0 %v4719
    %5725 = vmatpush.bf16.msra.mxu0 %v4712
    %5726 = vmatpush.bf16.msra.mxu0 %v4705
    %5727 = vmatpush.bf16.msra.mxu0 %v4698
    %5728 = vmatpush.bf16.msra.mxu0 %v4691
    %5729 = vmatpush.bf16.msra.mxu0 %v4684
    %5730 = vmatpush.bf16.msra.mxu0 %v4677
    %5731 = vmatpush.bf16.msra.mxu0 %v4670
    %5732 = vmatmul.bf16.gmra.mxu0 %v2964
    %v5733 = vpop.f32.mrf.mxu0
    %v5734 = vadd.f32 %v3424, %v5733
    %v5735 = vpop.f32.mrf.mxu0
    %5736 = vdwg.mxu0
    %5737 = vmatpush.bf16.msra.mxu0 %v4775
    %5738 = vmatpush.bf16.msra.mxu0 %v4768
    %5739 = vmatpush.bf16.msra.mxu0 %v4761
    %5740 = vmatpush.bf16.msra.mxu0 %v4754
    %5741 = vmatpush.bf16.msra.mxu0 %v4747
    %5742 = vmatpush.bf16.msra.mxu0 %v4740
    %5743 = vmatpush.bf16.msra.mxu0 %v4733
    %5744 = vmatpush.bf16.msra.mxu0 %v4726
    %5745 = vmatmul.bf16.gmra.mxu0 %v2965
    %v5746 = vpop.f32.mrf.mxu0
    %v5747 = vadd.f32 %v5734, %v5746
    %v5748 = vpop.f32.mrf.mxu0
    %5749 = vdwg.mxu0
    %5750 = vmatpush.bf16.msra.mxu0 %v4831
    %5751 = vmatpush.bf16.msra.mxu0 %v4824
    %5752 = vmatpush.bf16.msra.mxu0 %v4817
    %5753 = vmatpush.bf16.msra.mxu0 %v4810
    %5754 = vmatpush.bf16.msra.mxu0 %v4803
    %5755 = vmatpush.bf16.msra.mxu0 %v4796
    %5756 = vmatpush.bf16.msra.mxu0 %v4789
    %5757 = vmatpush.bf16.msra.mxu0 %v4782
    %5758 = vmatmul.bf16.gmra.mxu0 %v2966
    %v5759 = vpop.f32.mrf.mxu0
    %v5760 = vadd.f32 %v5747, %v5759
    %v5761 = vpop.f32.mrf.mxu0
    %5762 = vdwg.mxu0
    %5763 = vmatpush.bf16.msra.mxu0 %v4887
    %5764 = vmatpush.bf16.msra.mxu0 %v4880
    %5765 = vmatpush.bf16.msra.mxu0 %v4873
    %5766 = vmatpush.bf16.msra.mxu0 %v4866
    %5767 = vmatpush.bf16.msra.mxu0 %v4859
    %5768 = vmatpush.bf16.msra.mxu0 %v4852
    %5769 = vmatpush.bf16.msra.mxu0 %v4845
    %5770 = vmatpush.bf16.msra.mxu0 %v4838
    %5771 = vmatmul.bf16.gmra.mxu0 %v2967
    %v5772 = vpop.f32.mrf.mxu0
    %v5773 = vadd.f32 %v5760, %v5772
    %v5774 = vpop.f32.mrf.mxu0
    %5775 = vdwg.mxu0
    %5776 = vmatpush.bf16.msra.mxu0 %v4943
    %5777 = vmatpush.bf16.msra.mxu0 %v4936
    %5778 = vmatpush.bf16.msra.mxu0 %v4929
    %5779 = vmatpush.bf16.msra.mxu0 %v4922
    %5780 = vmatpush.bf16.msra.mxu0 %v4915
    %5781 = vmatpush.bf16.msra.mxu0 %v4908
    %5782 = vmatpush.bf16.msra.mxu0 %v4901
    %5783 = vmatpush.bf16.msra.mxu0 %v4894
    %5784 = vmatmul.bf16.gmra.mxu0 %v2968
    %v5785 = vpop.f32.mrf.mxu0
    %v5786 = vadd.f32 %v5773, %v5785
    %v5787 = vpop.f32.mrf.mxu0
    %5788 = vdwg.mxu0
    %5789 = vmatpush.bf16.msra.mxu0 %v4999
    %5790 = vmatpush.bf16.msra.mxu0 %v4992
    %5791 = vmatpush.bf16.msra.mxu0 %v4985
    %5792 = vmatpush.bf16.msra.mxu0 %v4978
    %5793 = vmatpush.bf16.msra.mxu0 %v4971
    %5794 = vmatpush.bf16.msra.mxu0 %v4964
    %5795 = vmatpush.bf16.msra.mxu0 %v4957
    %5796 = vmatpush.bf16.msra.mxu0 %v4950
    %5797 = vmatmul.bf16.gmra.mxu0 %v2969
    %v5798 = vpop.f32.mrf.mxu0
    %v5799 = vadd.f32 %v5786, %v5798
    %v5800 = vpop.f32.mrf.mxu0
    %5801 = vdwg.mxu0
    %5802 = vmatpush.bf16.msra.mxu0 %v5055
    %5803 = vmatpush.bf16.msra.mxu0 %v5048
    %5804 = vmatpush.bf16.msra.mxu0 %v5041
    %5805 = vmatpush.bf16.msra.mxu0 %v5034
    %5806 = vmatpush.bf16.msra.mxu0 %v5027
    %5807 = vmatpush.bf16.msra.mxu0 %v5020
    %5808 = vmatpush.bf16.msra.mxu0 %v5013
    %5809 = vmatpush.bf16.msra.mxu0 %v5006
    %5810 = vmatmul.bf16.gmra.mxu0 %v2970
    %v5811 = vpop.f32.mrf.mxu0
    %v5812 = vadd.f32 %v5799, %v5811
    %v5813 = vpop.f32.mrf.mxu0
    %5814 = vdwg.mxu0
    %5815 = vmatpush.bf16.msra.mxu0 %v4720
    %5816 = vmatpush.bf16.msra.mxu0 %v4713
    %5817 = vmatpush.bf16.msra.mxu0 %v4706
    %5818 = vmatpush.bf16.msra.mxu0 %v4699
    %5819 = vmatpush.bf16.msra.mxu0 %v4692
    %5820 = vmatpush.bf16.msra.mxu0 %v4685
    %5821 = vmatpush.bf16.msra.mxu0 %v4678
    %5822 = vmatpush.bf16.msra.mxu0 %v4671
    %5823 = vmatmul.bf16.gmra.mxu0 %v2964
    %v5824 = vpop.f32.mrf.mxu0
    %v5825 = vadd.f32 %v3425, %v5824
    %v5826 = vpop.f32.mrf.mxu0
    %5827 = vdwg.mxu0
    %5828 = vmatpush.bf16.msra.mxu0 %v4776
    %5829 = vmatpush.bf16.msra.mxu0 %v4769
    %5830 = vmatpush.bf16.msra.mxu0 %v4762
    %5831 = vmatpush.bf16.msra.mxu0 %v4755
    %5832 = vmatpush.bf16.msra.mxu0 %v4748
    %5833 = vmatpush.bf16.msra.mxu0 %v4741
    %5834 = vmatpush.bf16.msra.mxu0 %v4734
    %5835 = vmatpush.bf16.msra.mxu0 %v4727
    %5836 = vmatmul.bf16.gmra.mxu0 %v2965
    %v5837 = vpop.f32.mrf.mxu0
    %v5838 = vadd.f32 %v5825, %v5837
    %v5839 = vpop.f32.mrf.mxu0
    %5840 = vdwg.mxu0
    %5841 = vmatpush.bf16.msra.mxu0 %v4832
    %5842 = vmatpush.bf16.msra.mxu0 %v4825
    %5843 = vmatpush.bf16.msra.mxu0 %v4818
    %5844 = vmatpush.bf16.msra.mxu0 %v4811
    %5845 = vmatpush.bf16.msra.mxu0 %v4804
    %5846 = vmatpush.bf16.msra.mxu0 %v4797
    %5847 = vmatpush.bf16.msra.mxu0 %v4790
    %5848 = vmatpush.bf16.msra.mxu0 %v4783
    %5849 = vmatmul.bf16.gmra.mxu0 %v2966
    %v5850 = vpop.f32.mrf.mxu0
    %v5851 = vadd.f32 %v5838, %v5850
    %v5852 = vpop.f32.mrf.mxu0
    %5853 = vdwg.mxu0
    %5854 = vmatpush.bf16.msra.mxu0 %v4888
    %5855 = vmatpush.bf16.msra.mxu0 %v4881
    %5856 = vmatpush.bf16.msra.mxu0 %v4874
    %5857 = vmatpush.bf16.msra.mxu0 %v4867
    %5858 = vmatpush.bf16.msra.mxu0 %v4860
    %5859 = vmatpush.bf16.msra.mxu0 %v4853
    %5860 = vmatpush.bf16.msra.mxu0 %v4846
    %5861 = vmatpush.bf16.msra.mxu0 %v4839
    %5862 = vmatmul.bf16.gmra.mxu0 %v2967
    %v5863 = vpop.f32.mrf.mxu0
    %v5864 = vadd.f32 %v5851, %v5863
    %v5865 = vpop.f32.mrf.mxu0
    %5866 = vdwg.mxu0
    %5867 = vmatpush.bf16.msra.mxu0 %v4944
    %5868 = vmatpush.bf16.msra.mxu0 %v4937
    %5869 = vmatpush.bf16.msra.mxu0 %v4930
    %5870 = vmatpush.bf16.msra.mxu0 %v4923
    %5871 = vmatpush.bf16.msra.mxu0 %v4916
    %5872 = vmatpush.bf16.msra.mxu0 %v4909
    %5873 = vmatpush.bf16.msra.mxu0 %v4902
    %5874 = vmatpush.bf16.msra.mxu0 %v4895
    %5875 = vmatmul.bf16.gmra.mxu0 %v2968
    %v5876 = vpop.f32.mrf.mxu0
    %v5877 = vadd.f32 %v5864, %v5876
    %v5878 = vpop.f32.mrf.mxu0
    %5879 = vdwg.mxu0
    %5880 = vmatpush.bf16.msra.mxu0 %v5000
    %5881 = vmatpush.bf16.msra.mxu0 %v4993
    %5882 = vmatpush.bf16.msra.mxu0 %v4986
    %5883 = vmatpush.bf16.msra.mxu0 %v4979
    %5884 = vmatpush.bf16.msra.mxu0 %v4972
    %5885 = vmatpush.bf16.msra.mxu0 %v4965
    %5886 = vmatpush.bf16.msra.mxu0 %v4958
    %5887 = vmatpush.bf16.msra.mxu0 %v4951
    %5888 = vmatmul.bf16.gmra.mxu0 %v2969
    %v5889 = vpop.f32.mrf.mxu0
    %v5890 = vadd.f32 %v5877, %v5889
    %v5891 = vpop.f32.mrf.mxu0
    %5892 = vdwg.mxu0
    %5893 = vmatpush.bf16.msra.mxu0 %v5056
    %5894 = vmatpush.bf16.msra.mxu0 %v5049
    %5895 = vmatpush.bf16.msra.mxu0 %v5042
    %5896 = vmatpush.bf16.msra.mxu0 %v5035
    %5897 = vmatpush.bf16.msra.mxu0 %v5028
    %5898 = vmatpush.bf16.msra.mxu0 %v5021
    %5899 = vmatpush.bf16.msra.mxu0 %v5014
    %5900 = vmatpush.bf16.msra.mxu0 %v5007
    %5901 = vmatmul.bf16.gmra.mxu0 %v2970
    %v5902 = vpop.f32.mrf.mxu0
    %v5903 = vadd.f32 %v5890, %v5902
    %v5904 = vpop.f32.mrf.mxu0
    %5905 = vdwg.mxu0
    %5906 = vmatpush.bf16.msra.mxu0 %v4721
    %5907 = vmatpush.bf16.msra.mxu0 %v4714
    %5908 = vmatpush.bf16.msra.mxu0 %v4707
    %5909 = vmatpush.bf16.msra.mxu0 %v4700
    %5910 = vmatpush.bf16.msra.mxu0 %v4693
    %5911 = vmatpush.bf16.msra.mxu0 %v4686
    %5912 = vmatpush.bf16.msra.mxu0 %v4679
    %5913 = vmatpush.bf16.msra.mxu0 %v4672
    %5914 = vmatmul.bf16.gmra.mxu0 %v2964
    %v5915 = vpop.f32.mrf.mxu0
    %v5916 = vadd.f32 %v3426, %v5915
    %v5917 = vpop.f32.mrf.mxu0
    %5918 = vdwg.mxu0
    %5919 = vmatpush.bf16.msra.mxu0 %v4777
    %5920 = vmatpush.bf16.msra.mxu0 %v4770
    %5921 = vmatpush.bf16.msra.mxu0 %v4763
    %5922 = vmatpush.bf16.msra.mxu0 %v4756
    %5923 = vmatpush.bf16.msra.mxu0 %v4749
    %5924 = vmatpush.bf16.msra.mxu0 %v4742
    %5925 = vmatpush.bf16.msra.mxu0 %v4735
    %5926 = vmatpush.bf16.msra.mxu0 %v4728
    %5927 = vmatmul.bf16.gmra.mxu0 %v2965
    %v5928 = vpop.f32.mrf.mxu0
    %v5929 = vadd.f32 %v5916, %v5928
    %v5930 = vpop.f32.mrf.mxu0
    %5931 = vdwg.mxu0
    %5932 = vmatpush.bf16.msra.mxu0 %v4833
    %5933 = vmatpush.bf16.msra.mxu0 %v4826
    %5934 = vmatpush.bf16.msra.mxu0 %v4819
    %5935 = vmatpush.bf16.msra.mxu0 %v4812
    %5936 = vmatpush.bf16.msra.mxu0 %v4805
    %5937 = vmatpush.bf16.msra.mxu0 %v4798
    %5938 = vmatpush.bf16.msra.mxu0 %v4791
    %5939 = vmatpush.bf16.msra.mxu0 %v4784
    %5940 = vmatmul.bf16.gmra.mxu0 %v2966
    %v5941 = vpop.f32.mrf.mxu0
    %v5942 = vadd.f32 %v5929, %v5941
    %v5943 = vpop.f32.mrf.mxu0
    %5944 = vdwg.mxu0
    %5945 = vmatpush.bf16.msra.mxu0 %v4889
    %5946 = vmatpush.bf16.msra.mxu0 %v4882
    %5947 = vmatpush.bf16.msra.mxu0 %v4875
    %5948 = vmatpush.bf16.msra.mxu0 %v4868
    %5949 = vmatpush.bf16.msra.mxu0 %v4861
    %5950 = vmatpush.bf16.msra.mxu0 %v4854
    %5951 = vmatpush.bf16.msra.mxu0 %v4847
    %5952 = vmatpush.bf16.msra.mxu0 %v4840
    %5953 = vmatmul.bf16.gmra.mxu0 %v2967
    %v5954 = vpop.f32.mrf.mxu0
    %v5955 = vadd.f32 %v5942, %v5954
    %v5956 = vpop.f32.mrf.mxu0
    %5957 = vdwg.mxu0
    %5958 = vmatpush.bf16.msra.mxu0 %v4945
    %5959 = vmatpush.bf16.msra.mxu0 %v4938
    %5960 = vmatpush.bf16.msra.mxu0 %v4931
    %5961 = vmatpush.bf16.msra.mxu0 %v4924
    %5962 = vmatpush.bf16.msra.mxu0 %v4917
    %5963 = vmatpush.bf16.msra.mxu0 %v4910
    %5964 = vmatpush.bf16.msra.mxu0 %v4903
    %5965 = vmatpush.bf16.msra.mxu0 %v4896
    %5966 = vmatmul.bf16.gmra.mxu0 %v2968
    %v5967 = vpop.f32.mrf.mxu0
    %v5968 = vadd.f32 %v5955, %v5967
    %v5969 = vpop.f32.mrf.mxu0
    %5970 = vdwg.mxu0
    %5971 = vmatpush.bf16.msra.mxu0 %v5001
    %5972 = vmatpush.bf16.msra.mxu0 %v4994
    %5973 = vmatpush.bf16.msra.mxu0 %v4987
    %5974 = vmatpush.bf16.msra.mxu0 %v4980
    %5975 = vmatpush.bf16.msra.mxu0 %v4973
    %5976 = vmatpush.bf16.msra.mxu0 %v4966
    %5977 = vmatpush.bf16.msra.mxu0 %v4959
    %5978 = vmatpush.bf16.msra.mxu0 %v4952
    %5979 = vmatmul.bf16.gmra.mxu0 %v2969
    %v5980 = vpop.f32.mrf.mxu0
    %v5981 = vadd.f32 %v5968, %v5980
    %v5982 = vpop.f32.mrf.mxu0
    %5983 = vdwg.mxu0
    %5984 = vmatpush.bf16.msra.mxu0 %v5057
    %5985 = vmatpush.bf16.msra.mxu0 %v5050
    %5986 = vmatpush.bf16.msra.mxu0 %v5043
    %5987 = vmatpush.bf16.msra.mxu0 %v5036
    %5988 = vmatpush.bf16.msra.mxu0 %v5029
    %5989 = vmatpush.bf16.msra.mxu0 %v5022
    %5990 = vmatpush.bf16.msra.mxu0 %v5015
    %5991 = vmatpush.bf16.msra.mxu0 %v5008
    %5992 = vmatmul.bf16.gmra.mxu0 %v2970
    %v5993 = vpop.f32.mrf.mxu0
    %v5994 = vadd.f32 %v5981, %v5993
    %v5995 = vpop.f32.mrf.mxu0
    %5996 = vdwg.mxu0
    %5997 = vmatpush.bf16.msra.mxu0 %v4722
    %5998 = vmatpush.bf16.msra.mxu0 %v4715
    %5999 = vmatpush.bf16.msra.mxu0 %v4708
    %6000 = vmatpush.bf16.msra.mxu0 %v4701
    %6001 = vmatpush.bf16.msra.mxu0 %v4694
    %6002 = vmatpush.bf16.msra.mxu0 %v4687
    %6003 = vmatpush.bf16.msra.mxu0 %v4680
    %6004 = vmatpush.bf16.msra.mxu0 %v4673
    %6005 = vmatmul.bf16.gmra.mxu0 %v2964
    %v6006 = vpop.f32.mrf.mxu0
    %v6007 = vadd.f32 %v3427, %v6006
    %v6008 = vpop.f32.mrf.mxu0
    %6009 = vdwg.mxu0
    %6010 = vmatpush.bf16.msra.mxu0 %v4778
    %6011 = vmatpush.bf16.msra.mxu0 %v4771
    %6012 = vmatpush.bf16.msra.mxu0 %v4764
    %6013 = vmatpush.bf16.msra.mxu0 %v4757
    %6014 = vmatpush.bf16.msra.mxu0 %v4750
    %6015 = vmatpush.bf16.msra.mxu0 %v4743
    %6016 = vmatpush.bf16.msra.mxu0 %v4736
    %6017 = vmatpush.bf16.msra.mxu0 %v4729
    %6018 = vmatmul.bf16.gmra.mxu0 %v2965
    %v6019 = vpop.f32.mrf.mxu0
    %v6020 = vadd.f32 %v6007, %v6019
    %v6021 = vpop.f32.mrf.mxu0
    %6022 = vdwg.mxu0
    %6023 = vmatpush.bf16.msra.mxu0 %v4834
    %6024 = vmatpush.bf16.msra.mxu0 %v4827
    %6025 = vmatpush.bf16.msra.mxu0 %v4820
    %6026 = vmatpush.bf16.msra.mxu0 %v4813
    %6027 = vmatpush.bf16.msra.mxu0 %v4806
    %6028 = vmatpush.bf16.msra.mxu0 %v4799
    %6029 = vmatpush.bf16.msra.mxu0 %v4792
    %6030 = vmatpush.bf16.msra.mxu0 %v4785
    %6031 = vmatmul.bf16.gmra.mxu0 %v2966
    %v6032 = vpop.f32.mrf.mxu0
    %v6033 = vadd.f32 %v6020, %v6032
    %v6034 = vpop.f32.mrf.mxu0
    %6035 = vdwg.mxu0
    %6036 = vmatpush.bf16.msra.mxu0 %v4890
    %6037 = vmatpush.bf16.msra.mxu0 %v4883
    %6038 = vmatpush.bf16.msra.mxu0 %v4876
    %6039 = vmatpush.bf16.msra.mxu0 %v4869
    %6040 = vmatpush.bf16.msra.mxu0 %v4862
    %6041 = vmatpush.bf16.msra.mxu0 %v4855
    %6042 = vmatpush.bf16.msra.mxu0 %v4848
    %6043 = vmatpush.bf16.msra.mxu0 %v4841
    %6044 = vmatmul.bf16.gmra.mxu0 %v2967
    %v6045 = vpop.f32.mrf.mxu0
    %v6046 = vadd.f32 %v6033, %v6045
    %v6047 = vpop.f32.mrf.mxu0
    %6048 = vdwg.mxu0
    %6049 = vmatpush.bf16.msra.mxu0 %v4946
    %6050 = vmatpush.bf16.msra.mxu0 %v4939
    %6051 = vmatpush.bf16.msra.mxu0 %v4932
    %6052 = vmatpush.bf16.msra.mxu0 %v4925
    %6053 = vmatpush.bf16.msra.mxu0 %v4918
    %6054 = vmatpush.bf16.msra.mxu0 %v4911
    %6055 = vmatpush.bf16.msra.mxu0 %v4904
    %6056 = vmatpush.bf16.msra.mxu0 %v4897
    %6057 = vmatmul.bf16.gmra.mxu0 %v2968
    %v6058 = vpop.f32.mrf.mxu0
    %v6059 = vadd.f32 %v6046, %v6058
    %v6060 = vpop.f32.mrf.mxu0
    %6061 = vdwg.mxu0
    %6062 = vmatpush.bf16.msra.mxu0 %v5002
    %6063 = vmatpush.bf16.msra.mxu0 %v4995
    %6064 = vmatpush.bf16.msra.mxu0 %v4988
    %6065 = vmatpush.bf16.msra.mxu0 %v4981
    %6066 = vmatpush.bf16.msra.mxu0 %v4974
    %6067 = vmatpush.bf16.msra.mxu0 %v4967
    %6068 = vmatpush.bf16.msra.mxu0 %v4960
    %6069 = vmatpush.bf16.msra.mxu0 %v4953
    %6070 = vmatmul.bf16.gmra.mxu0 %v2969
    %v6071 = vpop.f32.mrf.mxu0
    %v6072 = vadd.f32 %v6059, %v6071
    %v6073 = vpop.f32.mrf.mxu0
    %6074 = vdwg.mxu0
    %6075 = vmatpush.bf16.msra.mxu0 %v5058
    %6076 = vmatpush.bf16.msra.mxu0 %v5051
    %6077 = vmatpush.bf16.msra.mxu0 %v5044
    %6078 = vmatpush.bf16.msra.mxu0 %v5037
    %6079 = vmatpush.bf16.msra.mxu0 %v5030
    %6080 = vmatpush.bf16.msra.mxu0 %v5023
    %6081 = vmatpush.bf16.msra.mxu0 %v5016
    %6082 = vmatpush.bf16.msra.mxu0 %v5009
    %6083 = vmatmul.bf16.gmra.mxu0 %v2970
    %v6084 = vpop.f32.mrf.mxu0
    %v6085 = vadd.f32 %v6072, %v6084
    %v6086 = vpop.f32.mrf.mxu0
    %6087 = vdwg.mxu0
    %v6088 = vmax.f32 %v5539, 0.0
    %v6089 = vmax.f32 %v5630, 0.0
    %v6090 = vmax.f32 %v5721, 0.0
    %v6091 = vmax.f32 %v5812, 0.0
    %v6092 = vmax.f32 %v5903, 0.0
    %v6093 = vmax.f32 %v5994, 0.0
    %v6094 = vmax.f32 %v6085, 0.0
    %v6095 = vpack.c.bf16 %v6088, %v6088
    %v6096 = vpack.c.bf16 %v6089, %v6089
    %v6097 = vpack.c.bf16 %v6090, %v6090
    %v6098 = vpack.c.bf16 %v6091, %v6091
    %v6099 = vpack.c.bf16 %v6092, %v6092
    %v6100 = vpack.c.bf16 %v6093, %v6093
    %v6101 = vpack.c.bf16 %v6094, %v6094
    %v6102 = vld [vmem:[#allocation10] sm:$0xf]
    %v6103 = vld [vmem:[#allocation10 + $0x4] sm:$0xf]
    %v6104 = vld [vmem:[#allocation10 + $0x8] sm:$0xf]
    %v6105 = vld [vmem:[#allocation10 + $0xc] sm:$0xf]
    %v6106 = vld [vmem:[#allocation10 + $0x10] sm:$0xf]
    %v6107 = vld [vmem:[#allocation10 + $0x14] sm:$0xf]
    %v6108 = vld [vmem:[#allocation10 + $0x18] sm:$0xf]
    %v6109 = vld [vmem:[#allocation10 + $0x1c] sm:$0xf]
    %v6110 = vld [vmem:[#allocation10 + $0x20] sm:$0xf]
    %v6111 = vld [vmem:[#allocation10 + $0x24] sm:$0xf]
    %v6112 = vld [vmem:[#allocation10 + $0x28] sm:$0xf]
    %v6113 = vld [vmem:[#allocation10 + $0x2c] sm:$0xf]
    %v6114 = vld [vmem:[#allocation10 + $0x30] sm:$0xf]
    %v6115 = vld [vmem:[#allocation10 + $0x34] sm:$0xf]
    %v6116 = vld [vmem:[#allocation10 + $0x38] sm:$0xf]
    %v6117 = vld [vmem:[#allocation10 + $0x3c] sm:$0xf]
    %v6118 = vld [vmem:[#allocation10 + $0x40] sm:$0xf]
    %v6119 = vld [vmem:[#allocation10 + $0x44] sm:$0xf]
    %v6120 = vld [vmem:[#allocation10 + $0x48] sm:$0xf]
    %v6121 = vld [vmem:[#allocation10 + $0x4c] sm:$0xf]
    %v6122 = vld [vmem:[#allocation10 + $0x50] sm:$0xf]
    %v6123 = vld [vmem:[#allocation10 + $0x54] sm:$0xf]
    %v6124 = vld [vmem:[#allocation10 + $0x58] sm:$0xf]
    %v6125 = vld [vmem:[#allocation10 + $0x5c] sm:$0xf]
    %v6126 = vld [vmem:[#allocation10 + $0x60] sm:$0xf]
    %v6127 = vld [vmem:[#allocation10 + $0x64] sm:$0xf]
    %v6128 = vld [vmem:[#allocation10 + $0x68] sm:$0xf]
    %v6129 = vld [vmem:[#allocation10 + $0x6c] sm:$0xf]
    %v6130 = vld [vmem:[#allocation10 + $0x70] sm:$0xf]
    %v6131 = vld [vmem:[#allocation10 + $0x74] sm:$0xf]
    %v6132 = vld [vmem:[#allocation10 + $0x78] sm:$0xf]
    %v6133 = vld [vmem:[#allocation10 + $0x7c] sm:$0xf]
    %v6134 = vld [vmem:[#allocation10 + $0x80] sm:$0xf]
    %v6135 = vld [vmem:[#allocation10 + $0x84] sm:$0xf]
    %v6136 = vld [vmem:[#allocation10 + $0x88] sm:$0xf]
    %v6137 = vld [vmem:[#allocation10 + $0x8c] sm:$0xf]
    %v6138 = vld [vmem:[#allocation10 + $0x90] sm:$0xf]
    %v6139 = vld [vmem:[#allocation10 + $0x94] sm:$0xf]
    %v6140 = vld [vmem:[#allocation10 + $0x98] sm:$0xf]
    %v6141 = vld [vmem:[#allocation10 + $0x9c] sm:$0xf]
    %v6142 = vld [vmem:[#allocation10 + $0xa0] sm:$0xf]
    %v6143 = vld [vmem:[#allocation10 + $0xa4] sm:$0xf]
    %v6144 = vld [vmem:[#allocation10 + $0xa8] sm:$0xf]
    %v6145 = vld [vmem:[#allocation10 + $0xac] sm:$0xf]
    %v6146 = vld [vmem:[#allocation10 + $0xb0] sm:$0xf]
    %v6147 = vld [vmem:[#allocation10 + $0xb4] sm:$0xf]
    %v6148 = vld [vmem:[#allocation10 + $0xb8] sm:$0xf]
    %v6149 = vld [vmem:[#allocation10 + $0xbc] sm:$0xf]
    %v6150 = vld [vmem:[#allocation10 + $0xc0] sm:$0xf]
    %v6151 = vld [vmem:[#allocation10 + $0xc4] sm:$0xf]
    %v6152 = vld [vmem:[#allocation10 + $0xc8] sm:$0xf]
    %v6153 = vld [vmem:[#allocation10 + $0xcc] sm:$0xf]
    %v6154 = vld [vmem:[#allocation10 + $0xd0] sm:$0xf]
    %v6155 = vld [vmem:[#allocation10 + $0xd4] sm:$0xf]
    %v6156 = vld [vmem:[#allocation10 + $0xd8] sm:$0xf]
    %v6157 = vld [vmem:[#allocation10 + $0xdc] sm:$0xf]
    %v6158 = vld [vmem:[#allocation10 + $0xe0] sm:$0xf]
    %v6159 = vld [vmem:[#allocation10 + $0xe4] sm:$0xf]
    %v6160 = vld [vmem:[#allocation10 + $0xe8] sm:$0xf]
    %v6161 = vld [vmem:[#allocation10 + $0xec] sm:$0xf]
    %v6162 = vld [vmem:[#allocation10 + $0xf0] sm:$0xf]
    %v6163 = vld [vmem:[#allocation10 + $0xf4] sm:$0xf]
    %v6164 = vld [vmem:[#allocation10 + $0xf8] sm:$0xf]
    %v6165 = vld [vmem:[#allocation10 + $0xfc] sm:$0xf]
    %v6166 = vld [vmem:[#allocation10 + $0x100] sm:$0xf]
    %v6167 = vld [vmem:[#allocation10 + $0x104] sm:$0xf]
    %v6168 = vld [vmem:[#allocation10 + $0x108] sm:$0xf]
    %v6169 = vld [vmem:[#allocation10 + $0x10c] sm:$0xf]
    %v6170 = vld [vmem:[#allocation10 + $0x110] sm:$0xf]
    %v6171 = vld [vmem:[#allocation10 + $0x114] sm:$0xf]
    %v6172 = vld [vmem:[#allocation10 + $0x118] sm:$0xf]
    %v6173 = vld [vmem:[#allocation10 + $0x11c] sm:$0xf]
    %v6174 = vld [vmem:[#allocation10 + $0x120] sm:$0xf]
    %v6175 = vld [vmem:[#allocation10 + $0x124] sm:$0xf]
    %v6176 = vld [vmem:[#allocation10 + $0x128] sm:$0xf]
    %v6177 = vld [vmem:[#allocation10 + $0x12c] sm:$0xf]
    %v6178 = vld [vmem:[#allocation10 + $0x130] sm:$0xf]
    %v6179 = vld [vmem:[#allocation10 + $0x134] sm:$0xf]
    %v6180 = vld [vmem:[#allocation10 + $0x138] sm:$0xf]
    %v6181 = vld [vmem:[#allocation10 + $0x13c] sm:$0xf]
    %v6182 = vld [vmem:[#allocation10 + $0x140] sm:$0xf]
    %v6183 = vld [vmem:[#allocation10 + $0x144] sm:$0xf]
    %v6184 = vld [vmem:[#allocation10 + $0x148] sm:$0xf]
    %v6185 = vld [vmem:[#allocation10 + $0x14c] sm:$0xf]
    %v6186 = vld [vmem:[#allocation10 + $0x150] sm:$0xf]
    %v6187 = vld [vmem:[#allocation10 + $0x154] sm:$0xf]
    %v6188 = vld [vmem:[#allocation10 + $0x158] sm:$0xf]
    %v6189 = vld [vmem:[#allocation10 + $0x15c] sm:$0xf]
    %v6190 = vld [vmem:[#allocation10 + $0x160] sm:$0xf]
    %v6191 = vld [vmem:[#allocation10 + $0x164] sm:$0xf]
    %v6192 = vld [vmem:[#allocation10 + $0x168] sm:$0xf]
    %v6193 = vld [vmem:[#allocation10 + $0x16c] sm:$0xf]
    %v6194 = vld [vmem:[#allocation10 + $0x170] sm:$0xf]
    %v6195 = vld [vmem:[#allocation10 + $0x174] sm:$0xf]
    %v6196 = vld [vmem:[#allocation10 + $0x178] sm:$0xf]
    %v6197 = vld [vmem:[#allocation10 + $0x17c] sm:$0xf]
    %v6198 = vld [vmem:[#allocation10 + $0x180] sm:$0xf]
    %v6199 = vld [vmem:[#allocation10 + $0x184] sm:$0xf]
    %v6200 = vld [vmem:[#allocation10 + $0x188] sm:$0xf]
    %v6201 = vld [vmem:[#allocation10 + $0x18c] sm:$0xf]
    %v6202 = vld [vmem:[#allocation10 + $0x190] sm:$0xf]
    %v6203 = vld [vmem:[#allocation10 + $0x194] sm:$0xf]
    %v6204 = vld [vmem:[#allocation10 + $0x198] sm:$0xf]
    %v6205 = vld [vmem:[#allocation10 + $0x19c] sm:$0xf]
    %v6206 = vld [vmem:[#allocation10 + $0x1a0] sm:$0xf]
    %v6207 = vld [vmem:[#allocation10 + $0x1a4] sm:$0xf]
    %v6208 = vld [vmem:[#allocation10 + $0x1a8] sm:$0xf]
    %v6209 = vld [vmem:[#allocation10 + $0x1ac] sm:$0xf]
    %v6210 = vld [vmem:[#allocation10 + $0x1b0] sm:$0xf]
    %v6211 = vld [vmem:[#allocation10 + $0x1b4] sm:$0xf]
    %v6212 = vld [vmem:[#allocation10 + $0x1b8] sm:$0xf]
    %v6213 = vld [vmem:[#allocation10 + $0x1bc] sm:$0xf]
    %v6214 = vld [vmem:[#allocation11] sm:$0x1]
    %v6216 = vperm.slane %v6214, 0
    %v6330 = vunpack.c.l.b16 %v6102
    %v6331 = vunpack.c.l.b16 %v6103
    %v6332 = vunpack.c.l.b16 %v6104
    %v6333 = vunpack.c.l.b16 %v6105
    %v6334 = vunpack.c.l.b16 %v6106
    %v6335 = vunpack.c.l.b16 %v6107
    %v6336 = vunpack.c.l.b16 %v6108
    %v6337 = vunpack.c.l.b16 %v6109
    %v6338 = vunpack.c.l.b16 %v6110
    %v6339 = vunpack.c.l.b16 %v6111
    %v6340 = vunpack.c.l.b16 %v6112
    %v6341 = vunpack.c.l.b16 %v6113
    %v6342 = vunpack.c.l.b16 %v6114
    %v6343 = vunpack.c.l.b16 %v6115
    %v6344 = vunpack.c.l.b16 %v6116
    %v6345 = vunpack.c.l.b16 %v6117
    %v6346 = vunpack.c.l.b16 %v6118
    %v6347 = vunpack.c.l.b16 %v6119
    %v6348 = vunpack.c.l.b16 %v6120
    %v6349 = vunpack.c.l.b16 %v6121
    %v6350 = vunpack.c.l.b16 %v6122
    %v6351 = vunpack.c.l.b16 %v6123
    %v6352 = vunpack.c.l.b16 %v6124
    %v6353 = vunpack.c.l.b16 %v6125
    %v6354 = vunpack.c.l.b16 %v6126
    %v6355 = vunpack.c.l.b16 %v6127
    %v6356 = vunpack.c.l.b16 %v6128
    %v6357 = vunpack.c.l.b16 %v6129
    %v6358 = vunpack.c.l.b16 %v6130
    %v6359 = vunpack.c.l.b16 %v6131
    %v6360 = vunpack.c.l.b16 %v6132
    %v6361 = vunpack.c.l.b16 %v6133
    %v6362 = vunpack.c.l.b16 %v6134
    %v6363 = vunpack.c.l.b16 %v6135
    %v6364 = vunpack.c.l.b16 %v6136
    %v6365 = vunpack.c.l.b16 %v6137
    %v6366 = vunpack.c.l.b16 %v6138
    %v6367 = vunpack.c.l.b16 %v6139
    %v6368 = vunpack.c.l.b16 %v6140
    %v6369 = vunpack.c.l.b16 %v6141
    %v6370 = vunpack.c.l.b16 %v6142
    %v6371 = vunpack.c.l.b16 %v6143
    %v6372 = vunpack.c.l.b16 %v6144
    %v6373 = vunpack.c.l.b16 %v6145
    %v6374 = vunpack.c.l.b16 %v6146
    %v6375 = vunpack.c.l.b16 %v6147
    %v6376 = vunpack.c.l.b16 %v6148
    %v6377 = vunpack.c.l.b16 %v6149
    %v6378 = vunpack.c.l.b16 %v6150
    %v6379 = vunpack.c.l.b16 %v6151
    %v6380 = vunpack.c.l.b16 %v6152
    %v6381 = vunpack.c.l.b16 %v6153
    %v6382 = vunpack.c.l.b16 %v6154
    %v6383 = vunpack.c.l.b16 %v6155
    %v6384 = vunpack.c.l.b16 %v6156
    %v6385 = vunpack.c.l.b16 %v6157
    %v6386 = vunpack.c.l.b16 %v6158
    %v6387 = vunpack.c.l.b16 %v6159
    %v6388 = vunpack.c.l.b16 %v6160
    %v6389 = vunpack.c.l.b16 %v6161
    %v6390 = vunpack.c.l.b16 %v6162
    %v6391 = vunpack.c.l.b16 %v6163
    %v6392 = vunpack.c.l.b16 %v6164
    %v6393 = vunpack.c.l.b16 %v6165
    %v6394 = vunpack.c.l.b16 %v6166
    %v6395 = vunpack.c.l.b16 %v6167
    %v6396 = vunpack.c.l.b16 %v6168
    %v6397 = vunpack.c.l.b16 %v6169
    %v6398 = vunpack.c.l.b16 %v6170
    %v6399 = vunpack.c.l.b16 %v6171
    %v6400 = vunpack.c.l.b16 %v6172
    %v6401 = vunpack.c.l.b16 %v6173
    %v6402 = vunpack.c.l.b16 %v6174
    %v6403 = vunpack.c.l.b16 %v6175
    %v6404 = vunpack.c.l.b16 %v6176
    %v6405 = vunpack.c.l.b16 %v6177
    %v6406 = vunpack.c.l.b16 %v6178
    %v6407 = vunpack.c.l.b16 %v6179
    %v6408 = vunpack.c.l.b16 %v6180
    %v6409 = vunpack.c.l.b16 %v6181
    %v6410 = vunpack.c.l.b16 %v6182
    %v6411 = vunpack.c.l.b16 %v6183
    %v6412 = vunpack.c.l.b16 %v6184
    %v6413 = vunpack.c.l.b16 %v6185
    %v6414 = vunpack.c.l.b16 %v6186
    %v6415 = vunpack.c.l.b16 %v6187
    %v6416 = vunpack.c.l.b16 %v6188
    %v6417 = vunpack.c.l.b16 %v6189
    %v6418 = vunpack.c.l.b16 %v6190
    %v6419 = vunpack.c.l.b16 %v6191
    %v6420 = vunpack.c.l.b16 %v6192
    %v6421 = vunpack.c.l.b16 %v6193
    %v6422 = vunpack.c.l.b16 %v6194
    %v6423 = vunpack.c.l.b16 %v6195
    %v6424 = vunpack.c.l.b16 %v6196
    %v6425 = vunpack.c.l.b16 %v6197
    %v6426 = vunpack.c.l.b16 %v6198
    %v6427 = vunpack.c.l.b16 %v6199
    %v6428 = vunpack.c.l.b16 %v6200
    %v6429 = vunpack.c.l.b16 %v6201
    %v6430 = vunpack.c.l.b16 %v6202
    %v6431 = vunpack.c.l.b16 %v6203
    %v6432 = vunpack.c.l.b16 %v6204
    %v6433 = vunpack.c.l.b16 %v6205
    %v6434 = vunpack.c.l.b16 %v6206
    %v6435 = vunpack.c.l.b16 %v6207
    %v6436 = vunpack.c.l.b16 %v6208
    %v6437 = vunpack.c.l.b16 %v6209
    %v6438 = vunpack.c.l.b16 %v6210
    %v6439 = vunpack.c.l.b16 %v6211
    %v6440 = vunpack.c.l.b16 %v6212
    %v6441 = vunpack.c.l.b16 %v6213
    %v6442 = vpack.c.b16 %v6331, %v6330
    %v6443 = vpack.c.b16 %v6333, %v6332
    %v6444 = vpack.c.b16 %v6335, %v6334
    %v6445 = vpack.c.b16 %v6337, %v6336
    %v6446 = vpack.c.b16 %v6339, %v6338
    %v6447 = vpack.c.b16 %v6341, %v6340
    %v6448 = vpack.c.b16 %v6343, %v6342
    %v6449 = vpack.c.b16 %v6345, %v6344
    %v6450 = vpack.c.b16 %v6347, %v6346
    %v6451 = vpack.c.b16 %v6349, %v6348
    %v6452 = vpack.c.b16 %v6351, %v6350
    %v6453 = vpack.c.b16 %v6353, %v6352
    %v6454 = vpack.c.b16 %v6355, %v6354
    %v6455 = vpack.c.b16 %v6357, %v6356
    %v6456 = vpack.c.b16 %v6359, %v6358
    %v6457 = vpack.c.b16 %v6361, %v6360
    %v6458 = vpack.c.b16 %v6363, %v6362
    %v6459 = vpack.c.b16 %v6365, %v6364
    %v6460 = vpack.c.b16 %v6367, %v6366
    %v6461 = vpack.c.b16 %v6369, %v6368
    %v6462 = vpack.c.b16 %v6371, %v6370
    %v6463 = vpack.c.b16 %v6373, %v6372
    %v6464 = vpack.c.b16 %v6375, %v6374
    %v6465 = vpack.c.b16 %v6377, %v6376
    %v6466 = vpack.c.b16 %v6379, %v6378
    %v6467 = vpack.c.b16 %v6381, %v6380
    %v6468 = vpack.c.b16 %v6383, %v6382
    %v6469 = vpack.c.b16 %v6385, %v6384
    %v6470 = vpack.c.b16 %v6387, %v6386
    %v6471 = vpack.c.b16 %v6389, %v6388
    %v6472 = vpack.c.b16 %v6391, %v6390
    %v6473 = vpack.c.b16 %v6393, %v6392
    %v6474 = vpack.c.b16 %v6395, %v6394
    %v6475 = vpack.c.b16 %v6397, %v6396
    %v6476 = vpack.c.b16 %v6399, %v6398
    %v6477 = vpack.c.b16 %v6401, %v6400
    %v6478 = vpack.c.b16 %v6403, %v6402
    %v6479 = vpack.c.b16 %v6405, %v6404
    %v6480 = vpack.c.b16 %v6407, %v6406
    %v6481 = vpack.c.b16 %v6409, %v6408
    %v6482 = vpack.c.b16 %v6411, %v6410
    %v6483 = vpack.c.b16 %v6413, %v6412
    %v6484 = vpack.c.b16 %v6415, %v6414
    %v6485 = vpack.c.b16 %v6417, %v6416
    %v6486 = vpack.c.b16 %v6419, %v6418
    %v6487 = vpack.c.b16 %v6421, %v6420
    %v6488 = vpack.c.b16 %v6423, %v6422
    %v6489 = vpack.c.b16 %v6425, %v6424
    %v6490 = vpack.c.b16 %v6427, %v6426
    %v6491 = vpack.c.b16 %v6429, %v6428
    %v6492 = vpack.c.b16 %v6431, %v6430
    %v6493 = vpack.c.b16 %v6433, %v6432
    %v6494 = vpack.c.b16 %v6435, %v6434
    %v6495 = vpack.c.b16 %v6437, %v6436
    %v6496 = vpack.c.b16 %v6439, %v6438
    %v6497 = vpack.c.b16 %v6441, %v6440
    %6554 = vmatpush.bf16.msra.mxu0 %v6449
    %6555 = vmatpush.bf16.msra.mxu0 %v6448
    %6556 = vmatpush.bf16.msra.mxu0 %v6447
    %6557 = vmatpush.bf16.msra.mxu0 %v6446
    %6558 = vmatpush.bf16.msra.mxu0 %v6445
    %6559 = vmatpush.bf16.msra.mxu0 %v6444
    %6560 = vmatpush.bf16.msra.mxu0 %v6443
    %6561 = vmatpush.bf16.msra.mxu0 %v6442
    %6562 = vmatmul.bf16.gmra.mxu0 %v6095
    %v6563 = vpop.f32.mrf.mxu0
    %v6564 = vadd.f32 %v6216, %v6563
    %v6565 = vpop.f32.mrf.mxu0
    %6566 = vdwg.mxu0
    %6567 = vmatpush.bf16.msra.mxu0 %v6457
    %6568 = vmatpush.bf16.msra.mxu0 %v6456
    %6569 = vmatpush.bf16.msra.mxu0 %v6455
    %6570 = vmatpush.bf16.msra.mxu0 %v6454
    %6571 = vmatpush.bf16.msra.mxu0 %v6453
    %6572 = vmatpush.bf16.msra.mxu0 %v6452
    %6573 = vmatpush.bf16.msra.mxu0 %v6451
    %6574 = vmatpush.bf16.msra.mxu0 %v6450
    %6575 = vmatmul.bf16.gmra.mxu0 %v6096
    %v6576 = vpop.f32.mrf.mxu0
    %v6577 = vadd.f32 %v6564, %v6576
    %v6578 = vpop.f32.mrf.mxu0
    %6579 = vdwg.mxu0
    %6580 = vmatpush.bf16.msra.mxu0 %v6465
    %6581 = vmatpush.bf16.msra.mxu0 %v6464
    %6582 = vmatpush.bf16.msra.mxu0 %v6463
    %6583 = vmatpush.bf16.msra.mxu0 %v6462
    %6584 = vmatpush.bf16.msra.mxu0 %v6461
    %6585 = vmatpush.bf16.msra.mxu0 %v6460
    %6586 = vmatpush.bf16.msra.mxu0 %v6459
    %6587 = vmatpush.bf16.msra.mxu0 %v6458
    %6588 = vmatmul.bf16.gmra.mxu0 %v6097
    %v6589 = vpop.f32.mrf.mxu0
    %v6590 = vadd.f32 %v6577, %v6589
    %v6591 = vpop.f32.mrf.mxu0
    %6592 = vdwg.mxu0
    %6593 = vmatpush.bf16.msra.mxu0 %v6473
    %6594 = vmatpush.bf16.msra.mxu0 %v6472
    %6595 = vmatpush.bf16.msra.mxu0 %v6471
    %6596 = vmatpush.bf16.msra.mxu0 %v6470
    %6597 = vmatpush.bf16.msra.mxu0 %v6469
    %6598 = vmatpush.bf16.msra.mxu0 %v6468
    %6599 = vmatpush.bf16.msra.mxu0 %v6467
    %6600 = vmatpush.bf16.msra.mxu0 %v6466
    %6601 = vmatmul.bf16.gmra.mxu0 %v6098
    %v6602 = vpop.f32.mrf.mxu0
    %v6603 = vadd.f32 %v6590, %v6602
    %v6604 = vpop.f32.mrf.mxu0
    %6605 = vdwg.mxu0
    %6606 = vmatpush.bf16.msra.mxu0 %v6481
    %6607 = vmatpush.bf16.msra.mxu0 %v6480
    %6608 = vmatpush.bf16.msra.mxu0 %v6479
    %6609 = vmatpush.bf16.msra.mxu0 %v6478
    %6610 = vmatpush.bf16.msra.mxu0 %v6477
    %6611 = vmatpush.bf16.msra.mxu0 %v6476
    %6612 = vmatpush.bf16.msra.mxu0 %v6475
    %6613 = vmatpush.bf16.msra.mxu0 %v6474
    %6614 = vmatmul.bf16.gmra.mxu0 %v6099
    %v6615 = vpop.f32.mrf.mxu0
    %v6616 = vadd.f32 %v6603, %v6615
    %v6617 = vpop.f32.mrf.mxu0
    %6618 = vdwg.mxu0
    %6619 = vmatpush.bf16.msra.mxu0 %v6489
    %6620 = vmatpush.bf16.msra.mxu0 %v6488
    %6621 = vmatpush.bf16.msra.mxu0 %v6487
    %6622 = vmatpush.bf16.msra.mxu0 %v6486
    %6623 = vmatpush.bf16.msra.mxu0 %v6485
    %6624 = vmatpush.bf16.msra.mxu0 %v6484
    %6625 = vmatpush.bf16.msra.mxu0 %v6483
    %6626 = vmatpush.bf16.msra.mxu0 %v6482
    %6627 = vmatmul.bf16.gmra.mxu0 %v6100
    %v6628 = vpop.f32.mrf.mxu0
    %v6629 = vadd.f32 %v6616, %v6628
    %v6630 = vpop.f32.mrf.mxu0
    %6631 = vdwg.mxu0
    %6632 = vmatpush.bf16.msra.mxu0 %v6497
    %6633 = vmatpush.bf16.msra.mxu0 %v6496
    %6634 = vmatpush.bf16.msra.mxu0 %v6495
    %6635 = vmatpush.bf16.msra.mxu0 %v6494
    %6636 = vmatpush.bf16.msra.mxu0 %v6493
    %6637 = vmatpush.bf16.msra.mxu0 %v6492
    %6638 = vmatpush.bf16.msra.mxu0 %v6491
    %6639 = vmatpush.bf16.msra.mxu0 %v6490
    %6640 = vmatmul.bf16.gmra.mxu0 %v6101
    %v6641 = vpop.f32.mrf.mxu0
    %v6642 = vadd.f32 %v6629, %v6641
    %v6643 = vpop.f32.mrf.mxu0
    %6644 = vdwg.mxu0
    %6645 = vmax.xlane.f32.xlu0 %v6642
    %v6646 = vpop.xlane.xlu0 %6645
    %v6647 = vsub.f32 %v6642, %v6646
    %v6648 = vmul.f32 %v6647, 1.442695
    %v6649 = vpow.pop %v6648
    %6650 = vadd.xlane.f32.xlu0 %v6649
    %v6651 = vpop.xlane.xlu0 %6650
    %v6652 = vlog2.pop %v6651
    %v6653 = vmul.f32 %v6652, 0.6931472
    %v6654 = vsub.f32 %v6647, %v6653
    %6655 = vst [vmem:[#allocation13] sm:$0xff] %v6654
    // Predicated region
    $region54: #{mlp_forward.1} parent=1 // pred_check
      _
    $region55: #{mlp_forward.1} parent=1 // pred_check_branch
      %6657 = sbr.rel (0) target = $region57
    $region56: #{mlp_forward.1} parent=1 // pred_region
      %6659 = vsyncadd [#allocation4], 0
      %s6661 = sshll.u32 [#allocation13], 4
      %s6662 = int_to_ptr.vmem [resolvable:$true] %s6661
      %s6663 = sshll.u32 %s7, 4
      %s6664 = int_to_ptr.hbm [resolvable:$true] %s6663
      %6666 = dma.vmem_to_hbm [thread:$0]  %s6662, 128, %s6664, [#allocation4]
    $region57: #{mlp_forward.1} parent=1 // pred_fallthru
      _
    // Predicated region
    $region58: #{mlp_forward.1} parent=1 // pred_check
      _
    $region59: #{mlp_forward.1} parent=1 // pred_check_branch
      %6668 = sbr.rel (0) target = $region61
    $region60: #{mlp_forward.1} parent=1 // pred_region
      %6670 = dma.done [#allocation4], 128
    $region61: #{mlp_forward.1} parent=1 // pred_fallthru
      _
    %6671 = vsyncpa [#allocation3], 1
    %6672 = vsyncpa [#allocation6], 1
    %6673 = vsyncpa [#allocation9], 1
    %6674 = vsyncpa [#allocation12], 1
    %6675 = vsyncpa [#allocation4], 1

</llo_original>
